<compile_context>
chip_gen: v7x
topology: tpu7x:2x2x1
jax: 0.10.0
libtpu: 0.0.40
codegen_flags: <defaults>
</compile_context>

<pallas_src>
import functools
import math

import jax
import jax.numpy as jnp
from jax import lax
from jax.experimental import pallas as pl
from jax.experimental.pallas import tpu as pltpu

NEG_INF = -1000000000.0   # same constant SelfAttention.create_mask uses
MAX_LEN = 60              # hard-coded in create_mask -> L must equal 60
ADD_NORM_EPS = 1e-6       # Add_Norm default eps


# --------------------------------------------------------------------------------------
# Pallas kernel: one full EncoderLayer for a block of batch elements.
# --------------------------------------------------------------------------------------
def encoder_layer_kernel(lens_ref, x_ref, wqkv_ref, bqkv_ref, w0_ref, b0_ref,
                         w1_ref, b1_ref, w2_ref, b2_ref, alpha_ref, beta_ref,
                         out_ref, *, seq_len, pad_len, d_emb, d_k, num_heads,
                         block_b, eps):
    # lens_ref : (B_pad,) int32 in SMEM (scalar prefetch)
    # x_ref    : (block_b * pad_len, d_emb)   batch block folded into rows
    # wqkv_ref : (d_emb, 3*H*d_k)  fused, pre-transposed per-head [Wq^T|Wk^T|Wv^T]
    # w0_ref   : (H*d_k, d_emb),  w1_ref: (d_emb, d_ff),  w2_ref: (d_ff, d_emb)
    # alpha/beta : (1, d_emb)  shared Add_Norm params (one instance, used twice)
    x = x_ref[...]
    alpha = alpha_ref[...]
    beta = beta_ref[...]

    inv_nm1 = 1.0 / (d_emb - 1)          # torch.std default is unbiased (n-1)

    def add_norm(t):
        mean = jnp.mean(t, axis=-1, keepdims=True)
        centered = t - mean
        std = jnp.sqrt(jnp.sum(centered * centered, axis=-1, keepdims=True) * inv_nm1)
        return alpha * centered * pl.reciprocal(std + eps, approx=False) + beta

    # ---- Add_Norm #1 + fused QKV projection for the whole batch block (one matmul) ----
    z1n = add_norm(x)
    qkv = jnp.dot(z1n, wqkv_ref[...], preferred_element_type=jnp.float32) + bqkv_ref[...]

    inv_sqrt_dk = 1.0 / math.sqrt(d_k)

    # Masks built in-kernel (no DMA'd mask tensors, no 1-lane layouts).
    row_ids = lax.broadcasted_iota(jnp.int32, (pad_len, pad_len), 0)
    if pad_len > seq_len:
        col_ids = lax.broadcasted_iota(jnp.int32, (pad_len, pad_len), 1)
        key_pad = jnp.where(col_ids < seq_len, 0.0, NEG_INF)     # pad key columns
    else:
        key_pad = None

    w0 = w0_ref[...]
    b0 = b0_ref[...]
    w1 = w1_ref[...]
    b1 = b1_ref[...]
    w2 = w2_ref[...]
    b2 = b2_ref[...]

    base = pl.program_id(0) * block_b
    for b in range(block_b):                       # static, small, fully unrolled
        r0 = b * pad_len
        x_b = x[r0:r0 + pad_len, :]
        qkv_b = qkv[r0:r0 + pad_len, :]

        # Additive per-query-row mask, exactly `scores + mask.unsqueeze(2)` semantics.
        de_len = lens_ref[base + b]                              # SMEM scalar read
        add_mask = jnp.where(row_ids < de_len, 0.0, NEG_INF)
        if key_pad is not None:
            add_mask = add_mask + key_pad

        head_outs = []
        for h in range(num_heads):
            c0 = h * 3 * d_k
            q = qkv_b[:, c0:c0 + d_k]
            k = qkv_b[:, c0 + d_k:c0 + 2 * d_k]
            v = qkv_b[:, c0 + 2 * d_k:c0 + 3 * d_k]

            scores = lax.dot_general(
                q, k, dimension_numbers=(((1,), (1,)), ((), ())),
                preferred_element_type=jnp.float32) * inv_sqrt_dk
            scores = scores + add_mask

            m = jnp.max(scores, axis=-1, keepdims=True)
            e = jnp.exp(scores - m)
            denom = jnp.sum(e, axis=-1, keepdims=True)
            p = e * pl.reciprocal(denom, approx=False)
            head_outs.append(jnp.dot(p, v, preferred_element_type=jnp.float32))

        zcat = head_outs[0] if num_heads == 1 else jnp.concatenate(head_outs, axis=1)

        # MultiheadAttention output projection (dropout is an inference no-op).
        z1 = jnp.dot(zcat, w0, preferred_element_type=jnp.float32) + b0   # (pad_len, d_emb)

        # Add_Norm #2 + FeedForward + residuals (EncoderLayer returns z1 + z2).
        z2n = add_norm(z1 + x_b)
        hid = jnp.maximum(jnp.dot(z2n, w1, preferred_element_type=jnp.float32) + b1, 0.0)
        z2 = jnp.dot(hid, w2, preferred_element_type=jnp.float32) + b2

        out_ref[pl.ds(r0, pad_len), :] = (z1 + z2).astype(out_ref.dtype)


# --------------------------------------------------------------------------------------
# Wrapper: one pallas_call per EncoderLayer (pure layout glue + BlockSpecs).
# --------------------------------------------------------------------------------------
def encoder_layer_pallas(x, de_lens, lp, *, max_len=MAX_LEN, eps=ADD_NORM_EPS,
                         target_grid=2):
    B, L, d_emb = x.shape
    assert L == max_len, "create_mask hard-codes max_len=60, so L must equal 60"
    num_heads = len(lp["heads"])
    d_k = lp["heads"][0]["wq"].shape[0]
    d_ff = lp["w1"].shape[0]

    # Pad seq 60 -> 64 so the batch block folds cleanly into the sublane axis.
    pad_len = ((L + 7) // 8) * 8
    # >= 2 grid steps keeps both TensorCores busy on v7x; batching several elements
    # per step amortises the fixed per-step cost on single-TC v5e/v6e.
    num_blocks = max(1, min(target_grid, B))
    block_b = -(-B // num_blocks)                  # cdiv
    b_pad = block_b * num_blocks

    xf = x.astype(jnp.float32)
    if b_pad != B or pad_len != L:
        xf = jnp.pad(xf, ((0, b_pad - B), (0, pad_len - L), (0, 0)))
    lens = de_lens.astype(jnp.int32)
    if b_pad != B:
        lens = jnp.pad(lens, (0, b_pad - B), constant_values=L)
    x2 = xf.reshape(b_pad * pad_len, d_emb)

    # Fuse all heads' Linear layers into one (d_emb, 3*H*d_k) weight (wrapper glue).
    wqkv = jnp.concatenate(
        [jnp.concatenate([h["wq"].T, h["wk"].T, h["wv"].T], axis=1)
         for h in lp["heads"]], axis=1)
    bqkv = jnp.concatenate(
        [jnp.concatenate([h["bq"], h["bk"], h["bv"]]) for h in lp["heads"]]
    ).reshape(1, 3 * num_heads * d_k)
    w0t = lp["w0"].T
    b0 = lp["b0"].reshape(1, d_emb)
    w1t = lp["w1"].T
    b1 = lp["b1"].reshape(1, d_ff)
    w2t = lp["w2"].T
    b2 = lp["b2"].reshape(1, d_emb)
    alpha = lp["alpha"].reshape(1, d_emb)
    beta = lp["beta"].reshape(1, d_emb)

    rows = block_b * pad_len
    kernel = functools.partial(
        encoder_layer_kernel, seq_len=L, pad_len=pad_len, d_emb=d_emb, d_k=d_k,
        num_heads=num_heads, block_b=block_b, eps=eps)

    out = pl.pallas_call(
        kernel,
        out_shape=jax.ShapeDtypeStruct((b_pad * pad_len, d_emb), jnp.float32),
        grid_spec=pltpu.PrefetchScalarGridSpec(
            num_scalar_prefetch=1,                       # de_lens -> SMEM
            grid=(num_blocks,),
            in_specs=[
                pl.BlockSpec((rows, d_emb),                lambda g, l: (g, 0)),  # x
                pl.BlockSpec((d_emb, 3 * num_heads * d_k), lambda g, l: (0, 0)),  # Wqkv
                pl.BlockSpec((1, 3 * num_heads * d_k),     lambda g, l: (0, 0)),  # bqkv
                pl.BlockSpec((num_heads * d_k, d_emb),     lambda g, l: (0, 0)),  # W0^T
                pl.BlockSpec((1, d_emb),                   lambda g, l: (0, 0)),  # b0
                pl.BlockSpec((d_emb, d_ff),                lambda g, l: (0, 0)),  # W1^T
                pl.BlockSpec((1, d_ff),                    lambda g, l: (0, 0)),  # b1
                pl.BlockSpec((d_ff, d_emb),                lambda g, l: (0, 0)),  # W2^T
                pl.BlockSpec((1, d_emb),                   lambda g, l: (0, 0)),  # b2
                pl.BlockSpec((1, d_emb),                   lambda g, l: (0, 0)),  # alpha
                pl.BlockSpec((1, d_emb),                   lambda g, l: (0, 0)),  # beta
            ],
            out_specs=pl.BlockSpec((rows, d_emb), lambda g, l: (g, 0)),
        ),
        compiler_params=pltpu.CompilerParams(dimension_semantics=("parallel",)),
    )(lens, x2, wqkv, bqkv, w0t, b0, w1t, b1, w2t, b2, alpha, beta)

    return out.reshape(b_pad, pad_len, d_emb)[:B, :L, :].astype(x.dtype)


# --------------------------------------------------------------------------------------
# Pure-JAX mirror of the PyTorch module (reference path for verification).
# --------------------------------------------------------------------------------------
def _add_norm(x, alpha, beta, eps=ADD_NORM_EPS):
    mean = jnp.mean(x, axis=-1, keepdims=True)
    std = jnp.std(x, axis=-1, keepdims=True, ddof=1)   # torch.std default: unbiased
    return alpha * (x - mean) / (std + eps) + beta


def _self_attention_ref(x, de_lens, h, d_k, max_len=MAX_LEN):
    q = x @ h["wq"].T + h["bq"]
    k = x @ h["wk"].T + h["bk"]
    v = x @ h["wv"].T + h["bv"]
    scores = jnp.einsum("bld,bmd->blm", q, k) / math.sqrt(d_k)
    pos = jnp.arange(max_len)
    mask = jnp.where(pos[None, :] < de_lens[:, None], 0.0, NEG_INF)    # (B, L)
    scores = scores + mask[:, :, None]
    p = jax.nn.softmax(scores, axis=2)
    return jnp.einsum("blm,bmd->bld", p, v)


def encoder_layer_ref(x, de_lens, lp):
    d_k = lp["heads"][0]["wq"].shape[0]
    z1n = _add_norm(x, lp["alpha"], lp["beta"])
    zcat = jnp.concatenate(
        [_self_attention_ref(z1n, de_lens, h, d_k) for h in lp["heads"]], axis=2)
    z1 = zcat @ lp["w0"].T + lp["b0"]                  # W0 (dropout = inference no-op)
    z2n = _add_norm(z1 + x, lp["alpha"], lp["beta"])
    hid = jnp.maximum(z2n @ lp["w1"].T + lp["b1"], 0.0)
    z2 = hid @ lp["w2"].T + lp["b2"]
    return z1 + z2


def transformer_encoder(indices, de_lens, params, layer_fn):
    # TODO(synk): nn.Embedding gather, PosEncoder add, dropout (no-op) and the final
    # Add_Norm are left to XLA; the per-layer heavy lifting runs in the Pallas kernel.
    embs = params["emb"][indices]                      # embedding lookup
    L = embs.shape[1]
    embs = embs + params["pe"][None, :L, :]            # PosEncoder
    for lp in params["layers"]:
        embs = layer_fn(embs, de_lens, lp)
    return _add_norm(embs, params["alpha_f"], params["beta_f"])


@functools.partial(jax.jit, static_argnames=("use_kernel",))
def forward(indices, de_lens, params, use_kernel):
    layer_fn = encoder_layer_pallas if use_kernel else encoder_layer_ref
    return transformer_encoder(indices, de_lens, params, layer_fn)


# --------------------------------------------------------------------------------------
if __name__ == "__main__":
    # Shapes implied by the module: L=60 (create_mask) and d_emb=400 (Add_Norm default).
    B, L, d_emb = 2, MAX_LEN, 400
    num_layers, num_heads, d_k, d_ff = 2, 2, 64, 512
    vocab_size, max_seq_len = 100, MAX_LEN

    keys = iter(jax.random.split(jax.random.PRNGKey(0), 64))
    nk = lambda: next(keys)

    def linear(out_f, in_f):
        bound = 1.0 / math.sqrt(in_f)                  # PyTorch nn.Linear default init
        w = jax.random.uniform(nk(), (out_f, in_f), jnp.float32, -bound, bound)
        b = jax.random.uniform(nk(), (out_f,), jnp.float32, -bound, bound)
        return w, b

    layers = []
    for _ in range(num_layers):
        heads = []
        for _ in range(num_heads):
            wq, bq = linear(d_k, d_emb)
            wk, bk = linear(d_k, d_emb)
            wv, bv = linear(d_k, d_emb)
            heads.append(dict(wq=wq, bq=bq, wk=wk, bk=bk, wv=wv, bv=bv))
        w0, b0 = linear(d_emb, num_heads * d_k)
        w1, b1 = linear(d_ff, d_emb)
        w2, b2 = linear(d_emb, d_ff)
        layers.append(dict(heads=heads, w0=w0, b0=b0, w1=w1, b1=b1, w2=w2, b2=b2,
                           alpha=jnp.ones((d_emb,), jnp.float32),     # Add_Norm init
                           beta=jnp.zeros((d_emb,), jnp.float32)))

    # PosEncoder table: PE[pos, 2i] = sin(pos / 10000^(2i/d)), PE[pos, 2i+1] = cos(...)
    pos = jnp.arange(max_seq_len, dtype=jnp.float32)[:, None]
    two_i = 2.0 * jnp.arange(d_emb // 2, dtype=jnp.float32)[None, :]
    angles = pos / jnp.power(10000.0, two_i / d_emb)
    pe = jnp.zeros((max_seq_len, d_emb), jnp.float32)
    pe = pe.at[:, 0::2].set(jnp.sin(angles))
    pe = pe.at[:, 1::2].set(jnp.cos(angles))

    params = dict(
        emb=jax.random.normal(nk(), (vocab_size, d_emb), jnp.float32),  # nn.Embedding
        pe=pe,
        layers=layers,
        alpha_f=jnp.ones((d_emb,), jnp.float32),
        beta_f=jnp.zeros((d_emb,), jnp.float32))

    indices = jax.random.randint(nk(), (B, L), 0, vocab_size)
    de_lens = jnp.array([37, 60], dtype=jnp.int32)

    out = jax.block_until_ready(forward(indices, de_lens, params, use_kernel=True))
    ref = jax.block_until_ready(forward(indices, de_lens, params, use_kernel=False))

    assert out.shape == (B, L, d_emb)
    # Tolerance absorbs MXU vs. XLA accumulation-order differences across 2 layers.
    assert bool(jnp.allclose(out, ref, atol=1e-3, rtol=1e-3)), "mismatch vs reference"
    print("KERNEL_OK")
</pallas_src>

<mosaic_0001>
module attributes {stable_mosaic.version = 11 : i64} {
  func.func @encoder_layer_kernel(%arg0: i32, %arg1: memref<2xi32, #tpu.memory_space<smem>>, %arg2: memref<64x400xf32, #tpu.memory_space<vmem>>, %arg3: memref<400x384xf32, #tpu.memory_space<vmem>>, %arg4: memref<1x384xf32, #tpu.memory_space<vmem>>, %arg5: memref<128x400xf32, #tpu.memory_space<vmem>>, %arg6: memref<1x400xf32, #tpu.memory_space<vmem>>, %arg7: memref<400x512xf32, #tpu.memory_space<vmem>>, %arg8: memref<1x512xf32, #tpu.memory_space<vmem>>, %arg9: memref<512x400xf32, #tpu.memory_space<vmem>>, %arg10: memref<1x400xf32, #tpu.memory_space<vmem>>, %arg11: memref<1x400xf32, #tpu.memory_space<vmem>>, %arg12: memref<1x400xf32, #tpu.memory_space<vmem>>, %arg13: memref<64x400xf32, #tpu.memory_space<vmem>>) attributes {dimension_semantics = [#tpu.dimension_semantics<parallel>], iteration_bounds = array<i64: 2>, scalar_prefetch = 1 : i64, scratch_operands = 0 : i64, tpu.core_type = #tpu.core_type<tc>, window_params = [{transform_indices = @transform_0, window_bounds = array<i64: 64, 400>}, {pipeline_mode = #tpu.pipeline_mode<synchronous>, transform_indices = @transform_1, window_bounds = array<i64: 400, 384>}, {pipeline_mode = #tpu.pipeline_mode<synchronous>, transform_indices = @transform_2, window_bounds = array<i64: 1, 384>}, {pipeline_mode = #tpu.pipeline_mode<synchronous>, transform_indices = @transform_3, window_bounds = array<i64: 128, 400>}, {pipeline_mode = #tpu.pipeline_mode<synchronous>, transform_indices = @transform_4, window_bounds = array<i64: 1, 400>}, {pipeline_mode = #tpu.pipeline_mode<synchronous>, transform_indices = @transform_5, window_bounds = array<i64: 400, 512>}, {pipeline_mode = #tpu.pipeline_mode<synchronous>, transform_indices = @transform_6, window_bounds = array<i64: 1, 512>}, {pipeline_mode = #tpu.pipeline_mode<synchronous>, transform_indices = @transform_7, window_bounds = array<i64: 512, 400>}, {pipeline_mode = #tpu.pipeline_mode<synchronous>, transform_indices = @transform_8, window_bounds = array<i64: 1, 400>}, {pipeline_mode = #tpu.pipeline_mode<synchronous>, transform_indices = @transform_9, window_bounds = array<i64: 1, 400>}, {pipeline_mode = #tpu.pipeline_mode<synchronous>, transform_indices = @transform_10, window_bounds = array<i64: 1, 400>}, {transform_indices = @transform_11, window_bounds = array<i64: 64, 400>}]} {
    %c0 = arith.constant 0 : index
    %c0_0 = arith.constant 0 : index
    %0 = vector.load %arg2[%c0, %c0_0] : memref<64x400xf32, #tpu.memory_space<vmem>>, vector<64x400xf32>
    %c0_1 = arith.constant 0 : index
    %c0_2 = arith.constant 0 : index
    %1 = vector.load %arg11[%c0_1, %c0_2] : memref<1x400xf32, #tpu.memory_space<vmem>>, vector<1x400xf32>
    %c0_3 = arith.constant 0 : index
    %c0_4 = arith.constant 0 : index
    %2 = vector.load %arg12[%c0_3, %c0_4] : memref<1x400xf32, #tpu.memory_space<vmem>>, vector<1x400xf32>
    %cst = arith.constant dense<0.000000e+00> : vector<64xf32>
    %3 = vector.multi_reduction <add>, %0, %cst [1] : vector<64x400xf32> to vector<64xf32>
    %4 = vector.shape_cast %3 : vector<64xf32> to vector<64x1xf32>
    %cst_5 = arith.constant 4.000000e+02 : f32
    %5 = vector.broadcast %cst_5 : f32 to vector<64x1xf32>
    %6 = arith.divf %4, %5 : vector<64x1xf32>
    %7 = vector.broadcast %6 : vector<64x1xf32> to vector<64x400xf32>
    %8 = arith.subf %0, %7 : vector<64x400xf32>
    %9 = arith.mulf %8, %8 : vector<64x400xf32>
    %cst_6 = arith.constant dense<0.000000e+00> : vector<64xf32>
    %10 = vector.multi_reduction <add>, %9, %cst_6 [1] : vector<64x400xf32> to vector<64xf32>
    %11 = vector.shape_cast %10 : vector<64xf32> to vector<64x1xf32>
    %cst_7 = arith.constant 0.00250626565 : f32
    %12 = vector.broadcast %cst_7 : f32 to vector<64x1xf32>
    %13 = arith.mulf %11, %12 : vector<64x1xf32>
    %14 = math.sqrt %13 : vector<64x1xf32>
    %15 = vector.broadcast %1 : vector<1x400xf32> to vector<64x400xf32>
    %16 = arith.mulf %15, %8 : vector<64x400xf32>
    %cst_8 = arith.constant 9.99999997E-7 : f32
    %17 = vector.broadcast %cst_8 : f32 to vector<64x1xf32>
    %18 = arith.addf %14, %17 : vector<64x1xf32>
    %19 = tpu.reciprocal %18 : vector<64x1xf32> -> vector<64x1xf32>
    %20 = vector.broadcast %19 : vector<64x1xf32> to vector<64x400xf32>
    %21 = arith.mulf %16, %20 : vector<64x400xf32>
    %22 = vector.broadcast %2 : vector<1x400xf32> to vector<64x400xf32>
    %23 = arith.addf %21, %22 : vector<64x400xf32>
    %c0_9 = arith.constant 0 : index
    %c0_10 = arith.constant 0 : index
    %24 = vector.load %arg3[%c0_9, %c0_10] : memref<400x384xf32, #tpu.memory_space<vmem>>, vector<400x384xf32>
    %cst_11 = arith.constant dense<0.000000e+00> : vector<64x384xf32>
    %25 = tpu.matmul %23, %24, %cst_11 {dimension_numbers = #tpu.dot_dimension_numbers<[1], [0], [0], [1], [0, 0, 1, 1], [], []>} : vector<64x400xf32>, vector<400x384xf32>, vector<64x384xf32> -> vector<64x384xf32>
    %c0_12 = arith.constant 0 : index
    %c0_13 = arith.constant 0 : index
    %26 = vector.load %arg4[%c0_12, %c0_13] : memref<1x384xf32, #tpu.memory_space<vmem>>, vector<1x384xf32>
    %27 = vector.broadcast %26 : vector<1x384xf32> to vector<64x384xf32>
    %28 = arith.addf %25, %27 : vector<64x384xf32>
    %29 = tpu.iota {dimensions = array<i32: 0>} : vector<64x64xi32>
    %30 = tpu.iota {dimensions = array<i32: 1>} : vector<64x64xi32>
    %c60_i32 = arith.constant 60 : i32
    %31 = vector.broadcast %c60_i32 : i32 to vector<64x64xi32>
    %32 = arith.cmpi slt, %30, %31 : vector<64x64xi32>
    %cst_14 = arith.constant 0.000000e+00 : f32
    %cst_15 = arith.constant -1.000000e+09 : f32
    %33 = vector.broadcast %cst_14 : f32 to vector<64x64xf32>
    %34 = vector.broadcast %cst_15 : f32 to vector<64x64xf32>
    %35 = arith.select %32, %33, %34 : vector<64x64xi1>, vector<64x64xf32>
    %c0_16 = arith.constant 0 : index
    %c0_17 = arith.constant 0 : index
    %36 = vector.load %arg5[%c0_16, %c0_17] : memref<128x400xf32, #tpu.memory_space<vmem>>, vector<128x400xf32>
    %c0_18 = arith.constant 0 : index
    %c0_19 = arith.constant 0 : index
    %37 = vector.load %arg6[%c0_18, %c0_19] : memref<1x400xf32, #tpu.memory_space<vmem>>, vector<1x400xf32>
    %c0_20 = arith.constant 0 : index
    %c0_21 = arith.constant 0 : index
    %38 = vector.load %arg7[%c0_20, %c0_21] : memref<400x512xf32, #tpu.memory_space<vmem>>, vector<400x512xf32>
    %c0_22 = arith.constant 0 : index
    %c0_23 = arith.constant 0 : index
    %39 = vector.load %arg8[%c0_22, %c0_23] : memref<1x512xf32, #tpu.memory_space<vmem>>, vector<1x512xf32>
    %c0_24 = arith.constant 0 : index
    %c0_25 = arith.constant 0 : index
    %40 = vector.load %arg9[%c0_24, %c0_25] : memref<512x400xf32, #tpu.memory_space<vmem>>, vector<512x400xf32>
    %c0_26 = arith.constant 0 : index
    %c0_27 = arith.constant 0 : index
    %41 = vector.load %arg10[%c0_26, %c0_27] : memref<1x400xf32, #tpu.memory_space<vmem>>, vector<1x400xf32>
    %c1_i32 = arith.constant 1 : i32
    %42 = arith.muli %arg0, %c1_i32 : i32
    %c0_i32 = arith.constant 0 : i32
    %43 = arith.addi %42, %c0_i32 : i32
    %44 = arith.index_cast %43 : i32 to index
    %45 = memref.load %arg1[%44] : memref<2xi32, #tpu.memory_space<smem>>
    %46 = vector.broadcast %45 : i32 to vector<64x64xi32>
    %47 = arith.cmpi slt, %29, %46 : vector<64x64xi32>
    %cst_28 = arith.constant 0.000000e+00 : f32
    %cst_29 = arith.constant -1.000000e+09 : f32
    %48 = vector.broadcast %cst_28 : f32 to vector<64x64xf32>
    %49 = vector.broadcast %cst_29 : f32 to vector<64x64xf32>
    %50 = arith.select %47, %48, %49 : vector<64x64xi1>, vector<64x64xf32>
    %51 = arith.addf %50, %35 : vector<64x64xf32>
    %52 = vector.extract_strided_slice %28 {offsets = [0, 0], sizes = [64, 64], strides = [1, 1]} : vector<64x384xf32> to vector<64x64xf32>
    %53 = vector.extract_strided_slice %28 {offsets = [0, 64], sizes = [64, 64], strides = [1, 1]} : vector<64x384xf32> to vector<64x64xf32>
    %54 = vector.extract_strided_slice %28 {offsets = [0, 128], sizes = [64, 64], strides = [1, 1]} : vector<64x384xf32> to vector<64x64xf32>
    %cst_30 = arith.constant dense<0.000000e+00> : vector<64x64xf32>
    %55 = tpu.matmul %52, %53, %cst_30 {dimension_numbers = #tpu.dot_dimension_numbers<[1], [1], [0], [0], [0, 0, 1, 0], [], []>} : vector<64x64xf32>, vector<64x64xf32>, vector<64x64xf32> -> vector<64x64xf32>
    %cst_31 = arith.constant 1.250000e-01 : f32
    %56 = vector.broadcast %cst_31 : f32 to vector<64x64xf32>
    %57 = arith.mulf %55, %56 : vector<64x64xf32>
    %58 = arith.addf %57, %51 : vector<64x64xf32>
    %cst_32 = arith.constant dense<0xFF800000> : vector<64xf32>
    %59 = vector.multi_reduction <maximumf>, %58, %cst_32 [1] : vector<64x64xf32> to vector<64xf32>
    %60 = vector.shape_cast %59 : vector<64xf32> to vector<64x1xf32>
    %61 = vector.broadcast %60 : vector<64x1xf32> to vector<64x64xf32>
    %62 = arith.subf %58, %61 : vector<64x64xf32>
    %63 = math.exp %62 : vector<64x64xf32>
    %cst_33 = arith.constant dense<0.000000e+00> : vector<64xf32>
    %64 = vector.multi_reduction <add>, %63, %cst_33 [1] : vector<64x64xf32> to vector<64xf32>
    %65 = vector.shape_cast %64 : vector<64xf32> to vector<64x1xf32>
    %66 = tpu.reciprocal %65 : vector<64x1xf32> -> vector<64x1xf32>
    %67 = vector.broadcast %66 : vector<64x1xf32> to vector<64x64xf32>
    %68 = arith.mulf %63, %67 : vector<64x64xf32>
    %cst_34 = arith.constant dense<0.000000e+00> : vector<64x64xf32>
    %69 = tpu.matmul %68, %54, %cst_34 {dimension_numbers = #tpu.dot_dimension_numbers<[1], [0], [0], [1], [0, 0, 1, 1], [], []>} : vector<64x64xf32>, vector<64x64xf32>, vector<64x64xf32> -> vector<64x64xf32>
    %70 = vector.extract_strided_slice %28 {offsets = [0, 192], sizes = [64, 64], strides = [1, 1]} : vector<64x384xf32> to vector<64x64xf32>
    %71 = vector.extract_strided_slice %28 {offsets = [0, 256], sizes = [64, 64], strides = [1, 1]} : vector<64x384xf32> to vector<64x64xf32>
    %72 = vector.extract_strided_slice %28 {offsets = [0, 320], sizes = [64, 64], strides = [1, 1]} : vector<64x384xf32> to vector<64x64xf32>
    %cst_35 = arith.constant dense<0.000000e+00> : vector<64x64xf32>
    %73 = tpu.matmul %70, %71, %cst_35 {dimension_numbers = #tpu.dot_dimension_numbers<[1], [1], [0], [0], [0, 0, 1, 0], [], []>} : vector<64x64xf32>, vector<64x64xf32>, vector<64x64xf32> -> vector<64x64xf32>
    %cst_36 = arith.constant 1.250000e-01 : f32
    %74 = vector.broadcast %cst_36 : f32 to vector<64x64xf32>
    %75 = arith.mulf %73, %74 : vector<64x64xf32>
    %76 = arith.addf %75, %51 : vector<64x64xf32>
    %cst_37 = arith.constant dense<0xFF800000> : vector<64xf32>
    %77 = vector.multi_reduction <maximumf>, %76, %cst_37 [1] : vector<64x64xf32> to vector<64xf32>
    %78 = vector.shape_cast %77 : vector<64xf32> to vector<64x1xf32>
    %79 = vector.broadcast %78 : vector<64x1xf32> to vector<64x64xf32>
    %80 = arith.subf %76, %79 : vector<64x64xf32>
    %81 = math.exp %80 : vector<64x64xf32>
    %cst_38 = arith.constant dense<0.000000e+00> : vector<64xf32>
    %82 = vector.multi_reduction <add>, %81, %cst_38 [1] : vector<64x64xf32> to vector<64xf32>
    %83 = vector.shape_cast %82 : vector<64xf32> to vector<64x1xf32>
    %84 = tpu.reciprocal %83 : vector<64x1xf32> -> vector<64x1xf32>
    %85 = vector.broadcast %84 : vector<64x1xf32> to vector<64x64xf32>
    %86 = arith.mulf %81, %85 : vector<64x64xf32>
    %cst_39 = arith.constant dense<0.000000e+00> : vector<64x64xf32>
    %87 = tpu.matmul %86, %72, %cst_39 {dimension_numbers = #tpu.dot_dimension_numbers<[1], [0], [0], [1], [0, 0, 1, 1], [], []>} : vector<64x64xf32>, vector<64x64xf32>, vector<64x64xf32> -> vector<64x64xf32>
    %88 = tpu.concatenate %69, %87 in 1 : vector<64x64xf32>, vector<64x64xf32> -> vector<64x128xf32>
    %cst_40 = arith.constant dense<0.000000e+00> : vector<64x400xf32>
    %89 = tpu.matmul %88, %36, %cst_40 {dimension_numbers = #tpu.dot_dimension_numbers<[1], [0], [0], [1], [0, 0, 1, 1], [], []>} : vector<64x128xf32>, vector<128x400xf32>, vector<64x400xf32> -> vector<64x400xf32>
    %90 = vector.broadcast %37 : vector<1x400xf32> to vector<64x400xf32>
    %91 = arith.addf %89, %90 : vector<64x400xf32>
    %92 = arith.addf %91, %0 : vector<64x400xf32>
    %cst_41 = arith.constant dense<0.000000e+00> : vector<64xf32>
    %93 = vector.multi_reduction <add>, %92, %cst_41 [1] : vector<64x400xf32> to vector<64xf32>
    %94 = vector.shape_cast %93 : vector<64xf32> to vector<64x1xf32>
    %cst_42 = arith.constant 4.000000e+02 : f32
    %95 = vector.broadcast %cst_42 : f32 to vector<64x1xf32>
    %96 = arith.divf %94, %95 : vector<64x1xf32>
    %97 = vector.broadcast %96 : vector<64x1xf32> to vector<64x400xf32>
    %98 = arith.subf %92, %97 : vector<64x400xf32>
    %99 = arith.mulf %98, %98 : vector<64x400xf32>
    %cst_43 = arith.constant dense<0.000000e+00> : vector<64xf32>
    %100 = vector.multi_reduction <add>, %99, %cst_43 [1] : vector<64x400xf32> to vector<64xf32>
    %101 = vector.shape_cast %100 : vector<64xf32> to vector<64x1xf32>
    %cst_44 = arith.constant 0.00250626565 : f32
    %102 = vector.broadcast %cst_44 : f32 to vector<64x1xf32>
    %103 = arith.mulf %101, %102 : vector<64x1xf32>
    %104 = math.sqrt %103 : vector<64x1xf32>
    %105 = vector.broadcast %1 : vector<1x400xf32> to vector<64x400xf32>
    %106 = arith.mulf %105, %98 : vector<64x400xf32>
    %cst_45 = arith.constant 9.99999997E-7 : f32
    %107 = vector.broadcast %cst_45 : f32 to vector<64x1xf32>
    %108 = arith.addf %104, %107 : vector<64x1xf32>
    %109 = tpu.reciprocal %108 : vector<64x1xf32> -> vector<64x1xf32>
    %110 = vector.broadcast %109 : vector<64x1xf32> to vector<64x400xf32>
    %111 = arith.mulf %106, %110 : vector<64x400xf32>
    %112 = vector.broadcast %2 : vector<1x400xf32> to vector<64x400xf32>
    %113 = arith.addf %111, %112 : vector<64x400xf32>
    %cst_46 = arith.constant dense<0.000000e+00> : vector<64x512xf32>
    %114 = tpu.matmul %113, %38, %cst_46 {dimension_numbers = #tpu.dot_dimension_numbers<[1], [0], [0], [1], [0, 0, 1, 1], [], []>} : vector<64x400xf32>, vector<400x512xf32>, vector<64x512xf32> -> vector<64x512xf32>
    %115 = vector.broadcast %39 : vector<1x512xf32> to vector<64x512xf32>
    %116 = arith.addf %114, %115 : vector<64x512xf32>
    %cst_47 = arith.constant 0.000000e+00 : f32
    %117 = vector.broadcast %cst_47 : f32 to vector<64x512xf32>
    %118 = arith.maximumf %116, %117 : vector<64x512xf32>
    %cst_48 = arith.constant dense<0.000000e+00> : vector<64x400xf32>
    %119 = tpu.matmul %118, %40, %cst_48 {dimension_numbers = #tpu.dot_dimension_numbers<[1], [0], [0], [1], [0, 0, 1, 1], [], []>} : vector<64x512xf32>, vector<512x400xf32>, vector<64x400xf32> -> vector<64x400xf32>
    %120 = vector.broadcast %41 : vector<1x400xf32> to vector<64x400xf32>
    %121 = arith.addf %119, %120 : vector<64x400xf32>
    %122 = arith.addf %91, %121 : vector<64x400xf32>
    %c0_49 = arith.constant 0 : index
    %c0_50 = arith.constant 0 : index
    %123 = vector.load %arg13[%c0_49, %c0_50] : memref<64x400xf32, #tpu.memory_space<vmem>>, vector<64x400xf32>
    tpu.vector_store %arg13[%c0_49, %c0_50], %122 {strides = array<i32>} : memref<64x400xf32, #tpu.memory_space<vmem>>, vector<64x400xf32>,
    return
  }
  func.func @transform_0(%arg0: i32, %arg1: memref<2xi32, #tpu.memory_space<smem>>) -> (i32, i32) {
    %c0_i32 = arith.constant 0 : i32
    %c0_i32_0 = arith.constant 0 : i32
    return %arg0, %c0_i32 : i32, i32
  }
  func.func @transform_1(%arg0: i32, %arg1: memref<2xi32, #tpu.memory_space<smem>>) -> (i32, i32) {
    %c0_i32 = arith.constant 0 : i32
    %c0_i32_0 = arith.constant 0 : i32
    %c0_i32_1 = arith.constant 0 : i32
    return %c0_i32, %c0_i32_0 : i32, i32
  }
  func.func @transform_2(%arg0: i32, %arg1: memref<2xi32, #tpu.memory_space<smem>>) -> (i32, i32) {
    %c0_i32 = arith.constant 0 : i32
    %c0_i32_0 = arith.constant 0 : i32
    %c0_i32_1 = arith.constant 0 : i32
    return %c0_i32, %c0_i32_0 : i32, i32
  }
  func.func @transform_3(%arg0: i32, %arg1: memref<2xi32, #tpu.memory_space<smem>>) -> (i32, i32) {
    %c0_i32 = arith.constant 0 : i32
    %c0_i32_0 = arith.constant 0 : i32
    %c0_i32_1 = arith.constant 0 : i32
    return %c0_i32, %c0_i32_0 : i32, i32
  }
  func.func @transform_4(%arg0: i32, %arg1: memref<2xi32, #tpu.memory_space<smem>>) -> (i32, i32) {
    %c0_i32 = arith.constant 0 : i32
    %c0_i32_0 = arith.constant 0 : i32
    %c0_i32_1 = arith.constant 0 : i32
    return %c0_i32, %c0_i32_0 : i32, i32
  }
  func.func @transform_5(%arg0: i32, %arg1: memref<2xi32, #tpu.memory_space<smem>>) -> (i32, i32) {
    %c0_i32 = arith.constant 0 : i32
    %c0_i32_0 = arith.constant 0 : i32
    %c0_i32_1 = arith.constant 0 : i32
    return %c0_i32, %c0_i32_0 : i32, i32
  }
  func.func @transform_6(%arg0: i32, %arg1: memref<2xi32, #tpu.memory_space<smem>>) -> (i32, i32) {
    %c0_i32 = arith.constant 0 : i32
    %c0_i32_0 = arith.constant 0 : i32
    %c0_i32_1 = arith.constant 0 : i32
    return %c0_i32, %c0_i32_0 : i32, i32
  }
  func.func @transform_7(%arg0: i32, %arg1: memref<2xi32, #tpu.memory_space<smem>>) -> (i32, i32) {
    %c0_i32 = arith.constant 0 : i32
    %c0_i32_0 = arith.constant 0 : i32
    %c0_i32_1 = arith.constant 0 : i32
    return %c0_i32, %c0_i32_0 : i32, i32
  }
  func.func @transform_8(%arg0: i32, %arg1: memref<2xi32, #tpu.memory_space<smem>>) -> (i32, i32) {
    %c0_i32 = arith.constant 0 : i32
    %c0_i32_0 = arith.constant 0 : i32
    %c0_i32_1 = arith.constant 0 : i32
    return %c0_i32, %c0_i32_0 : i32, i32
  }
  func.func @transform_9(%arg0: i32, %arg1: memref<2xi32, #tpu.memory_space<smem>>) -> (i32, i32) {
    %c0_i32 = arith.constant 0 : i32
    %c0_i32_0 = arith.constant 0 : i32
    %c0_i32_1 = arith.constant 0 : i32
    return %c0_i32, %c0_i32_0 : i32, i32
  }
  func.func @transform_10(%arg0: i32, %arg1: memref<2xi32, #tpu.memory_space<smem>>) -> (i32, i32) {
    %c0_i32 = arith.constant 0 : i32
    %c0_i32_0 = arith.constant 0 : i32
    %c0_i32_1 = arith.constant 0 : i32
    return %c0_i32, %c0_i32_0 : i32, i32
  }
  func.func @transform_11(%arg0: i32, %arg1: memref<2xi32, #tpu.memory_space<smem>>) -> (i32, i32) {
    %c0_i32 = arith.constant 0 : i32
    %c0_i32_0 = arith.constant 0 : i32
    return %arg0, %c0_i32 : i32, i32
  }
}

</mosaic_0001>

<llo_original>
// kernel: forward.2
$region0: #{forward.2}
  #allocation0 [shape = 'u32[]', space=smem, size = 0x4, offset = 0x4, fixed_abs, tag = 'smem constant byte address 0x4 - core index']
  #allocation1 [shape = 'u32[144,128]{1,0:T(1,128)}', space=vmem, size = 0x12000, scoped, tag = 'internal scratch']
  #allocation2 [shape = 's32[1]{0}', space=sflag, size = 0x4, scoped, tag = 'scoped memory for forward.2']
  #allocation3 [shape = 'u8[512]{0}', space=smem, size = 0x200, scoped, tag = 'prefetched SMEM operand 0']
  %s0 = inlined_call_operand.vmem [shape: s32[2], index: 0, kind: input, shape index: {}]
  %s1 = inlined_call_operand.vmem [shape: f32[128,400], index: 1, kind: input, shape index: {}]
  %s2 = inlined_call_operand.vmem [shape: f32[400,384], index: 2, kind: input, shape index: {}]
  %s3 = inlined_call_operand.vmem [shape: f32[1,384], index: 3, kind: input, shape index: {}]
  %s4 = inlined_call_operand.vmem [shape: f32[128,400], index: 4, kind: input, shape index: {}]
  %s5 = inlined_call_operand.vmem [shape: f32[1,400], index: 5, kind: input, shape index: {}]
  %s6 = inlined_call_operand.vmem [shape: f32[400,512], index: 6, kind: input, shape index: {}]
  %s7 = inlined_call_operand.vmem [shape: f32[1,512], index: 7, kind: input, shape index: {}]
  %s8 = inlined_call_operand.vmem [shape: f32[512,400], index: 8, kind: input, shape index: {}]
  %s9 = inlined_call_operand.vmem [shape: f32[1,400], index: 9, kind: input, shape index: {}]
  %s10 = inlined_call_operand.vmem [shape: f32[1,400], index: 10, kind: input, shape index: {}]
  %s11 = inlined_call_operand.vmem [shape: f32[1,400], index: 11, kind: input, shape index: {}]
  %s12 = inlined_call_operand.vmem [shape: f32[128,400], index: 12, kind: output, shape index: {}]
  %s13 = sld [smem:[#allocation0]]
  $region77: #{forward.2} parent=0
    _
  %s15 = ssub.s32 1, %s13
  %s16 = scalar_select 0, %s15, %s13
  %s17 = sshll.u32 %s0, 4
  %s18 = int_to_ptr.vmem [resolvable:$true] %s17
  %20 = dma.vmem_to_smem %s18, 16, [#allocation3], [#allocation2]
  %21 = dma.done [#allocation2], 16
  %22 = sfence
  loop: start=0, step=1, limit=4
  $region2: #{forward.2} parent=0 // loop_pre_header
    _
  $region3: #{forward.2} parent=0 // loop_header
    %s24 = sphi 0, %s28
    %p25 = scmp.ge.s32.totalorder %s24, 4
    %s34 = sphi 0, %s36
    %s37 = sphi 0, %s34
    %s38 = sphi 0, %s37
    %s54 = sphi 0, %s38
    %s58 = sphi 0, %s58
    %s60 = sphi 0, %s58
    %s61 = sphi 0, %s60
    %s75 = sphi 0, %s61
    %s79 = sphi 0, %s79
    %s81 = sphi 0, %s79
    %s82 = sphi 0, %s81
    %s96 = sphi 0, %s82
    %s100 = sphi 0, %s100
    %s102 = sphi 0, %s100
    %s103 = sphi 0, %s102
    %s117 = sphi 0, %s103
    %s121 = sphi 0, %s121
    %s123 = sphi 0, %s121
    %s124 = sphi 0, %s123
    %s138 = sphi 0, %s124
    %s142 = sphi 0, %s142
    %s144 = sphi 0, %s142
    %s145 = sphi 0, %s144
    %s159 = sphi 0, %s145
    %s163 = sphi 0, %s163
    %s165 = sphi 0, %s163
    %s166 = sphi 0, %s165
    %s180 = sphi 0, %s166
    %s184 = sphi 0, %s184
    %s186 = sphi 0, %s184
    %s187 = sphi 0, %s186
    %s201 = sphi 0, %s187
    %s205 = sphi 0, %s205
    %s207 = sphi 0, %s205
    %s208 = sphi 0, %s207
    %s222 = sphi 0, %s208
    %s226 = sphi 0, %s226
    %s228 = sphi 0, %s226
    %s229 = sphi 0, %s228
    %s243 = sphi 0, %s229
    %s247 = sphi 0, %s247
    %s249 = sphi 0, %s247
    %s250 = sphi 0, %s249
    %s264 = sphi 0, %s250
    %s270 = sphi 0, %s272
    %s273 = sphi 0, %s270
    %s274 = sphi 0, %s273
    %s290 = sphi 0, %s274
  $region4: #{forward.2} parent=0 // loop_header_branch
    %27 = sbr.rel (%p25) target = $region8
  $region5: #{forward.2} parent=0 // loop_body
    %s29 = ssub.s32 %s24, 1
    %s30 = ssub.s32 %s24, 2
    %s31 = sadd.s32 %s24, 1
    %s32 = ssub.s32 %s24, %s31
    %p33 = scmp.eq.s32.totalorder %s32, 0
    %s35 = sadd.s32 %s34, 1
    %s36 = scalar_select %p33, %s34, %s35
    %p39 = pneg %p33
    %p40 = scmp.eq.s32.totalorder %s24, 1
    %p41 = por %p39, %p40
    %p42 = scmp.ne.s32.totalorder %s34, %s37
    %p43 = scmp.eq.s32.totalorder %s24, 0
    %p44 = por %p42, %p43
    %p45 = scmp.ne.s32.totalorder %s34, %s37
    %p46 = scmp.eq.s32.totalorder %s29, 1
    %p47 = por %p45, %p46
    %p48 = scmp.ne.s32.totalorder %s37, %s38
    %p49 = scmp.eq.s32.totalorder %s29, 0
    %p50 = por %p48, %p49
    %p51 = scmp.ne.s32.totalorder %s37, %s38
    %p52 = scmp.eq.s32.totalorder %s30, 1
    %p53 = por %p51, %p52
    %p55 = scmp.ne.s32.totalorder %s38, %s54
    %p56 = scmp.eq.s32.totalorder %s30, 0
    %p57 = por %p55, %p56
    %s59 = sadd.s32 %s58, 1
    %p62 = scmp.eq.s32.totalorder %s24, 1
    %p63 = scmp.ne.s32.totalorder %s58, %s60
    %p64 = scmp.eq.s32.totalorder %s24, 0
    %p65 = por %p63, %p64
    %p66 = scmp.ne.s32.totalorder %s58, %s60
    %p67 = scmp.eq.s32.totalorder %s29, 1
    %p68 = por %p66, %p67
    %p69 = scmp.ne.s32.totalorder %s60, %s61
    %p70 = scmp.eq.s32.totalorder %s29, 0
    %p71 = por %p69, %p70
    %p72 = scmp.ne.s32.totalorder %s60, %s61
    %p73 = scmp.eq.s32.totalorder %s30, 1
    %p74 = por %p72, %p73
    %p76 = scmp.ne.s32.totalorder %s61, %s75
    %p77 = scmp.eq.s32.totalorder %s30, 0
    %p78 = por %p76, %p77
    %s80 = sadd.s32 %s79, 1
    %p83 = scmp.eq.s32.totalorder %s24, 1
    %p84 = scmp.ne.s32.totalorder %s79, %s81
    %p85 = scmp.eq.s32.totalorder %s24, 0
    %p86 = por %p84, %p85
    %p87 = scmp.ne.s32.totalorder %s79, %s81
    %p88 = scmp.eq.s32.totalorder %s29, 1
    %p89 = por %p87, %p88
    %p90 = scmp.ne.s32.totalorder %s81, %s82
    %p91 = scmp.eq.s32.totalorder %s29, 0
    %p92 = por %p90, %p91
    %p93 = scmp.ne.s32.totalorder %s81, %s82
    %p94 = scmp.eq.s32.totalorder %s30, 1
    %p95 = por %p93, %p94
    %p97 = scmp.ne.s32.totalorder %s82, %s96
    %p98 = scmp.eq.s32.totalorder %s30, 0
    %p99 = por %p97, %p98
    %s101 = sadd.s32 %s100, 1
    %p104 = scmp.eq.s32.totalorder %s24, 1
    %p105 = scmp.ne.s32.totalorder %s100, %s102
    %p106 = scmp.eq.s32.totalorder %s24, 0
    %p107 = por %p105, %p106
    %p108 = scmp.ne.s32.totalorder %s100, %s102
    %p109 = scmp.eq.s32.totalorder %s29, 1
    %p110 = por %p108, %p109
    %p111 = scmp.ne.s32.totalorder %s102, %s103
    %p112 = scmp.eq.s32.totalorder %s29, 0
    %p113 = por %p111, %p112
    %p114 = scmp.ne.s32.totalorder %s102, %s103
    %p115 = scmp.eq.s32.totalorder %s30, 1
    %p116 = por %p114, %p115
    %p118 = scmp.ne.s32.totalorder %s103, %s117
    %p119 = scmp.eq.s32.totalorder %s30, 0
    %p120 = por %p118, %p119
    %s122 = sadd.s32 %s121, 1
    %p125 = scmp.eq.s32.totalorder %s24, 1
    %p126 = scmp.ne.s32.totalorder %s121, %s123
    %p127 = scmp.eq.s32.totalorder %s24, 0
    %p128 = por %p126, %p127
    %p129 = scmp.ne.s32.totalorder %s121, %s123
    %p130 = scmp.eq.s32.totalorder %s29, 1
    %p131 = por %p129, %p130
    %p132 = scmp.ne.s32.totalorder %s123, %s124
    %p133 = scmp.eq.s32.totalorder %s29, 0
    %p134 = por %p132, %p133
    %p135 = scmp.ne.s32.totalorder %s123, %s124
    %p136 = scmp.eq.s32.totalorder %s30, 1
    %p137 = por %p135, %p136
    %p139 = scmp.ne.s32.totalorder %s124, %s138
    %p140 = scmp.eq.s32.totalorder %s30, 0
    %p141 = por %p139, %p140
    %s143 = sadd.s32 %s142, 1
    %p146 = scmp.eq.s32.totalorder %s24, 1
    %p147 = scmp.ne.s32.totalorder %s142, %s144
    %p148 = scmp.eq.s32.totalorder %s24, 0
    %p149 = por %p147, %p148
    %p150 = scmp.ne.s32.totalorder %s142, %s144
    %p151 = scmp.eq.s32.totalorder %s29, 1
    %p152 = por %p150, %p151
    %p153 = scmp.ne.s32.totalorder %s144, %s145
    %p154 = scmp.eq.s32.totalorder %s29, 0
    %p155 = por %p153, %p154
    %p156 = scmp.ne.s32.totalorder %s144, %s145
    %p157 = scmp.eq.s32.totalorder %s30, 1
    %p158 = por %p156, %p157
    %p160 = scmp.ne.s32.totalorder %s145, %s159
    %p161 = scmp.eq.s32.totalorder %s30, 0
    %p162 = por %p160, %p161
    %s164 = sadd.s32 %s163, 1
    %p167 = scmp.eq.s32.totalorder %s24, 1
    %p168 = scmp.ne.s32.totalorder %s163, %s165
    %p169 = scmp.eq.s32.totalorder %s24, 0
    %p170 = por %p168, %p169
    %p171 = scmp.ne.s32.totalorder %s163, %s165
    %p172 = scmp.eq.s32.totalorder %s29, 1
    %p173 = por %p171, %p172
    %p174 = scmp.ne.s32.totalorder %s165, %s166
    %p175 = scmp.eq.s32.totalorder %s29, 0
    %p176 = por %p174, %p175
    %p177 = scmp.ne.s32.totalorder %s165, %s166
    %p178 = scmp.eq.s32.totalorder %s30, 1
    %p179 = por %p177, %p178
    %p181 = scmp.ne.s32.totalorder %s166, %s180
    %p182 = scmp.eq.s32.totalorder %s30, 0
    %p183 = por %p181, %p182
    %s185 = sadd.s32 %s184, 1
    %p188 = scmp.eq.s32.totalorder %s24, 1
    %p189 = scmp.ne.s32.totalorder %s184, %s186
    %p190 = scmp.eq.s32.totalorder %s24, 0
    %p191 = por %p189, %p190
    %p192 = scmp.ne.s32.totalorder %s184, %s186
    %p193 = scmp.eq.s32.totalorder %s29, 1
    %p194 = por %p192, %p193
    %p195 = scmp.ne.s32.totalorder %s186, %s187
    %p196 = scmp.eq.s32.totalorder %s29, 0
    %p197 = por %p195, %p196
    %p198 = scmp.ne.s32.totalorder %s186, %s187
    %p199 = scmp.eq.s32.totalorder %s30, 1
    %p200 = por %p198, %p199
    %p202 = scmp.ne.s32.totalorder %s187, %s201
    %p203 = scmp.eq.s32.totalorder %s30, 0
    %p204 = por %p202, %p203
    %s206 = sadd.s32 %s205, 1
    %p209 = scmp.eq.s32.totalorder %s24, 1
    %p210 = scmp.ne.s32.totalorder %s205, %s207
    %p211 = scmp.eq.s32.totalorder %s24, 0
    %p212 = por %p210, %p211
    %p213 = scmp.ne.s32.totalorder %s205, %s207
    %p214 = scmp.eq.s32.totalorder %s29, 1
    %p215 = por %p213, %p214
    %p216 = scmp.ne.s32.totalorder %s207, %s208
    %p217 = scmp.eq.s32.totalorder %s29, 0
    %p218 = por %p216, %p217
    %p219 = scmp.ne.s32.totalorder %s207, %s208
    %p220 = scmp.eq.s32.totalorder %s30, 1
    %p221 = por %p219, %p220
    %p223 = scmp.ne.s32.totalorder %s208, %s222
    %p224 = scmp.eq.s32.totalorder %s30, 0
    %p225 = por %p223, %p224
    %s227 = sadd.s32 %s226, 1
    %p230 = scmp.eq.s32.totalorder %s24, 1
    %p231 = scmp.ne.s32.totalorder %s226, %s228
    %p232 = scmp.eq.s32.totalorder %s24, 0
    %p233 = por %p231, %p232
    %p234 = scmp.ne.s32.totalorder %s226, %s228
    %p235 = scmp.eq.s32.totalorder %s29, 1
    %p236 = por %p234, %p235
    %p237 = scmp.ne.s32.totalorder %s228, %s229
    %p238 = scmp.eq.s32.totalorder %s29, 0
    %p239 = por %p237, %p238
    %p240 = scmp.ne.s32.totalorder %s228, %s229
    %p241 = scmp.eq.s32.totalorder %s30, 1
    %p242 = por %p240, %p241
    %p244 = scmp.ne.s32.totalorder %s229, %s243
    %p245 = scmp.eq.s32.totalorder %s30, 0
    %p246 = por %p244, %p245
    %s248 = sadd.s32 %s247, 1
    %p251 = scmp.eq.s32.totalorder %s24, 1
    %p252 = scmp.ne.s32.totalorder %s247, %s249
    %p253 = scmp.eq.s32.totalorder %s24, 0
    %p254 = por %p252, %p253
    %p255 = scmp.ne.s32.totalorder %s247, %s249
    %p256 = scmp.eq.s32.totalorder %s29, 1
    %p257 = por %p255, %p256
    %p258 = scmp.ne.s32.totalorder %s249, %s250
    %p259 = scmp.eq.s32.totalorder %s29, 0
    %p260 = por %p258, %p259
    %p261 = scmp.ne.s32.totalorder %s249, %s250
    %p262 = scmp.eq.s32.totalorder %s30, 1
    %p263 = por %p261, %p262
    %p265 = scmp.ne.s32.totalorder %s250, %s264
    %p266 = scmp.eq.s32.totalorder %s30, 0
    %p267 = por %p265, %p266
    %s268 = ssub.s32 %s24, %s31
    %p269 = scmp.eq.s32.totalorder %s268, 0
    %s271 = sadd.s32 %s270, 1
    %s272 = scalar_select %p269, %s270, %s271
    %p275 = pneg %p269
    %p276 = scmp.eq.s32.totalorder %s24, 1
    %p277 = por %p275, %p276
    %p278 = scmp.ne.s32.totalorder %s270, %s273
    %p279 = scmp.eq.s32.totalorder %s24, 0
    %p280 = por %p278, %p279
    %p281 = scmp.ne.s32.totalorder %s270, %s273
    %p282 = scmp.eq.s32.totalorder %s29, 1
    %p283 = por %p281, %p282
    %p284 = scmp.ne.s32.totalorder %s273, %s274
    %p285 = scmp.eq.s32.totalorder %s29, 0
    %p286 = por %p284, %p285
    %p287 = scmp.ne.s32.totalorder %s273, %s274
    %p288 = scmp.eq.s32.totalorder %s30, 1
    %p289 = por %p287, %p288
    %p291 = scmp.ne.s32.totalorder %s274, %s290
    %p292 = scmp.eq.s32.totalorder %s30, 0
    %p293 = por %p291, %p292
    %p294 = scmp.le.s32.totalorder 1, %s24
    %p295 = scmp.lt.s32.totalorder %s24, 3
    %p296 = pnand %p294, %p295
    %p297 = pneg %p296
    // Predicated region
    $region9: #{forward.2} parent=5 // pred_check
      _
    $region10: #{forward.2} parent=5 // pred_check_branch
      %299 = sbr.rel (%p296) target = $region12
    $region11: #{forward.2} parent=5 // pred_region
      %s300 = ssub.s32 %s24, 1
      // Predicated region
      $region13: #{forward.2} parent=11 // pred_check
        %p301 = pneg %p71
      $region14: #{forward.2} parent=11 // pred_check_branch
        %303 = sbr.rel (%p301) target = $region16
      $region15: #{forward.2} parent=11 // pred_region
        _
      $region16: #{forward.2} parent=11 // pred_fallthru
        _
      // Predicated region
      $region17: #{forward.2} parent=11 // pred_check
        %p304 = pneg %p92
      $region18: #{forward.2} parent=11 // pred_check_branch
        %306 = sbr.rel (%p304) target = $region20
      $region19: #{forward.2} parent=11 // pred_region
        _
      $region20: #{forward.2} parent=11 // pred_fallthru
        _
      // Predicated region
      $region21: #{forward.2} parent=11 // pred_check
        %p307 = pneg %p113
      $region22: #{forward.2} parent=11 // pred_check_branch
        %309 = sbr.rel (%p307) target = $region24
      $region23: #{forward.2} parent=11 // pred_region
        _
      $region24: #{forward.2} parent=11 // pred_fallthru
        _
      // Predicated region
      $region25: #{forward.2} parent=11 // pred_check
        %p310 = pneg %p134
      $region26: #{forward.2} parent=11 // pred_check_branch
        %312 = sbr.rel (%p310) target = $region28
      $region27: #{forward.2} parent=11 // pred_region
        _
      $region28: #{forward.2} parent=11 // pred_fallthru
        _
      // Predicated region
      $region29: #{forward.2} parent=11 // pred_check
        %p313 = pneg %p155
      $region30: #{forward.2} parent=11 // pred_check_branch
        %315 = sbr.rel (%p313) target = $region32
      $region31: #{forward.2} parent=11 // pred_region
        _
      $region32: #{forward.2} parent=11 // pred_fallthru
        _
      // Predicated region
      $region33: #{forward.2} parent=11 // pred_check
        %p316 = pneg %p176
      $region34: #{forward.2} parent=11 // pred_check_branch
        %318 = sbr.rel (%p316) target = $region36
      $region35: #{forward.2} parent=11 // pred_region
        _
      $region36: #{forward.2} parent=11 // pred_fallthru
        _
      // Predicated region
      $region37: #{forward.2} parent=11 // pred_check
        %p319 = pneg %p197
      $region38: #{forward.2} parent=11 // pred_check_branch
        %321 = sbr.rel (%p319) target = $region40
      $region39: #{forward.2} parent=11 // pred_region
        _
      $region40: #{forward.2} parent=11 // pred_fallthru
        _
      // Predicated region
      $region41: #{forward.2} parent=11 // pred_check
        %p322 = pneg %p218
      $region42: #{forward.2} parent=11 // pred_check_branch
        %324 = sbr.rel (%p322) target = $region44
      $region43: #{forward.2} parent=11 // pred_region
        _
      $region44: #{forward.2} parent=11 // pred_fallthru
        _
      // Predicated region
      $region45: #{forward.2} parent=11 // pred_check
        %p325 = pneg %p239
      $region46: #{forward.2} parent=11 // pred_check_branch
        %327 = sbr.rel (%p325) target = $region48
      $region47: #{forward.2} parent=11 // pred_region
        _
      $region48: #{forward.2} parent=11 // pred_fallthru
        _
      // Predicated region
      $region49: #{forward.2} parent=11 // pred_check
        %p328 = pneg %p260
      $region50: #{forward.2} parent=11 // pred_check_branch
        %330 = sbr.rel (%p328) target = $region52
      $region51: #{forward.2} parent=11 // pred_region
        _
      $region52: #{forward.2} parent=11 // pred_fallthru
        _
    $region12: #{forward.2} parent=5 // pred_fallthru
      _
    %p331 = scmp.lt.s32.totalorder %s24, 2
    // Predicated region
    $region53: #{forward.2} parent=5 // pred_check
      %p332 = pneg %p331
    $region54: #{forward.2} parent=5 // pred_check_branch
      %334 = sbr.rel (%p332) target = $region56
    $region55: #{forward.2} parent=5 // pred_region
      // Predicated region
      $region57: #{forward.2} parent=55 // pred_check
        %p335 = pneg %p44
      $region58: #{forward.2} parent=55 // pred_check_branch
        %337 = sbr.rel (%p335) target = $region60
      $region59: #{forward.2} parent=55 // pred_region
        %s338 = smul.u32 8, %s24
        %p339 = scmp.lt.s32.totalorder %s338, 15
        %s340 = scalar_select %p339, %s338, 15
        %s341 = smul.addr %s340, 4
        %s342 = smul.addr %s341, 8
        %s343 = scalar_lea.vmem %s1, %s342
        %s344 = smul.u32 8, %s24
      $region60: #{forward.2} parent=55 // pred_fallthru
        _
    $region56: #{forward.2} parent=5 // pred_fallthru
      _
    %p345 = scmp.le.s32.totalorder 1, %s24
    %p346 = scmp.lt.s32.totalorder %s24, 3
    %p347 = pnand %p345, %p346
    %p348 = pneg %p347
    // Predicated region
    $region61: #{forward.2} parent=5 // pred_check
      _
    $region62: #{forward.2} parent=5 // pred_check_branch
      %350 = sbr.rel (%p347) target = $region64
    $region63: #{forward.2} parent=5 // pred_region
      %s351 = ssub.s32 %s24, 1
      %s352 = smul.u32 8, %s29
      %p353 = scmp.lt.s32.totalorder %s352, 15
      %s354 = scalar_select %p353, %s352, 15
      %s355 = smul.addr %s354, 4
      %s356 = smul.addr %s355, 8
      %s357 = scalar_lea.vmem %s1, %s356
      %p358 = pneg %p50
      %p359 = pneg %p47
      %p360 = pneg %p71
      %p361 = pneg %p68
      %p362 = pneg %p92
      %p363 = pneg %p89
      %p364 = pneg %p113
      %p365 = pneg %p110
      %p366 = pneg %p134
      %p367 = pneg %p131
      %p368 = pneg %p155
      %p369 = pneg %p152
      %p370 = pneg %p176
      %p371 = pneg %p173
      %p372 = pneg %p197
      %p373 = pneg %p194
      %p374 = pneg %p218
      %p375 = pneg %p215
      %p376 = pneg %p239
      %p377 = pneg %p236
      %p378 = pneg %p260
      %p379 = pneg %p257
      %p380 = pneg %p286
      %p381 = pneg %p283
      %s382 = smul.u32 8, %s29
      %p383 = scmp.lt.s32.totalorder %s382, 15
      %s384 = scalar_select %p383, %s382, 15
      %s385 = smul.addr %s384, 4
      %s386 = smul.addr %s385, 8
      %s387 = scalar_lea.vmem %s12, %s386
      %s388 = smul.u32 8, %s29
      %p389 = scmp.lt.s32.totalorder %s388, 15
      %s390 = scalar_select %p389, %s388, 15
      %s391 = smul.addr %s390, 4
      %s392 = smul.addr %s391, 8
      %s393 = scalar_lea.vmem %s1, %s392
      %s394 = smul.u32 8, %s29
      %s395 = smul.u32 8, %s29
      %p396 = scmp.lt.s32.totalorder %s395, 15
      %s397 = scalar_select %p396, %s395, 15
      %s398 = smul.addr %s397, 4
      %s399 = smul.addr %s398, 8
      %s400 = scalar_lea.vmem %s12, %s399
      %s401 = smul.u32 8, %s29
      %v402 = vld [vmem:[%s393] sm:$0xff]
      %v403 = vld [vmem:[%s393 + $0x8] sm:$0xff]
      %v404 = vld [vmem:[%s393 + $0x10] sm:$0xff]
      %v405 = vld [vmem:[%s393 + $0x18] sm:$0xff]
      %v406 = vld [vmem:[%s393 + $0x20] sm:$0xff]
      %v407 = vld [vmem:[%s393 + $0x28] sm:$0xff]
      %v408 = vld [vmem:[%s393 + $0x30] sm:$0xff]
      %v409 = vld [vmem:[%s393 + $0x38] sm:$0xff]
      %v410 = vld [vmem:[%s393 + $0x40] sm:$0xff]
      %v411 = vld [vmem:[%s393 + $0x48] sm:$0xff]
      %v412 = vld [vmem:[%s393 + $0x50] sm:$0xff]
      %v413 = vld [vmem:[%s393 + $0x58] sm:$0xff]
      %v414 = vld [vmem:[%s393 + $0x60] sm:$0xff]
      %v415 = vld [vmem:[%s393 + $0x68] sm:$0xff]
      %v416 = vld [vmem:[%s393 + $0x70] sm:$0xff]
      %v417 = vld [vmem:[%s393 + $0x78] sm:$0xff]
      %v418 = vld [vmem:[%s393 + $0x80] sm:$0xff]
      %v419 = vld [vmem:[%s393 + $0x88] sm:$0xff]
      %v420 = vld [vmem:[%s393 + $0x90] sm:$0xff]
      %v421 = vld [vmem:[%s393 + $0x98] sm:$0xff]
      %v422 = vld [vmem:[%s393 + $0xa0] sm:$0xff]
      %v423 = vld [vmem:[%s393 + $0xa8] sm:$0xff]
      %v424 = vld [vmem:[%s393 + $0xb0] sm:$0xff]
      %v425 = vld [vmem:[%s393 + $0xb8] sm:$0xff]
      %v426 = vld [vmem:[%s393 + $0xc0] sm:$0xff]
      %v427 = vld [vmem:[%s393 + $0xc8] sm:$0xff]
      %v428 = vld [vmem:[%s393 + $0xd0] sm:$0xff]
      %v429 = vld [vmem:[%s393 + $0xd8] sm:$0xff]
      %v430 = vld [vmem:[%s393 + $0xe0] sm:$0xff]
      %v431 = vld [vmem:[%s393 + $0xe8] sm:$0xff]
      %v432 = vld [vmem:[%s393 + $0xf0] sm:$0xff]
      %v433 = vld [vmem:[%s393 + $0xf8] sm:$0xff]
      %v434 = vld [vmem:[%s10] sm:$0xf]
      %v435 = vld [vmem:[%s11] sm:$0xf]
      %v436 = vadd.f32 %v402, %v403
      %v437 = vadd.f32 %v436, %v404
      %vm438 = vcmask 130048
      %v439 = vsel %vm438, %v405, 0.0
      %v440 = vadd.f32 %v437, %v439
      %441 = vadd.xlane.f32.xlu0 %v440
      %v442 = vpop.xlane.xlu0 %441
      %v443 = vadd.f32 %v406, %v407
      %v444 = vadd.f32 %v443, %v408
      %v445 = vsel %vm438, %v409, 0.0
      %v446 = vadd.f32 %v444, %v445
      %447 = vadd.xlane.f32.xlu0 %v446
      %v448 = vpop.xlane.xlu0 %447
      %v449 = vadd.f32 %v410, %v411
      %v450 = vadd.f32 %v449, %v412
      %v451 = vsel %vm438, %v413, 0.0
      %v452 = vadd.f32 %v450, %v451
      %453 = vadd.xlane.f32.xlu0 %v452
      %v454 = vpop.xlane.xlu0 %453
      %v455 = vadd.f32 %v414, %v415
      %v456 = vadd.f32 %v455, %v416
      %v457 = vsel %vm438, %v417, 0.0
      %v458 = vadd.f32 %v456, %v457
      %459 = vadd.xlane.f32.xlu0 %v458
      %v460 = vpop.xlane.xlu0 %459
      %v461 = vadd.f32 %v418, %v419
      %v462 = vadd.f32 %v461, %v420
      %v463 = vsel %vm438, %v421, 0.0
      %v464 = vadd.f32 %v462, %v463
      %465 = vadd.xlane.f32.xlu0 %v464
      %v466 = vpop.xlane.xlu0 %465
      %v467 = vadd.f32 %v422, %v423
      %v468 = vadd.f32 %v467, %v424
      %v469 = vsel %vm438, %v425, 0.0
      %v470 = vadd.f32 %v468, %v469
      %471 = vadd.xlane.f32.xlu0 %v470
      %v472 = vpop.xlane.xlu0 %471
      %v473 = vadd.f32 %v426, %v427
      %v474 = vadd.f32 %v473, %v428
      %v475 = vsel %vm438, %v429, 0.0
      %v476 = vadd.f32 %v474, %v475
      %477 = vadd.xlane.f32.xlu0 %v476
      %v478 = vpop.xlane.xlu0 %477
      %v479 = vadd.f32 %v430, %v431
      %v480 = vadd.f32 %v479, %v432
      %v481 = vsel %vm438, %v433, 0.0
      %v482 = vadd.f32 %v480, %v481
      %483 = vadd.xlane.f32.xlu0 %v482
      %v484 = vpop.xlane.xlu0 %483
      %v485 = vrcp.pop 400.0
      %v486 = vmul.f32 %v442, %v485
      %v487 = vmul.f32 %v448, %v485
      %v488 = vmul.f32 %v454, %v485
      %v489 = vmul.f32 %v460, %v485
      %v490 = vmul.f32 %v466, %v485
      %v491 = vmul.f32 %v472, %v485
      %v492 = vmul.f32 %v478, %v485
      %v493 = vmul.f32 %v484, %v485
      %v494 = vsub.f32 %v402, %v486
      %v495 = vsub.f32 %v403, %v486
      %v496 = vsub.f32 %v404, %v486
      %v497 = vsub.f32 %v405, %v486
      %v498 = vsub.f32 %v406, %v487
      %v499 = vsub.f32 %v407, %v487
      %v500 = vsub.f32 %v408, %v487
      %v501 = vsub.f32 %v409, %v487
      %v502 = vsub.f32 %v410, %v488
      %v503 = vsub.f32 %v411, %v488
      %v504 = vsub.f32 %v412, %v488
      %v505 = vsub.f32 %v413, %v488
      %v506 = vsub.f32 %v414, %v489
      %v507 = vsub.f32 %v415, %v489
      %v508 = vsub.f32 %v416, %v489
      %v509 = vsub.f32 %v417, %v489
      %v510 = vsub.f32 %v418, %v490
      %v511 = vsub.f32 %v419, %v490
      %v512 = vsub.f32 %v420, %v490
      %v513 = vsub.f32 %v421, %v490
      %v514 = vsub.f32 %v422, %v491
      %v515 = vsub.f32 %v423, %v491
      %v516 = vsub.f32 %v424, %v491
      %v517 = vsub.f32 %v425, %v491
      %v518 = vsub.f32 %v426, %v492
      %v519 = vsub.f32 %v427, %v492
      %v520 = vsub.f32 %v428, %v492
      %v521 = vsub.f32 %v429, %v492
      %v522 = vsub.f32 %v430, %v493
      %v523 = vsub.f32 %v431, %v493
      %v524 = vsub.f32 %v432, %v493
      %v525 = vsub.f32 %v433, %v493
      %v526 = vmul.f32 %v494, %v494
      %v527 = vmul.f32 %v495, %v495
      %v528 = vmul.f32 %v496, %v496
      %v529 = vmul.f32 %v497, %v497
      %v530 = vmul.f32 %v498, %v498
      %v531 = vmul.f32 %v499, %v499
      %v532 = vmul.f32 %v500, %v500
      %v533 = vmul.f32 %v501, %v501
      %v534 = vmul.f32 %v502, %v502
      %v535 = vmul.f32 %v503, %v503
      %v536 = vmul.f32 %v504, %v504
      %v537 = vmul.f32 %v505, %v505
      %v538 = vmul.f32 %v506, %v506
      %v539 = vmul.f32 %v507, %v507
      %v540 = vmul.f32 %v508, %v508
      %v541 = vmul.f32 %v509, %v509
      %v542 = vmul.f32 %v510, %v510
      %v543 = vmul.f32 %v511, %v511
      %v544 = vmul.f32 %v512, %v512
      %v545 = vmul.f32 %v513, %v513
      %v546 = vmul.f32 %v514, %v514
      %v547 = vmul.f32 %v515, %v515
      %v548 = vmul.f32 %v516, %v516
      %v549 = vmul.f32 %v517, %v517
      %v550 = vmul.f32 %v518, %v518
      %v551 = vmul.f32 %v519, %v519
      %v552 = vmul.f32 %v520, %v520
      %v553 = vmul.f32 %v521, %v521
      %v554 = vmul.f32 %v522, %v522
      %v555 = vmul.f32 %v523, %v523
      %v556 = vmul.f32 %v524, %v524
      %v557 = vmul.f32 %v525, %v525
      %v558 = vadd.f32 %v526, %v527
      %v559 = vadd.f32 %v558, %v528
      %v560 = vsel %vm438, %v529, 0.0
      %v561 = vadd.f32 %v559, %v560
      %562 = vadd.xlane.f32.xlu0 %v561
      %v563 = vpop.xlane.xlu0 %562
      %v564 = vadd.f32 %v530, %v531
      %v565 = vadd.f32 %v564, %v532
      %v566 = vsel %vm438, %v533, 0.0
      %v567 = vadd.f32 %v565, %v566
      %568 = vadd.xlane.f32.xlu0 %v567
      %v569 = vpop.xlane.xlu0 %568
      %v570 = vadd.f32 %v534, %v535
      %v571 = vadd.f32 %v570, %v536
      %v572 = vsel %vm438, %v537, 0.0
      %v573 = vadd.f32 %v571, %v572
      %574 = vadd.xlane.f32.xlu0 %v573
      %v575 = vpop.xlane.xlu0 %574
      %v576 = vadd.f32 %v538, %v539
      %v577 = vadd.f32 %v576, %v540
      %v578 = vsel %vm438, %v541, 0.0
      %v579 = vadd.f32 %v577, %v578
      %580 = vadd.xlane.f32.xlu0 %v579
      %v581 = vpop.xlane.xlu0 %580
      %v582 = vadd.f32 %v542, %v543
      %v583 = vadd.f32 %v582, %v544
      %v584 = vsel %vm438, %v545, 0.0
      %v585 = vadd.f32 %v583, %v584
      %586 = vadd.xlane.f32.xlu0 %v585
      %v587 = vpop.xlane.xlu0 %586
      %v588 = vadd.f32 %v546, %v547
      %v589 = vadd.f32 %v588, %v548
      %v590 = vsel %vm438, %v549, 0.0
      %v591 = vadd.f32 %v589, %v590
      %592 = vadd.xlane.f32.xlu0 %v591
      %v593 = vpop.xlane.xlu0 %592
      %v594 = vadd.f32 %v550, %v551
      %v595 = vadd.f32 %v594, %v552
      %v596 = vsel %vm438, %v553, 0.0
      %v597 = vadd.f32 %v595, %v596
      %598 = vadd.xlane.f32.xlu0 %v597
      %v599 = vpop.xlane.xlu0 %598
      %v600 = vadd.f32 %v554, %v555
      %v601 = vadd.f32 %v600, %v556
      %v602 = vsel %vm438, %v557, 0.0
      %v603 = vadd.f32 %v601, %v602
      %604 = vadd.xlane.f32.xlu0 %v603
      %v605 = vpop.xlane.xlu0 %604
      %v606 = vmul.f32 %v563, 0.0025062656
      %v607 = vmul.f32 %v569, 0.0025062656
      %v608 = vmul.f32 %v575, 0.0025062656
      %v609 = vmul.f32 %v581, 0.0025062656
      %v610 = vmul.f32 %v587, 0.0025062656
      %v611 = vmul.f32 %v593, 0.0025062656
      %v612 = vmul.f32 %v599, 0.0025062656
      %v613 = vmul.f32 %v605, 0.0025062656
      %v614 = vrsqrt.pop %v606
      %v615 = vmul.f32 %v606, %v614
      %vm616 = vcmp.eq.f32.partialorder %v606, inf
      %v617 = vsel %vm616, %v606, %v615
      %vm618 = vcmp.eq.f32.partialorder %v606, 0.0
      %v619 = vand.u32 %v606, 2147483648
      %v620 = vsel %vm618, %v619, %v617
      %v621 = vrsqrt.pop %v607
      %v622 = vmul.f32 %v607, %v621
      %vm623 = vcmp.eq.f32.partialorder %v607, inf
      %v624 = vsel %vm623, %v607, %v622
      %vm625 = vcmp.eq.f32.partialorder %v607, 0.0
      %v626 = vand.u32 %v607, 2147483648
      %v627 = vsel %vm625, %v626, %v624
      %v628 = vrsqrt.pop %v608
      %v629 = vmul.f32 %v608, %v628
      %vm630 = vcmp.eq.f32.partialorder %v608, inf
      %v631 = vsel %vm630, %v608, %v629
      %vm632 = vcmp.eq.f32.partialorder %v608, 0.0
      %v633 = vand.u32 %v608, 2147483648
      %v634 = vsel %vm632, %v633, %v631
      %v635 = vrsqrt.pop %v609
      %v636 = vmul.f32 %v609, %v635
      %vm637 = vcmp.eq.f32.partialorder %v609, inf
      %v638 = vsel %vm637, %v609, %v636
      %vm639 = vcmp.eq.f32.partialorder %v609, 0.0
      %v640 = vand.u32 %v609, 2147483648
      %v641 = vsel %vm639, %v640, %v638
      %v642 = vrsqrt.pop %v610
      %v643 = vmul.f32 %v610, %v642
      %vm644 = vcmp.eq.f32.partialorder %v610, inf
      %v645 = vsel %vm644, %v610, %v643
      %vm646 = vcmp.eq.f32.partialorder %v610, 0.0
      %v647 = vand.u32 %v610, 2147483648
      %v648 = vsel %vm646, %v647, %v645
      %v649 = vrsqrt.pop %v611
      %v650 = vmul.f32 %v611, %v649
      %vm651 = vcmp.eq.f32.partialorder %v611, inf
      %v652 = vsel %vm651, %v611, %v650
      %vm653 = vcmp.eq.f32.partialorder %v611, 0.0
      %v654 = vand.u32 %v611, 2147483648
      %v655 = vsel %vm653, %v654, %v652
      %v656 = vrsqrt.pop %v612
      %v657 = vmul.f32 %v612, %v656
      %vm658 = vcmp.eq.f32.partialorder %v612, inf
      %v659 = vsel %vm658, %v612, %v657
      %vm660 = vcmp.eq.f32.partialorder %v612, 0.0
      %v661 = vand.u32 %v612, 2147483648
      %v662 = vsel %vm660, %v661, %v659
      %v663 = vrsqrt.pop %v613
      %v664 = vmul.f32 %v613, %v663
      %vm665 = vcmp.eq.f32.partialorder %v613, inf
      %v666 = vsel %vm665, %v613, %v664
      %vm667 = vcmp.eq.f32.partialorder %v613, 0.0
      %v668 = vand.u32 %v613, 2147483648
      %v669 = vsel %vm667, %v668, %v666
      %v671 = vlaneseq
      %v672 = vshrl.u32 %v671, 7
      %v673 = vsub.s32 0, %v672
      %v674 = vrot.slane %v434, %v673
      %v675 = vlaneseq
      %v676 = vshrl.u32 %v675, 7
      %v677 = vsub.s32 1, %v676
      %v678 = vrot.slane %v434, %v677
      %v679 = vlaneseq
      %v680 = vshrl.u32 %v679, 7
      %v681 = vsub.s32 2, %v680
      %v682 = vrot.slane %v434, %v681
      %v683 = vlaneseq
      %v684 = vshrl.u32 %v683, 7
      %v685 = vsub.s32 3, %v684
      %v686 = vrot.slane %v434, %v685
      %v691 = vmul.f32 %v674, %v494
      %v692 = vmul.f32 %v678, %v495
      %v693 = vmul.f32 %v682, %v496
      %v694 = vmul.f32 %v686, %v497
      %v695 = vmul.f32 %v674, %v498
      %v696 = vmul.f32 %v678, %v499
      %v697 = vmul.f32 %v682, %v500
      %v698 = vmul.f32 %v686, %v501
      %v699 = vmul.f32 %v674, %v502
      %v700 = vmul.f32 %v678, %v503
      %v701 = vmul.f32 %v682, %v504
      %v702 = vmul.f32 %v686, %v505
      %v703 = vmul.f32 %v674, %v506
      %v704 = vmul.f32 %v678, %v507
      %v705 = vmul.f32 %v682, %v508
      %v706 = vmul.f32 %v686, %v509
      %v707 = vmul.f32 %v674, %v510
      %v708 = vmul.f32 %v678, %v511
      %v709 = vmul.f32 %v682, %v512
      %v710 = vmul.f32 %v686, %v513
      %v711 = vmul.f32 %v674, %v514
      %v712 = vmul.f32 %v678, %v515
      %v713 = vmul.f32 %v682, %v516
      %v714 = vmul.f32 %v686, %v517
      %v715 = vmul.f32 %v674, %v518
      %v716 = vmul.f32 %v678, %v519
      %v717 = vmul.f32 %v682, %v520
      %v718 = vmul.f32 %v686, %v521
      %v719 = vmul.f32 %v674, %v522
      %v720 = vmul.f32 %v678, %v523
      %v721 = vmul.f32 %v682, %v524
      %v722 = vmul.f32 %v686, %v525
      %v723 = vadd.f32 %v620, 1e-06
      %v724 = vadd.f32 %v627, 1e-06
      %v725 = vadd.f32 %v634, 1e-06
      %v726 = vadd.f32 %v641, 1e-06
      %v727 = vadd.f32 %v648, 1e-06
      %v728 = vadd.f32 %v655, 1e-06
      %v729 = vadd.f32 %v662, 1e-06
      %v730 = vadd.f32 %v669, 1e-06
      %v731 = vrcp.pop %v723
      %v732 = vrcp.pop %v724
      %v733 = vrcp.pop %v725
      %v734 = vrcp.pop %v726
      %v735 = vrcp.pop %v727
      %v736 = vrcp.pop %v728
      %v737 = vrcp.pop %v729
      %v738 = vrcp.pop %v730
      %v739 = vmul.f32 %v691, %v731
      %v740 = vmul.f32 %v692, %v731
      %v741 = vmul.f32 %v693, %v731
      %v742 = vmul.f32 %v694, %v731
      %v743 = vmul.f32 %v695, %v732
      %v744 = vmul.f32 %v696, %v732
      %v745 = vmul.f32 %v697, %v732
      %v746 = vmul.f32 %v698, %v732
      %v747 = vmul.f32 %v699, %v733
      %v748 = vmul.f32 %v700, %v733
      %v749 = vmul.f32 %v701, %v733
      %v750 = vmul.f32 %v702, %v733
      %v751 = vmul.f32 %v703, %v734
      %v752 = vmul.f32 %v704, %v734
      %v753 = vmul.f32 %v705, %v734
      %v754 = vmul.f32 %v706, %v734
      %v755 = vmul.f32 %v707, %v735
      %v756 = vmul.f32 %v708, %v735
      %v757 = vmul.f32 %v709, %v735
      %v758 = vmul.f32 %v710, %v735
      %v759 = vmul.f32 %v711, %v736
      %v760 = vmul.f32 %v712, %v736
      %v761 = vmul.f32 %v713, %v736
      %v762 = vmul.f32 %v714, %v736
      %v763 = vmul.f32 %v715, %v737
      %v764 = vmul.f32 %v716, %v737
      %v765 = vmul.f32 %v717, %v737
      %v766 = vmul.f32 %v718, %v737
      %v767 = vmul.f32 %v719, %v738
      %v768 = vmul.f32 %v720, %v738
      %v769 = vmul.f32 %v721, %v738
      %v770 = vmul.f32 %v722, %v738
      %v772 = vlaneseq
      %v773 = vshrl.u32 %v772, 7
      %v774 = vsub.s32 0, %v773
      %v775 = vrot.slane %v435, %v774
      %v776 = vlaneseq
      %v777 = vshrl.u32 %v776, 7
      %v778 = vsub.s32 1, %v777
      %v779 = vrot.slane %v435, %v778
      %v780 = vlaneseq
      %v781 = vshrl.u32 %v780, 7
      %v782 = vsub.s32 2, %v781
      %v783 = vrot.slane %v435, %v782
      %v784 = vlaneseq
      %v785 = vshrl.u32 %v784, 7
      %v786 = vsub.s32 3, %v785
      %v787 = vrot.slane %v435, %v786
      %v792 = vadd.f32 %v739, %v775
      %v793 = vadd.f32 %v740, %v779
      %v794 = vadd.f32 %v741, %v783
      %v795 = vadd.f32 %v742, %v787
      %v796 = vadd.f32 %v743, %v775
      %v797 = vadd.f32 %v744, %v779
      %v798 = vadd.f32 %v745, %v783
      %v799 = vadd.f32 %v746, %v787
      %v800 = vadd.f32 %v747, %v775
      %v801 = vadd.f32 %v748, %v779
      %v802 = vadd.f32 %v749, %v783
      %v803 = vadd.f32 %v750, %v787
      %v804 = vadd.f32 %v751, %v775
      %v805 = vadd.f32 %v752, %v779
      %v806 = vadd.f32 %v753, %v783
      %v807 = vadd.f32 %v754, %v787
      %v808 = vadd.f32 %v755, %v775
      %v809 = vadd.f32 %v756, %v779
      %v810 = vadd.f32 %v757, %v783
      %v811 = vadd.f32 %v758, %v787
      %v812 = vadd.f32 %v759, %v775
      %v813 = vadd.f32 %v760, %v779
      %v814 = vadd.f32 %v761, %v783
      %v815 = vadd.f32 %v762, %v787
      %v816 = vadd.f32 %v763, %v775
      %v817 = vadd.f32 %v764, %v779
      %v818 = vadd.f32 %v765, %v783
      %v819 = vadd.f32 %v766, %v787
      %v820 = vadd.f32 %v767, %v775
      %v821 = vadd.f32 %v768, %v779
      %v822 = vadd.f32 %v769, %v783
      %v823 = vadd.f32 %v770, %v787
      %v824 = vld [vmem:[%s2] sm:$0xff]
      %v825 = vld [vmem:[%s2 + $0x8] sm:$0xff]
      %v826 = vld [vmem:[%s2 + $0x10] sm:$0xff]
      %v827 = vld [vmem:[%s2 + $0x18] sm:$0xff]
      %v828 = vld [vmem:[%s2 + $0x20] sm:$0xff]
      %v829 = vld [vmem:[%s2 + $0x28] sm:$0xff]
      %v830 = vld [vmem:[%s2 + $0x30] sm:$0xff]
      %v831 = vld [vmem:[%s2 + $0x38] sm:$0xff]
      %v832 = vld [vmem:[%s2 + $0x40] sm:$0xff]
      %v833 = vld [vmem:[%s2 + $0x48] sm:$0xff]
      %v834 = vld [vmem:[%s2 + $0x50] sm:$0xff]
      %v835 = vld [vmem:[%s2 + $0x58] sm:$0xff]
      %v836 = vld [vmem:[%s2 + $0x60] sm:$0xff]
      %v837 = vld [vmem:[%s2 + $0x68] sm:$0xff]
      %v838 = vld [vmem:[%s2 + $0x70] sm:$0xff]
      %v839 = vld [vmem:[%s2 + $0x78] sm:$0xff]
      %v840 = vld [vmem:[%s2 + $0x80] sm:$0xff]
      %v841 = vld [vmem:[%s2 + $0x88] sm:$0xff]
      %v842 = vld [vmem:[%s2 + $0x90] sm:$0xff]
      %v843 = vld [vmem:[%s2 + $0x98] sm:$0xff]
      %v844 = vld [vmem:[%s2 + $0xa0] sm:$0xff]
      %v845 = vld [vmem:[%s2 + $0xa8] sm:$0xff]
      %v846 = vld [vmem:[%s2 + $0xb0] sm:$0xff]
      %v847 = vld [vmem:[%s2 + $0xb8] sm:$0xff]
      %v848 = vld [vmem:[%s2 + $0xc0] sm:$0xff]
      %v849 = vld [vmem:[%s2 + $0xc8] sm:$0xff]
      %v850 = vld [vmem:[%s2 + $0xd0] sm:$0xff]
      %v851 = vld [vmem:[%s2 + $0xd8] sm:$0xff]
      %v852 = vld [vmem:[%s2 + $0xe0] sm:$0xff]
      %v853 = vld [vmem:[%s2 + $0xe8] sm:$0xff]
      %v854 = vld [vmem:[%s2 + $0xf0] sm:$0xff]
      %v855 = vld [vmem:[%s2 + $0xf8] sm:$0xff]
      %v856 = vld [vmem:[%s2 + $0x100] sm:$0xff]
      %v857 = vld [vmem:[%s2 + $0x108] sm:$0xff]
      %v858 = vld [vmem:[%s2 + $0x110] sm:$0xff]
      %v859 = vld [vmem:[%s2 + $0x118] sm:$0xff]
      %v860 = vld [vmem:[%s2 + $0x120] sm:$0xff]
      %v861 = vld [vmem:[%s2 + $0x128] sm:$0xff]
      %v862 = vld [vmem:[%s2 + $0x130] sm:$0xff]
      %v863 = vld [vmem:[%s2 + $0x138] sm:$0xff]
      %v864 = vld [vmem:[%s2 + $0x140] sm:$0xff]
      %v865 = vld [vmem:[%s2 + $0x148] sm:$0xff]
      %v866 = vld [vmem:[%s2 + $0x150] sm:$0xff]
      %v867 = vld [vmem:[%s2 + $0x158] sm:$0xff]
      %v868 = vld [vmem:[%s2 + $0x160] sm:$0xff]
      %v869 = vld [vmem:[%s2 + $0x168] sm:$0xff]
      %v870 = vld [vmem:[%s2 + $0x170] sm:$0xff]
      %v871 = vld [vmem:[%s2 + $0x178] sm:$0xff]
      %v872 = vld [vmem:[%s2 + $0x180] sm:$0xff]
      %v873 = vld [vmem:[%s2 + $0x188] sm:$0xff]
      %v874 = vld [vmem:[%s2 + $0x190] sm:$0xff]
      %v875 = vld [vmem:[%s2 + $0x198] sm:$0xff]
      %v876 = vld [vmem:[%s2 + $0x1a0] sm:$0xff]
      %v877 = vld [vmem:[%s2 + $0x1a8] sm:$0xff]
      %v878 = vld [vmem:[%s2 + $0x1b0] sm:$0xff]
      %v879 = vld [vmem:[%s2 + $0x1b8] sm:$0xff]
      %v880 = vld [vmem:[%s2 + $0x1c0] sm:$0xff]
      %v881 = vld [vmem:[%s2 + $0x1c8] sm:$0xff]
      %v882 = vld [vmem:[%s2 + $0x1d0] sm:$0xff]
      %v883 = vld [vmem:[%s2 + $0x1d8] sm:$0xff]
      %v884 = vld [vmem:[%s2 + $0x1e0] sm:$0xff]
      %v885 = vld [vmem:[%s2 + $0x1e8] sm:$0xff]
      %v886 = vld [vmem:[%s2 + $0x1f0] sm:$0xff]
      %v887 = vld [vmem:[%s2 + $0x1f8] sm:$0xff]
      %v888 = vld [vmem:[%s2 + $0x200] sm:$0xff]
      %v889 = vld [vmem:[%s2 + $0x208] sm:$0xff]
      %v890 = vld [vmem:[%s2 + $0x210] sm:$0xff]
      %v891 = vld [vmem:[%s2 + $0x218] sm:$0xff]
      %v892 = vld [vmem:[%s2 + $0x220] sm:$0xff]
      %v893 = vld [vmem:[%s2 + $0x228] sm:$0xff]
      %v894 = vld [vmem:[%s2 + $0x230] sm:$0xff]
      %v895 = vld [vmem:[%s2 + $0x238] sm:$0xff]
      %v896 = vld [vmem:[%s2 + $0x240] sm:$0xff]
      %v897 = vld [vmem:[%s2 + $0x248] sm:$0xff]
      %v898 = vld [vmem:[%s2 + $0x250] sm:$0xff]
      %v899 = vld [vmem:[%s2 + $0x258] sm:$0xff]
      %v900 = vld [vmem:[%s2 + $0x260] sm:$0xff]
      %v901 = vld [vmem:[%s2 + $0x268] sm:$0xff]
      %v902 = vld [vmem:[%s2 + $0x270] sm:$0xff]
      %v903 = vld [vmem:[%s2 + $0x278] sm:$0xff]
      %v904 = vld [vmem:[%s2 + $0x280] sm:$0xff]
      %v905 = vld [vmem:[%s2 + $0x288] sm:$0xff]
      %v906 = vld [vmem:[%s2 + $0x290] sm:$0xff]
      %v907 = vld [vmem:[%s2 + $0x298] sm:$0xff]
      %v908 = vld [vmem:[%s2 + $0x2a0] sm:$0xff]
      %v909 = vld [vmem:[%s2 + $0x2a8] sm:$0xff]
      %v910 = vld [vmem:[%s2 + $0x2b0] sm:$0xff]
      %v911 = vld [vmem:[%s2 + $0x2b8] sm:$0xff]
      %v912 = vld [vmem:[%s2 + $0x2c0] sm:$0xff]
      %v913 = vld [vmem:[%s2 + $0x2c8] sm:$0xff]
      %v914 = vld [vmem:[%s2 + $0x2d0] sm:$0xff]
      %v915 = vld [vmem:[%s2 + $0x2d8] sm:$0xff]
      %v916 = vld [vmem:[%s2 + $0x2e0] sm:$0xff]
      %v917 = vld [vmem:[%s2 + $0x2e8] sm:$0xff]
      %v918 = vld [vmem:[%s2 + $0x2f0] sm:$0xff]
      %v919 = vld [vmem:[%s2 + $0x2f8] sm:$0xff]
      %v920 = vld [vmem:[%s2 + $0x300] sm:$0xff]
      %v921 = vld [vmem:[%s2 + $0x308] sm:$0xff]
      %v922 = vld [vmem:[%s2 + $0x310] sm:$0xff]
      %v923 = vld [vmem:[%s2 + $0x318] sm:$0xff]
      %v924 = vld [vmem:[%s2 + $0x320] sm:$0xff]
      %v925 = vld [vmem:[%s2 + $0x328] sm:$0xff]
      %v926 = vld [vmem:[%s2 + $0x330] sm:$0xff]
      %v927 = vld [vmem:[%s2 + $0x338] sm:$0xff]
      %v928 = vld [vmem:[%s2 + $0x340] sm:$0xff]
      %v929 = vld [vmem:[%s2 + $0x348] sm:$0xff]
      %v930 = vld [vmem:[%s2 + $0x350] sm:$0xff]
      %v931 = vld [vmem:[%s2 + $0x358] sm:$0xff]
      %v932 = vld [vmem:[%s2 + $0x360] sm:$0xff]
      %v933 = vld [vmem:[%s2 + $0x368] sm:$0xff]
      %v934 = vld [vmem:[%s2 + $0x370] sm:$0xff]
      %v935 = vld [vmem:[%s2 + $0x378] sm:$0xff]
      %v936 = vld [vmem:[%s2 + $0x380] sm:$0xff]
      %v937 = vld [vmem:[%s2 + $0x388] sm:$0xff]
      %v938 = vld [vmem:[%s2 + $0x390] sm:$0xff]
      %v939 = vld [vmem:[%s2 + $0x398] sm:$0xff]
      %v940 = vld [vmem:[%s2 + $0x3a0] sm:$0xff]
      %v941 = vld [vmem:[%s2 + $0x3a8] sm:$0xff]
      %v942 = vld [vmem:[%s2 + $0x3b0] sm:$0xff]
      %v943 = vld [vmem:[%s2 + $0x3b8] sm:$0xff]
      %v944 = vld [vmem:[%s2 + $0x3c0] sm:$0xff]
      %v945 = vld [vmem:[%s2 + $0x3c8] sm:$0xff]
      %v946 = vld [vmem:[%s2 + $0x3d0] sm:$0xff]
      %v947 = vld [vmem:[%s2 + $0x3d8] sm:$0xff]
      %v948 = vld [vmem:[%s2 + $0x3e0] sm:$0xff]
      %v949 = vld [vmem:[%s2 + $0x3e8] sm:$0xff]
      %v950 = vld [vmem:[%s2 + $0x3f0] sm:$0xff]
      %v951 = vld [vmem:[%s2 + $0x3f8] sm:$0xff]
      %v952 = vld [vmem:[%s2 + $0x400] sm:$0xff]
      %v953 = vld [vmem:[%s2 + $0x408] sm:$0xff]
      %v954 = vld [vmem:[%s2 + $0x410] sm:$0xff]
      %v955 = vld [vmem:[%s2 + $0x418] sm:$0xff]
      %v956 = vld [vmem:[%s2 + $0x420] sm:$0xff]
      %v957 = vld [vmem:[%s2 + $0x428] sm:$0xff]
      %v958 = vld [vmem:[%s2 + $0x430] sm:$0xff]
      %v959 = vld [vmem:[%s2 + $0x438] sm:$0xff]
      %v960 = vld [vmem:[%s2 + $0x440] sm:$0xff]
      %v961 = vld [vmem:[%s2 + $0x448] sm:$0xff]
      %v962 = vld [vmem:[%s2 + $0x450] sm:$0xff]
      %v963 = vld [vmem:[%s2 + $0x458] sm:$0xff]
      %v964 = vld [vmem:[%s2 + $0x460] sm:$0xff]
      %v965 = vld [vmem:[%s2 + $0x468] sm:$0xff]
      %v966 = vld [vmem:[%s2 + $0x470] sm:$0xff]
      %v967 = vld [vmem:[%s2 + $0x478] sm:$0xff]
      %v968 = vld [vmem:[%s2 + $0x480] sm:$0xff]
      %v969 = vld [vmem:[%s2 + $0x488] sm:$0xff]
      %v970 = vld [vmem:[%s2 + $0x490] sm:$0xff]
      %v971 = vld [vmem:[%s2 + $0x498] sm:$0xff]
      %v972 = vld [vmem:[%s2 + $0x4a0] sm:$0xff]
      %v973 = vld [vmem:[%s2 + $0x4a8] sm:$0xff]
      %v974 = vld [vmem:[%s3] sm:$0x7]
      %v976 = vlaneseq
      %v977 = vshrl.u32 %v976, 7
      %v978 = vsub.s32 0, %v977
      %v979 = vrot.slane %v974, %v978
      %v980 = vlaneseq
      %v981 = vshrl.u32 %v980, 7
      %v982 = vsub.s32 1, %v981
      %v983 = vrot.slane %v974, %v982
      %v984 = vlaneseq
      %v985 = vshrl.u32 %v984, 7
      %v986 = vsub.s32 2, %v985
      %v987 = vrot.slane %v974, %v986
      %v992 = vsel %vm438, %v795, 0
      %v995 = vsel %vm438, %v799, 0
      %v998 = vsel %vm438, %v803, 0
      %v1001 = vsel %vm438, %v807, 0
      %v1004 = vsel %vm438, %v811, 0
      %v1007 = vsel %vm438, %v815, 0
      %v1010 = vsel %vm438, %v819, 0
      %v1013 = vsel %vm438, %v823, 0
      %1015 = vmatprep.subr.mxu0 %v825
      %1016 = vmatpush1.msra.mxu0 %v824
      %1017 = vmatprep.subr.mxu0 %v828
      %1018 = vmatpush1.msra.mxu0 %v827
      %1019 = vmatprep.subr.mxu0 %v831
      %1020 = vmatpush1.msra.mxu0 %v830
      %1021 = vmatprep.subr.mxu0 %v834
      %1022 = vmatpush1.msra.mxu0 %v833
      %1023 = vmatprep.subr.mxu0 %v837
      %1024 = vmatpush1.msra.mxu0 %v836
      %1025 = vmatprep.subr.mxu0 %v840
      %1026 = vmatpush1.msra.mxu0 %v839
      %1027 = vmatprep.subr.mxu0 %v843
      %1028 = vmatpush1.msra.mxu0 %v842
      %1029 = vmatprep.subr.mxu0 %v846
      %1030 = vmatpush1.msra.mxu0 %v845
      %1031 = vmatprep.subr.mxu0 %v849
      %1032 = vmatpush1.msra.mxu0 %v848
      %1033 = vmatprep.subr.mxu0 %v852
      %1034 = vmatpush1.msra.mxu0 %v851
      %1035 = vmatprep.subr.mxu0 %v855
      %1036 = vmatpush1.msra.mxu0 %v854
      %1037 = vmatprep.subr.mxu0 %v858
      %1038 = vmatpush1.msra.mxu0 %v857
      %1039 = vmatprep.subr.mxu0 %v861
      %1040 = vmatpush1.msra.mxu0 %v860
      %1041 = vmatprep.subr.mxu0 %v864
      %1042 = vmatpush1.msra.mxu0 %v863
      %1043 = vmatprep.subr.mxu0 %v867
      %1044 = vmatpush1.msra.mxu0 %v866
      %1045 = vmatprep.subr.mxu0 %v870
      %1046 = vmatpush1.msra.mxu0 %v869
      %1047 = vmatprep.subr.mxu0 %v873
      %1048 = vmatpush1.msra.mxu0 %v872
      %1049 = vmatprep.subr.mxu0 %v876
      %1050 = vmatpush1.msra.mxu0 %v875
      %1051 = vmatprep.subr.mxu0 %v879
      %1052 = vmatpush1.msra.mxu0 %v878
      %1053 = vmatprep.subr.mxu0 %v882
      %1054 = vmatpush1.msra.mxu0 %v881
      %1055 = vmatprep.subr.mxu0 %v885
      %1056 = vmatpush1.msra.mxu0 %v884
      %1057 = vmatprep.subr.mxu0 %v888
      %1058 = vmatpush1.msra.mxu0 %v887
      %1059 = vmatprep.subr.mxu0 %v891
      %1060 = vmatpush1.msra.mxu0 %v890
      %1061 = vmatprep.subr.mxu0 %v894
      %1062 = vmatpush1.msra.mxu0 %v893
      %1063 = vmatprep.subr.mxu0 %v897
      %1064 = vmatpush1.msra.mxu0 %v896
      %1065 = vmatprep.subr.mxu0 %v900
      %1066 = vmatpush1.msra.mxu0 %v899
      %1067 = vmatprep.subr.mxu0 %v903
      %1068 = vmatpush1.msra.mxu0 %v902
      %1069 = vmatprep.subr.mxu0 %v906
      %1070 = vmatpush1.msra.mxu0 %v905
      %1071 = vmatprep.subr.mxu0 %v909
      %1072 = vmatpush1.msra.mxu0 %v908
      %1073 = vmatprep.subr.mxu0 %v912
      %1074 = vmatpush1.msra.mxu0 %v911
      %1075 = vmatprep.subr.mxu0 %v915
      %1076 = vmatpush1.msra.mxu0 %v914
      %1077 = vmatprep.subr.mxu0 %v918
      %1078 = vmatpush1.msra.mxu0 %v917
      %1079 = vmatprep.mubr.f32.mxu0 %v793
      %1080 = vmatmul.mubr.f32.gmra.mrb[0].mxu0 %v792
      %v1081 = vpop.f32.mrb[0].mxu0
      %v1082 = vadd.f32 %v979, %v1081
      %v1083 = vpop.f32.mrb[0].mxu0
      %v1084 = vadd.f32 %v983, %v1083
      %1085 = vmatprep.mubr.f32.mxu0 %v797
      %1086 = vmatmul.mubr.f32.gmra.mrb[0].mxu0 %v796
      %v1087 = vpop.f32.mrb[0].mxu0
      %v1088 = vadd.f32 %v979, %v1087
      %v1089 = vpop.f32.mrb[0].mxu0
      %v1090 = vadd.f32 %v983, %v1089
      %1091 = vmatprep.mubr.f32.mxu0 %v801
      %1092 = vmatmul.mubr.f32.gmra.mrb[0].mxu0 %v800
      %v1093 = vpop.f32.mrb[0].mxu0
      %v1094 = vadd.f32 %v979, %v1093
      %v1095 = vpop.f32.mrb[0].mxu0
      %v1096 = vadd.f32 %v983, %v1095
      %1097 = vmatprep.mubr.f32.mxu0 %v805
      %1098 = vmatmul.mubr.f32.gmra.mrb[0].mxu0 %v804
      %v1099 = vpop.f32.mrb[0].mxu0
      %v1100 = vadd.f32 %v979, %v1099
      %v1101 = vpop.f32.mrb[0].mxu0
      %v1102 = vadd.f32 %v983, %v1101
      %1103 = vmatprep.mubr.f32.mxu0 %v809
      %1104 = vmatmul.mubr.f32.gmra.mrb[0].mxu0 %v808
      %v1105 = vpop.f32.mrb[0].mxu0
      %v1106 = vadd.f32 %v979, %v1105
      %v1107 = vpop.f32.mrb[0].mxu0
      %v1108 = vadd.f32 %v983, %v1107
      %1109 = vmatprep.mubr.f32.mxu0 %v813
      %1110 = vmatmul.mubr.f32.gmra.mrb[0].mxu0 %v812
      %v1111 = vpop.f32.mrb[0].mxu0
      %v1112 = vadd.f32 %v979, %v1111
      %v1113 = vpop.f32.mrb[0].mxu0
      %v1114 = vadd.f32 %v983, %v1113
      %1115 = vmatprep.mubr.f32.mxu0 %v817
      %1116 = vmatmul.mubr.f32.gmra.mrb[0].mxu0 %v816
      %v1117 = vpop.f32.mrb[0].mxu0
      %v1118 = vadd.f32 %v979, %v1117
      %v1119 = vpop.f32.mrb[0].mxu0
      %v1120 = vadd.f32 %v983, %v1119
      %1121 = vmatprep.mubr.f32.mxu0 %v821
      %1122 = vmatmul.mubr.f32.gmra.mrb[0].mxu0 %v820
      %v1123 = vpop.f32.mrb[0].mxu0
      %v1124 = vadd.f32 %v979, %v1123
      %v1125 = vpop.f32.mrb[0].mxu0
      %v1126 = vadd.f32 %v983, %v1125
      %1127 = vdwg.mxu0
      %1128 = vmatprep.subr.mxu0 %v921
      %1129 = vmatpush1.msra.mxu0 %v920
      %1130 = vmatprep.subr.mxu0 %v924
      %1131 = vmatpush1.msra.mxu0 %v923
      %1132 = vmatprep.subr.mxu0 %v927
      %1133 = vmatpush1.msra.mxu0 %v926
      %1134 = vmatprep.subr.mxu0 %v930
      %1135 = vmatpush1.msra.mxu0 %v929
      %1136 = vmatprep.subr.mxu0 %v933
      %1137 = vmatpush1.msra.mxu0 %v932
      %1138 = vmatprep.subr.mxu0 %v936
      %1139 = vmatpush1.msra.mxu0 %v935
      %1140 = vmatprep.subr.mxu0 %v939
      %1141 = vmatpush1.msra.mxu0 %v938
      %1142 = vmatprep.subr.mxu0 %v942
      %1143 = vmatpush1.msra.mxu0 %v941
      %1144 = vmatprep.subr.mxu0 %v945
      %1145 = vmatpush1.msra.mxu0 %v944
      %1146 = vmatprep.subr.mxu0 %v948
      %1147 = vmatpush1.msra.mxu0 %v947
      %1148 = vmatprep.subr.mxu0 %v951
      %1149 = vmatpush1.msra.mxu0 %v950
      %1150 = vmatprep.subr.mxu0 %v954
      %1151 = vmatpush1.msra.mxu0 %v953
      %1152 = vmatprep.subr.mxu0 %v957
      %1153 = vmatpush1.msra.mxu0 %v956
      %1154 = vmatprep.subr.mxu0 %v960
      %1155 = vmatpush1.msra.mxu0 %v959
      %1156 = vmatprep.subr.mxu0 %v963
      %1157 = vmatpush1.msra.mxu0 %v962
      %1158 = vmatprep.subr.mxu0 %v966
      %1159 = vmatpush1.msra.mxu0 %v965
      %1160 = vmatprep.subr.mxu0 %v969
      %1161 = vmatpush1.msra.mxu0 %v968
      %1162 = vmatprep.subr.mxu0 %v972
      %1163 = vmatpush1.msra.mxu0 %v971
      %1164 = vmatprep.subr.mxu0 0.0
      %1165 = vmatpush1.msra.mxu0 0.0
      %1166 = vmatprep.subr.mxu0 0.0
      %1167 = vmatpush1.msra.mxu0 0.0
      %1168 = vmatprep.subr.mxu0 0.0
      %1169 = vmatpush1.msra.mxu0 0.0
      %1170 = vmatprep.subr.mxu0 0.0
      %1171 = vmatpush1.msra.mxu0 0.0
      %1172 = vmatprep.subr.mxu0 0.0
      %1173 = vmatpush1.msra.mxu0 0.0
      %1174 = vmatprep.subr.mxu0 0.0
      %1175 = vmatpush1.msra.mxu0 0.0
      %1176 = vmatprep.subr.mxu0 0.0
      %1177 = vmatpush1.msra.mxu0 0.0
      %1178 = vmatprep.subr.mxu0 0.0
      %1179 = vmatpush1.msra.mxu0 0.0
      %1180 = vmatprep.subr.mxu0 0.0
      %1181 = vmatpush1.msra.mxu0 0.0
      %1182 = vmatprep.subr.mxu0 0.0
      %1183 = vmatpush1.msra.mxu0 0.0
      %1184 = vmatprep.subr.mxu0 0.0
      %1185 = vmatpush1.msra.mxu0 0.0
      %1186 = vmatprep.subr.mxu0 0.0
      %1187 = vmatpush1.msra.mxu0 0.0
      %1188 = vmatprep.subr.mxu0 0.0
      %1189 = vmatpush1.msra.mxu0 0.0
      %1190 = vmatprep.subr.mxu0 0.0
      %1191 = vmatpush1.msra.mxu0 0.0
      %1192 = vmatprep.mubr.f32.mxu0 %v992
      %1193 = vmatmul.mubr.f32.gmra.mrb[0].mxu0 %v794
      %v1194 = vpop.f32.mrb[0].mxu0
      %v1195 = vadd.f32 %v1082, %v1194
      %v1196 = vpop.f32.mrb[0].mxu0
      %v1197 = vadd.f32 %v1084, %v1196
      %1198 = vmatprep.mubr.f32.mxu0 %v995
      %1199 = vmatmul.mubr.f32.gmra.mrb[0].mxu0 %v798
      %v1200 = vpop.f32.mrb[0].mxu0
      %v1201 = vadd.f32 %v1088, %v1200
      %v1202 = vpop.f32.mrb[0].mxu0
      %v1203 = vadd.f32 %v1090, %v1202
      %1204 = vmatprep.mubr.f32.mxu0 %v998
      %1205 = vmatmul.mubr.f32.gmra.mrb[0].mxu0 %v802
      %v1206 = vpop.f32.mrb[0].mxu0
      %v1207 = vadd.f32 %v1094, %v1206
      %v1208 = vpop.f32.mrb[0].mxu0
      %v1209 = vadd.f32 %v1096, %v1208
      %1210 = vmatprep.mubr.f32.mxu0 %v1001
      %1211 = vmatmul.mubr.f32.gmra.mrb[0].mxu0 %v806
      %v1212 = vpop.f32.mrb[0].mxu0
      %v1213 = vadd.f32 %v1100, %v1212
      %v1214 = vpop.f32.mrb[0].mxu0
      %v1215 = vadd.f32 %v1102, %v1214
      %1216 = vmatprep.mubr.f32.mxu0 %v1004
      %1217 = vmatmul.mubr.f32.gmra.mrb[0].mxu0 %v810
      %v1218 = vpop.f32.mrb[0].mxu0
      %v1219 = vadd.f32 %v1106, %v1218
      %v1220 = vpop.f32.mrb[0].mxu0
      %v1221 = vadd.f32 %v1108, %v1220
      %1222 = vmatprep.mubr.f32.mxu0 %v1007
      %1223 = vmatmul.mubr.f32.gmra.mrb[0].mxu0 %v814
      %v1224 = vpop.f32.mrb[0].mxu0
      %v1225 = vadd.f32 %v1112, %v1224
      %v1226 = vpop.f32.mrb[0].mxu0
      %v1227 = vadd.f32 %v1114, %v1226
      %1228 = vmatprep.mubr.f32.mxu0 %v1010
      %1229 = vmatmul.mubr.f32.gmra.mrb[0].mxu0 %v818
      %v1230 = vpop.f32.mrb[0].mxu0
      %v1231 = vadd.f32 %v1118, %v1230
      %v1232 = vpop.f32.mrb[0].mxu0
      %v1233 = vadd.f32 %v1120, %v1232
      %1234 = vmatprep.mubr.f32.mxu0 %v1013
      %1235 = vmatmul.mubr.f32.gmra.mrb[0].mxu0 %v822
      %v1236 = vpop.f32.mrb[0].mxu0
      %v1237 = vadd.f32 %v1124, %v1236
      %v1238 = vpop.f32.mrb[0].mxu0
      %v1239 = vadd.f32 %v1126, %v1238
      %1240 = vdwg.mxu0
      %1241 = vmatprep.subr.mxu0 0.0
      %1242 = vmatpush1.msra.mxu0 %v826
      %1243 = vmatprep.subr.mxu0 0.0
      %1244 = vmatpush1.msra.mxu0 %v829
      %1245 = vmatprep.subr.mxu0 0.0
      %1246 = vmatpush1.msra.mxu0 %v832
      %1247 = vmatprep.subr.mxu0 0.0
      %1248 = vmatpush1.msra.mxu0 %v835
      %1249 = vmatprep.subr.mxu0 0.0
      %1250 = vmatpush1.msra.mxu0 %v838
      %1251 = vmatprep.subr.mxu0 0.0
      %1252 = vmatpush1.msra.mxu0 %v841
      %1253 = vmatprep.subr.mxu0 0.0
      %1254 = vmatpush1.msra.mxu0 %v844
      %1255 = vmatprep.subr.mxu0 0.0
      %1256 = vmatpush1.msra.mxu0 %v847
      %1257 = vmatprep.subr.mxu0 0.0
      %1258 = vmatpush1.msra.mxu0 %v850
      %1259 = vmatprep.subr.mxu0 0.0
      %1260 = vmatpush1.msra.mxu0 %v853
      %1261 = vmatprep.subr.mxu0 0.0
      %1262 = vmatpush1.msra.mxu0 %v856
      %1263 = vmatprep.subr.mxu0 0.0
      %1264 = vmatpush1.msra.mxu0 %v859
      %1265 = vmatprep.subr.mxu0 0.0
      %1266 = vmatpush1.msra.mxu0 %v862
      %1267 = vmatprep.subr.mxu0 0.0
      %1268 = vmatpush1.msra.mxu0 %v865
      %1269 = vmatprep.subr.mxu0 0.0
      %1270 = vmatpush1.msra.mxu0 %v868
      %1271 = vmatprep.subr.mxu0 0.0
      %1272 = vmatpush1.msra.mxu0 %v871
      %1273 = vmatprep.subr.mxu0 0.0
      %1274 = vmatpush1.msra.mxu0 %v874
      %1275 = vmatprep.subr.mxu0 0.0
      %1276 = vmatpush1.msra.mxu0 %v877
      %1277 = vmatprep.subr.mxu0 0.0
      %1278 = vmatpush1.msra.mxu0 %v880
      %1279 = vmatprep.subr.mxu0 0.0
      %1280 = vmatpush1.msra.mxu0 %v883
      %1281 = vmatprep.subr.mxu0 0.0
      %1282 = vmatpush1.msra.mxu0 %v886
      %1283 = vmatprep.subr.mxu0 0.0
      %1284 = vmatpush1.msra.mxu0 %v889
      %1285 = vmatprep.subr.mxu0 0.0
      %1286 = vmatpush1.msra.mxu0 %v892
      %1287 = vmatprep.subr.mxu0 0.0
      %1288 = vmatpush1.msra.mxu0 %v895
      %1289 = vmatprep.subr.mxu0 0.0
      %1290 = vmatpush1.msra.mxu0 %v898
      %1291 = vmatprep.subr.mxu0 0.0
      %1292 = vmatpush1.msra.mxu0 %v901
      %1293 = vmatprep.subr.mxu0 0.0
      %1294 = vmatpush1.msra.mxu0 %v904
      %1295 = vmatprep.subr.mxu0 0.0
      %1296 = vmatpush1.msra.mxu0 %v907
      %1297 = vmatprep.subr.mxu0 0.0
      %1298 = vmatpush1.msra.mxu0 %v910
      %1299 = vmatprep.subr.mxu0 0.0
      %1300 = vmatpush1.msra.mxu0 %v913
      %1301 = vmatprep.subr.mxu0 0.0
      %1302 = vmatpush1.msra.mxu0 %v916
      %1303 = vmatprep.subr.mxu0 0.0
      %1304 = vmatpush1.msra.mxu0 %v919
      %1305 = vmatprep.mubr.f32.mxu0 %v793
      %1306 = vmatmul.mubr.f32.gmra.mrb[0].mxu0 %v792
      %v1307 = vpop.f32.mrb[0].mxu0
      %v1308 = vadd.f32 %v987, %v1307
      %v1309 = vpop.f32.mrb[0].mxu0
      %1310 = vmatprep.mubr.f32.mxu0 %v797
      %1311 = vmatmul.mubr.f32.gmra.mrb[0].mxu0 %v796
      %v1312 = vpop.f32.mrb[0].mxu0
      %v1313 = vadd.f32 %v987, %v1312
      %v1314 = vpop.f32.mrb[0].mxu0
      %1315 = vmatprep.mubr.f32.mxu0 %v801
      %1316 = vmatmul.mubr.f32.gmra.mrb[0].mxu0 %v800
      %v1317 = vpop.f32.mrb[0].mxu0
      %v1318 = vadd.f32 %v987, %v1317
      %v1319 = vpop.f32.mrb[0].mxu0
      %1320 = vmatprep.mubr.f32.mxu0 %v805
      %1321 = vmatmul.mubr.f32.gmra.mrb[0].mxu0 %v804
      %v1322 = vpop.f32.mrb[0].mxu0
      %v1323 = vadd.f32 %v987, %v1322
      %v1324 = vpop.f32.mrb[0].mxu0
      %1325 = vmatprep.mubr.f32.mxu0 %v809
      %1326 = vmatmul.mubr.f32.gmra.mrb[0].mxu0 %v808
      %v1327 = vpop.f32.mrb[0].mxu0
      %v1328 = vadd.f32 %v987, %v1327
      %v1329 = vpop.f32.mrb[0].mxu0
      %1330 = vmatprep.mubr.f32.mxu0 %v813
      %1331 = vmatmul.mubr.f32.gmra.mrb[0].mxu0 %v812
      %v1332 = vpop.f32.mrb[0].mxu0
      %v1333 = vadd.f32 %v987, %v1332
      %v1334 = vpop.f32.mrb[0].mxu0
      %1335 = vmatprep.mubr.f32.mxu0 %v817
      %1336 = vmatmul.mubr.f32.gmra.mrb[0].mxu0 %v816
      %v1337 = vpop.f32.mrb[0].mxu0
      %v1338 = vadd.f32 %v987, %v1337
      %v1339 = vpop.f32.mrb[0].mxu0
      %1340 = vmatprep.mubr.f32.mxu0 %v821
      %1341 = vmatmul.mubr.f32.gmra.mrb[0].mxu0 %v820
      %v1342 = vpop.f32.mrb[0].mxu0
      %v1343 = vadd.f32 %v987, %v1342
      %v1344 = vpop.f32.mrb[0].mxu0
      %1345 = vdwg.mxu0
      %1346 = vmatprep.subr.mxu0 0.0
      %1347 = vmatpush1.msra.mxu0 %v922
      %1348 = vmatprep.subr.mxu0 0.0
      %1349 = vmatpush1.msra.mxu0 %v925
      %1350 = vmatprep.subr.mxu0 0.0
      %1351 = vmatpush1.msra.mxu0 %v928
      %1352 = vmatprep.subr.mxu0 0.0
      %1353 = vmatpush1.msra.mxu0 %v931
      %1354 = vmatprep.subr.mxu0 0.0
      %1355 = vmatpush1.msra.mxu0 %v934
      %1356 = vmatprep.subr.mxu0 0.0
      %1357 = vmatpush1.msra.mxu0 %v937
      %1358 = vmatprep.subr.mxu0 0.0
      %1359 = vmatpush1.msra.mxu0 %v940
      %1360 = vmatprep.subr.mxu0 0.0
      %1361 = vmatpush1.msra.mxu0 %v943
      %1362 = vmatprep.subr.mxu0 0.0
      %1363 = vmatpush1.msra.mxu0 %v946
      %1364 = vmatprep.subr.mxu0 0.0
      %1365 = vmatpush1.msra.mxu0 %v949
      %1366 = vmatprep.subr.mxu0 0.0
      %1367 = vmatpush1.msra.mxu0 %v952
      %1368 = vmatprep.subr.mxu0 0.0
      %1369 = vmatpush1.msra.mxu0 %v955
      %1370 = vmatprep.subr.mxu0 0.0
      %1371 = vmatpush1.msra.mxu0 %v958
      %1372 = vmatprep.subr.mxu0 0.0
      %1373 = vmatpush1.msra.mxu0 %v961
      %1374 = vmatprep.subr.mxu0 0.0
      %1375 = vmatpush1.msra.mxu0 %v964
      %1376 = vmatprep.subr.mxu0 0.0
      %1377 = vmatpush1.msra.mxu0 %v967
      %1378 = vmatprep.subr.mxu0 0.0
      %1379 = vmatpush1.msra.mxu0 %v970
      %1380 = vmatprep.subr.mxu0 0.0
      %1381 = vmatpush1.msra.mxu0 %v973
      %1382 = vmatprep.subr.mxu0 0.0
      %1383 = vmatpush1.msra.mxu0 0.0
      %1384 = vmatprep.subr.mxu0 0.0
      %1385 = vmatpush1.msra.mxu0 0.0
      %1386 = vmatprep.subr.mxu0 0.0
      %1387 = vmatpush1.msra.mxu0 0.0
      %1388 = vmatprep.subr.mxu0 0.0
      %1389 = vmatpush1.msra.mxu0 0.0
      %1390 = vmatprep.subr.mxu0 0.0
      %1391 = vmatpush1.msra.mxu0 0.0
      %1392 = vmatprep.subr.mxu0 0.0
      %1393 = vmatpush1.msra.mxu0 0.0
      %1394 = vmatprep.subr.mxu0 0.0
      %1395 = vmatpush1.msra.mxu0 0.0
      %1396 = vmatprep.subr.mxu0 0.0
      %1397 = vmatpush1.msra.mxu0 0.0
      %1398 = vmatprep.subr.mxu0 0.0
      %1399 = vmatpush1.msra.mxu0 0.0
      %1400 = vmatprep.subr.mxu0 0.0
      %1401 = vmatpush1.msra.mxu0 0.0
      %1402 = vmatprep.subr.mxu0 0.0
      %1403 = vmatpush1.msra.mxu0 0.0
      %1404 = vmatprep.subr.mxu0 0.0
      %1405 = vmatpush1.msra.mxu0 0.0
      %1406 = vmatprep.subr.mxu0 0.0
      %1407 = vmatpush1.msra.mxu0 0.0
      %1408 = vmatprep.subr.mxu0 0.0
      %1409 = vmatpush1.msra.mxu0 0.0
      %1410 = vmatprep.mubr.f32.mxu0 %v992
      %1411 = vmatmul.mubr.f32.gmra.mrb[0].mxu0 %v794
      %v1412 = vpop.f32.mrb[0].mxu0
      %v1413 = vadd.f32 %v1308, %v1412
      %v1414 = vpop.f32.mrb[0].mxu0
      %1415 = vmatprep.mubr.f32.mxu0 %v995
      %1416 = vmatmul.mubr.f32.gmra.mrb[0].mxu0 %v798
      %v1417 = vpop.f32.mrb[0].mxu0
      %v1418 = vadd.f32 %v1313, %v1417
      %v1419 = vpop.f32.mrb[0].mxu0
      %1420 = vmatprep.mubr.f32.mxu0 %v998
      %1421 = vmatmul.mubr.f32.gmra.mrb[0].mxu0 %v802
      %v1422 = vpop.f32.mrb[0].mxu0
      %v1423 = vadd.f32 %v1318, %v1422
      %v1424 = vpop.f32.mrb[0].mxu0
      %1425 = vmatprep.mubr.f32.mxu0 %v1001
      %1426 = vmatmul.mubr.f32.gmra.mrb[0].mxu0 %v806
      %v1427 = vpop.f32.mrb[0].mxu0
      %v1428 = vadd.f32 %v1323, %v1427
      %v1429 = vpop.f32.mrb[0].mxu0
      %1430 = vmatprep.mubr.f32.mxu0 %v1004
      %1431 = vmatmul.mubr.f32.gmra.mrb[0].mxu0 %v810
      %v1432 = vpop.f32.mrb[0].mxu0
      %v1433 = vadd.f32 %v1328, %v1432
      %v1434 = vpop.f32.mrb[0].mxu0
      %1435 = vmatprep.mubr.f32.mxu0 %v1007
      %1436 = vmatmul.mubr.f32.gmra.mrb[0].mxu0 %v814
      %v1437 = vpop.f32.mrb[0].mxu0
      %v1438 = vadd.f32 %v1333, %v1437
      %v1439 = vpop.f32.mrb[0].mxu0
      %1440 = vmatprep.mubr.f32.mxu0 %v1010
      %1441 = vmatmul.mubr.f32.gmra.mrb[0].mxu0 %v818
      %v1442 = vpop.f32.mrb[0].mxu0
      %v1443 = vadd.f32 %v1338, %v1442
      %v1444 = vpop.f32.mrb[0].mxu0
      %1445 = vmatprep.mubr.f32.mxu0 %v1013
      %1446 = vmatmul.mubr.f32.gmra.mrb[0].mxu0 %v822
      %v1447 = vpop.f32.mrb[0].mxu0
      %v1448 = vadd.f32 %v1343, %v1447
      %v1449 = vpop.f32.mrb[0].mxu0
      %1450 = vdwg.mxu0
      %v1451 = vlaneseq
      %v1452 = vshrl.u32 %v1451, 7
      %v1453 = vadd.s32 %v1452, 8
      %v1454 = vadd.s32 %v1452, 16
      %v1455 = vadd.s32 %v1452, 24
      %v1456 = vadd.s32 %v1452, 32
      %v1457 = vadd.s32 %v1452, 40
      %v1458 = vadd.s32 %v1452, 48
      %v1459 = vadd.s32 %v1452, 56
      %v1460 = vlaneseq
      %v1461 = vand.u32 %v1460, 127
      %vm1462 = vcmp.lt.s32.totalorder %v1461, 60
      %v1463 = vsel %vm1462, 0.0, -1e+09
      %v1464 = vld [vmem:[%s4] sm:$0xff]
      %v1465 = vld [vmem:[%s4 + $0x8] sm:$0xff]
      %v1466 = vld [vmem:[%s4 + $0x10] sm:$0xff]
      %v1467 = vld [vmem:[%s4 + $0x18] sm:$0xff]
      %v1468 = vld [vmem:[%s4 + $0x20] sm:$0xff]
      %v1469 = vld [vmem:[%s4 + $0x28] sm:$0xff]
      %v1470 = vld [vmem:[%s4 + $0x30] sm:$0xff]
      %v1471 = vld [vmem:[%s4 + $0x38] sm:$0xff]
      %v1472 = vld [vmem:[%s4 + $0x40] sm:$0xff]
      %v1473 = vld [vmem:[%s4 + $0x48] sm:$0xff]
      %v1474 = vld [vmem:[%s4 + $0x50] sm:$0xff]
      %v1475 = vld [vmem:[%s4 + $0x58] sm:$0xff]
      %v1476 = vld [vmem:[%s4 + $0x60] sm:$0xff]
      %v1477 = vld [vmem:[%s4 + $0x68] sm:$0xff]
      %v1478 = vld [vmem:[%s4 + $0x70] sm:$0xff]
      %v1479 = vld [vmem:[%s4 + $0x78] sm:$0xff]
      %v1480 = vld [vmem:[%s4 + $0x80] sm:$0xff]
      %v1481 = vld [vmem:[%s4 + $0x88] sm:$0xff]
      %v1482 = vld [vmem:[%s4 + $0x90] sm:$0xff]
      %v1483 = vld [vmem:[%s4 + $0x98] sm:$0xff]
      %v1484 = vld [vmem:[%s4 + $0xa0] sm:$0xff]
      %v1485 = vld [vmem:[%s4 + $0xa8] sm:$0xff]
      %v1486 = vld [vmem:[%s4 + $0xb0] sm:$0xff]
      %v1487 = vld [vmem:[%s4 + $0xb8] sm:$0xff]
      %v1488 = vld [vmem:[%s4 + $0xc0] sm:$0xff]
      %v1489 = vld [vmem:[%s4 + $0xc8] sm:$0xff]
      %v1490 = vld [vmem:[%s4 + $0xd0] sm:$0xff]
      %v1491 = vld [vmem:[%s4 + $0xd8] sm:$0xff]
      %v1492 = vld [vmem:[%s4 + $0xe0] sm:$0xff]
      %v1493 = vld [vmem:[%s4 + $0xe8] sm:$0xff]
      %v1494 = vld [vmem:[%s4 + $0xf0] sm:$0xff]
      %v1495 = vld [vmem:[%s4 + $0xf8] sm:$0xff]
      %v1496 = vld [vmem:[%s4 + $0x100] sm:$0xff]
      %v1497 = vld [vmem:[%s4 + $0x108] sm:$0xff]
      %v1498 = vld [vmem:[%s4 + $0x110] sm:$0xff]
      %v1499 = vld [vmem:[%s4 + $0x118] sm:$0xff]
      %v1500 = vld [vmem:[%s4 + $0x120] sm:$0xff]
      %v1501 = vld [vmem:[%s4 + $0x128] sm:$0xff]
      %v1502 = vld [vmem:[%s4 + $0x130] sm:$0xff]
      %v1503 = vld [vmem:[%s4 + $0x138] sm:$0xff]
      %v1504 = vld [vmem:[%s4 + $0x140] sm:$0xff]
      %v1505 = vld [vmem:[%s4 + $0x148] sm:$0xff]
      %v1506 = vld [vmem:[%s4 + $0x150] sm:$0xff]
      %v1507 = vld [vmem:[%s4 + $0x158] sm:$0xff]
      %v1508 = vld [vmem:[%s4 + $0x160] sm:$0xff]
      %v1509 = vld [vmem:[%s4 + $0x168] sm:$0xff]
      %v1510 = vld [vmem:[%s4 + $0x170] sm:$0xff]
      %v1511 = vld [vmem:[%s4 + $0x178] sm:$0xff]
      %v1512 = vld [vmem:[%s4 + $0x180] sm:$0xff]
      %v1513 = vld [vmem:[%s4 + $0x188] sm:$0xff]
      %v1514 = vld [vmem:[%s4 + $0x190] sm:$0xff]
      %v1515 = vld [vmem:[%s4 + $0x198] sm:$0xff]
      %v1516 = vld [vmem:[%s4 + $0x1a0] sm:$0xff]
      %v1517 = vld [vmem:[%s4 + $0x1a8] sm:$0xff]
      %v1518 = vld [vmem:[%s4 + $0x1b0] sm:$0xff]
      %v1519 = vld [vmem:[%s4 + $0x1b8] sm:$0xff]
      %v1520 = vld [vmem:[%s4 + $0x1c0] sm:$0xff]
      %v1521 = vld [vmem:[%s4 + $0x1c8] sm:$0xff]
      %v1522 = vld [vmem:[%s4 + $0x1d0] sm:$0xff]
      %v1523 = vld [vmem:[%s4 + $0x1d8] sm:$0xff]
      %v1524 = vld [vmem:[%s4 + $0x1e0] sm:$0xff]
      %v1525 = vld [vmem:[%s4 + $0x1e8] sm:$0xff]
      %v1526 = vld [vmem:[%s4 + $0x1f0] sm:$0xff]
      %v1527 = vld [vmem:[%s4 + $0x1f8] sm:$0xff]
      %v1528 = vld [vmem:[%s5] sm:$0xf]
      %v1529 = vld [vmem:[%s6] sm:$0xff]
      %v1530 = vld [vmem:[%s6 + $0x8] sm:$0xff]
      %v1531 = vld [vmem:[%s6 + $0x10] sm:$0xff]
      %v1532 = vld [vmem:[%s6 + $0x18] sm:$0xff]
      %v1533 = vld [vmem:[%s6 + $0x20] sm:$0xff]
      %v1534 = vld [vmem:[%s6 + $0x28] sm:$0xff]
      %v1535 = vld [vmem:[%s6 + $0x30] sm:$0xff]
      %v1536 = vld [vmem:[%s6 + $0x38] sm:$0xff]
      %v1537 = vld [vmem:[%s6 + $0x40] sm:$0xff]
      %v1538 = vld [vmem:[%s6 + $0x48] sm:$0xff]
      %v1539 = vld [vmem:[%s6 + $0x50] sm:$0xff]
      %v1540 = vld [vmem:[%s6 + $0x58] sm:$0xff]
      %v1541 = vld [vmem:[%s6 + $0x60] sm:$0xff]
      %v1542 = vld [vmem:[%s6 + $0x68] sm:$0xff]
      %v1543 = vld [vmem:[%s6 + $0x70] sm:$0xff]
      %v1544 = vld [vmem:[%s6 + $0x78] sm:$0xff]
      %v1545 = vld [vmem:[%s6 + $0x80] sm:$0xff]
      %v1546 = vld [vmem:[%s6 + $0x88] sm:$0xff]
      %v1547 = vld [vmem:[%s6 + $0x90] sm:$0xff]
      %v1548 = vld [vmem:[%s6 + $0x98] sm:$0xff]
      %v1549 = vld [vmem:[%s6 + $0xa0] sm:$0xff]
      %v1550 = vld [vmem:[%s6 + $0xa8] sm:$0xff]
      %v1551 = vld [vmem:[%s6 + $0xb0] sm:$0xff]
      %v1552 = vld [vmem:[%s6 + $0xb8] sm:$0xff]
      %v1553 = vld [vmem:[%s6 + $0xc0] sm:$0xff]
      %v1554 = vld [vmem:[%s6 + $0xc8] sm:$0xff]
      %v1555 = vld [vmem:[%s6 + $0xd0] sm:$0xff]
      %v1556 = vld [vmem:[%s6 + $0xd8] sm:$0xff]
      %v1557 = vld [vmem:[%s6 + $0xe0] sm:$0xff]
      %v1558 = vld [vmem:[%s6 + $0xe8] sm:$0xff]
      %v1559 = vld [vmem:[%s6 + $0xf0] sm:$0xff]
      %v1560 = vld [vmem:[%s6 + $0xf8] sm:$0xff]
      %v1561 = vld [vmem:[%s6 + $0x100] sm:$0xff]
      %v1562 = vld [vmem:[%s6 + $0x108] sm:$0xff]
      %v1563 = vld [vmem:[%s6 + $0x110] sm:$0xff]
      %v1564 = vld [vmem:[%s6 + $0x118] sm:$0xff]
      %v1565 = vld [vmem:[%s6 + $0x120] sm:$0xff]
      %v1566 = vld [vmem:[%s6 + $0x128] sm:$0xff]
      %v1567 = vld [vmem:[%s6 + $0x130] sm:$0xff]
      %v1568 = vld [vmem:[%s6 + $0x138] sm:$0xff]
      %v1569 = vld [vmem:[%s6 + $0x140] sm:$0xff]
      %v1570 = vld [vmem:[%s6 + $0x148] sm:$0xff]
      %v1571 = vld [vmem:[%s6 + $0x150] sm:$0xff]
      %v1572 = vld [vmem:[%s6 + $0x158] sm:$0xff]
      %v1573 = vld [vmem:[%s6 + $0x160] sm:$0xff]
      %v1574 = vld [vmem:[%s6 + $0x168] sm:$0xff]
      %v1575 = vld [vmem:[%s6 + $0x170] sm:$0xff]
      %v1576 = vld [vmem:[%s6 + $0x178] sm:$0xff]
      %v1577 = vld [vmem:[%s6 + $0x180] sm:$0xff]
      %v1578 = vld [vmem:[%s6 + $0x188] sm:$0xff]
      %v1579 = vld [vmem:[%s6 + $0x190] sm:$0xff]
      %v1580 = vld [vmem:[%s6 + $0x198] sm:$0xff]
      %v1581 = vld [vmem:[%s6 + $0x1a0] sm:$0xff]
      %v1582 = vld [vmem:[%s6 + $0x1a8] sm:$0xff]
      %v1583 = vld [vmem:[%s6 + $0x1b0] sm:$0xff]
      %v1584 = vld [vmem:[%s6 + $0x1b8] sm:$0xff]
      %v1585 = vld [vmem:[%s6 + $0x1c0] sm:$0xff]
      %v1586 = vld [vmem:[%s6 + $0x1c8] sm:$0xff]
      %v1587 = vld [vmem:[%s6 + $0x1d0] sm:$0xff]
      %v1588 = vld [vmem:[%s6 + $0x1d8] sm:$0xff]
      %v1589 = vld [vmem:[%s6 + $0x1e0] sm:$0xff]
      %v1590 = vld [vmem:[%s6 + $0x1e8] sm:$0xff]
      %v1591 = vld [vmem:[%s6 + $0x1f0] sm:$0xff]
      %v1592 = vld [vmem:[%s6 + $0x1f8] sm:$0xff]
      %v1593 = vld [vmem:[%s6 + $0x200] sm:$0xff]
      %v1594 = vld [vmem:[%s6 + $0x208] sm:$0xff]
      %v1595 = vld [vmem:[%s6 + $0x210] sm:$0xff]
      %v1596 = vld [vmem:[%s6 + $0x218] sm:$0xff]
      %v1597 = vld [vmem:[%s6 + $0x220] sm:$0xff]
      %v1598 = vld [vmem:[%s6 + $0x228] sm:$0xff]
      %v1599 = vld [vmem:[%s6 + $0x230] sm:$0xff]
      %v1600 = vld [vmem:[%s6 + $0x238] sm:$0xff]
      %v1601 = vld [vmem:[%s6 + $0x240] sm:$0xff]
      %v1602 = vld [vmem:[%s6 + $0x248] sm:$0xff]
      %v1603 = vld [vmem:[%s6 + $0x250] sm:$0xff]
      %v1604 = vld [vmem:[%s6 + $0x258] sm:$0xff]
      %v1605 = vld [vmem:[%s6 + $0x260] sm:$0xff]
      %v1606 = vld [vmem:[%s6 + $0x268] sm:$0xff]
      %v1607 = vld [vmem:[%s6 + $0x270] sm:$0xff]
      %v1608 = vld [vmem:[%s6 + $0x278] sm:$0xff]
      %v1609 = vld [vmem:[%s6 + $0x280] sm:$0xff]
      %v1610 = vld [vmem:[%s6 + $0x288] sm:$0xff]
      %v1611 = vld [vmem:[%s6 + $0x290] sm:$0xff]
      %v1612 = vld [vmem:[%s6 + $0x298] sm:$0xff]
      %v1613 = vld [vmem:[%s6 + $0x2a0] sm:$0xff]
      %v1614 = vld [vmem:[%s6 + $0x2a8] sm:$0xff]
      %v1615 = vld [vmem:[%s6 + $0x2b0] sm:$0xff]
      %v1616 = vld [vmem:[%s6 + $0x2b8] sm:$0xff]
      %v1617 = vld [vmem:[%s6 + $0x2c0] sm:$0xff]
      %v1618 = vld [vmem:[%s6 + $0x2c8] sm:$0xff]
      %v1619 = vld [vmem:[%s6 + $0x2d0] sm:$0xff]
      %v1620 = vld [vmem:[%s6 + $0x2d8] sm:$0xff]
      %v1621 = vld [vmem:[%s6 + $0x2e0] sm:$0xff]
      %v1622 = vld [vmem:[%s6 + $0x2e8] sm:$0xff]
      %v1623 = vld [vmem:[%s6 + $0x2f0] sm:$0xff]
      %v1624 = vld [vmem:[%s6 + $0x2f8] sm:$0xff]
      %v1625 = vld [vmem:[%s6 + $0x300] sm:$0xff]
      %v1626 = vld [vmem:[%s6 + $0x308] sm:$0xff]
      %v1627 = vld [vmem:[%s6 + $0x310] sm:$0xff]
      %v1628 = vld [vmem:[%s6 + $0x318] sm:$0xff]
      %v1629 = vld [vmem:[%s6 + $0x320] sm:$0xff]
      %v1630 = vld [vmem:[%s6 + $0x328] sm:$0xff]
      %v1631 = vld [vmem:[%s6 + $0x330] sm:$0xff]
      %v1632 = vld [vmem:[%s6 + $0x338] sm:$0xff]
      %v1633 = vld [vmem:[%s6 + $0x340] sm:$0xff]
      %v1634 = vld [vmem:[%s6 + $0x348] sm:$0xff]
      %v1635 = vld [vmem:[%s6 + $0x350] sm:$0xff]
      %v1636 = vld [vmem:[%s6 + $0x358] sm:$0xff]
      %v1637 = vld [vmem:[%s6 + $0x360] sm:$0xff]
      %v1638 = vld [vmem:[%s6 + $0x368] sm:$0xff]
      %v1639 = vld [vmem:[%s6 + $0x370] sm:$0xff]
      %v1640 = vld [vmem:[%s6 + $0x378] sm:$0xff]
      %v1641 = vld [vmem:[%s6 + $0x380] sm:$0xff]
      %v1642 = vld [vmem:[%s6 + $0x388] sm:$0xff]
      %v1643 = vld [vmem:[%s6 + $0x390] sm:$0xff]
      %v1644 = vld [vmem:[%s6 + $0x398] sm:$0xff]
      %v1645 = vld [vmem:[%s6 + $0x3a0] sm:$0xff]
      %v1646 = vld [vmem:[%s6 + $0x3a8] sm:$0xff]
      %v1647 = vld [vmem:[%s6 + $0x3b0] sm:$0xff]
      %v1648 = vld [vmem:[%s6 + $0x3b8] sm:$0xff]
      %v1649 = vld [vmem:[%s6 + $0x3c0] sm:$0xff]
      %v1650 = vld [vmem:[%s6 + $0x3c8] sm:$0xff]
      %v1651 = vld [vmem:[%s6 + $0x3d0] sm:$0xff]
      %v1652 = vld [vmem:[%s6 + $0x3d8] sm:$0xff]
      %v1653 = vld [vmem:[%s6 + $0x3e0] sm:$0xff]
      %v1654 = vld [vmem:[%s6 + $0x3e8] sm:$0xff]
      %v1655 = vld [vmem:[%s6 + $0x3f0] sm:$0xff]
      %v1656 = vld [vmem:[%s6 + $0x3f8] sm:$0xff]
      %v1657 = vld [vmem:[%s6 + $0x400] sm:$0xff]
      %v1658 = vld [vmem:[%s6 + $0x408] sm:$0xff]
      %v1659 = vld [vmem:[%s6 + $0x410] sm:$0xff]
      %v1660 = vld [vmem:[%s6 + $0x418] sm:$0xff]
      %v1661 = vld [vmem:[%s6 + $0x420] sm:$0xff]
      %v1662 = vld [vmem:[%s6 + $0x428] sm:$0xff]
      %v1663 = vld [vmem:[%s6 + $0x430] sm:$0xff]
      %v1664 = vld [vmem:[%s6 + $0x438] sm:$0xff]
      %v1665 = vld [vmem:[%s6 + $0x440] sm:$0xff]
      %v1666 = vld [vmem:[%s6 + $0x448] sm:$0xff]
      %v1667 = vld [vmem:[%s6 + $0x450] sm:$0xff]
      %v1668 = vld [vmem:[%s6 + $0x458] sm:$0xff]
      %v1669 = vld [vmem:[%s6 + $0x460] sm:$0xff]
      %v1670 = vld [vmem:[%s6 + $0x468] sm:$0xff]
      %v1671 = vld [vmem:[%s6 + $0x470] sm:$0xff]
      %v1672 = vld [vmem:[%s6 + $0x478] sm:$0xff]
      %v1673 = vld [vmem:[%s6 + $0x480] sm:$0xff]
      %v1674 = vld [vmem:[%s6 + $0x488] sm:$0xff]
      %v1675 = vld [vmem:[%s6 + $0x490] sm:$0xff]
      %v1676 = vld [vmem:[%s6 + $0x498] sm:$0xff]
      %v1677 = vld [vmem:[%s6 + $0x4a0] sm:$0xff]
      %v1678 = vld [vmem:[%s6 + $0x4a8] sm:$0xff]
      %v1679 = vld [vmem:[%s6 + $0x4b0] sm:$0xff]
      %v1680 = vld [vmem:[%s6 + $0x4b8] sm:$0xff]
      %v1681 = vld [vmem:[%s6 + $0x4c0] sm:$0xff]
      %v1682 = vld [vmem:[%s6 + $0x4c8] sm:$0xff]
      %v1683 = vld [vmem:[%s6 + $0x4d0] sm:$0xff]
      %v1684 = vld [vmem:[%s6 + $0x4d8] sm:$0xff]
      %v1685 = vld [vmem:[%s6 + $0x4e0] sm:$0xff]
      %v1686 = vld [vmem:[%s6 + $0x4e8] sm:$0xff]
      %v1687 = vld [vmem:[%s6 + $0x4f0] sm:$0xff]
      %v1688 = vld [vmem:[%s6 + $0x4f8] sm:$0xff]
      %v1689 = vld [vmem:[%s6 + $0x500] sm:$0xff]
      %v1690 = vld [vmem:[%s6 + $0x508] sm:$0xff]
      %v1691 = vld [vmem:[%s6 + $0x510] sm:$0xff]
      %v1692 = vld [vmem:[%s6 + $0x518] sm:$0xff]
      %v1693 = vld [vmem:[%s6 + $0x520] sm:$0xff]
      %v1694 = vld [vmem:[%s6 + $0x528] sm:$0xff]
      %v1695 = vld [vmem:[%s6 + $0x530] sm:$0xff]
      %v1696 = vld [vmem:[%s6 + $0x538] sm:$0xff]
      %v1697 = vld [vmem:[%s6 + $0x540] sm:$0xff]
      %v1698 = vld [vmem:[%s6 + $0x548] sm:$0xff]
      %v1699 = vld [vmem:[%s6 + $0x550] sm:$0xff]
      %v1700 = vld [vmem:[%s6 + $0x558] sm:$0xff]
      %v1701 = vld [vmem:[%s6 + $0x560] sm:$0xff]
      %v1702 = vld [vmem:[%s6 + $0x568] sm:$0xff]
      %v1703 = vld [vmem:[%s6 + $0x570] sm:$0xff]
      %v1704 = vld [vmem:[%s6 + $0x578] sm:$0xff]
      %v1705 = vld [vmem:[%s6 + $0x580] sm:$0xff]
      %v1706 = vld [vmem:[%s6 + $0x588] sm:$0xff]
      %v1707 = vld [vmem:[%s6 + $0x590] sm:$0xff]
      %v1708 = vld [vmem:[%s6 + $0x598] sm:$0xff]
      %v1709 = vld [vmem:[%s6 + $0x5a0] sm:$0xff]
      %v1710 = vld [vmem:[%s6 + $0x5a8] sm:$0xff]
      %v1711 = vld [vmem:[%s6 + $0x5b0] sm:$0xff]
      %v1712 = vld [vmem:[%s6 + $0x5b8] sm:$0xff]
      %v1713 = vld [vmem:[%s6 + $0x5c0] sm:$0xff]
      %v1714 = vld [vmem:[%s6 + $0x5c8] sm:$0xff]
      %v1715 = vld [vmem:[%s6 + $0x5d0] sm:$0xff]
      %v1716 = vld [vmem:[%s6 + $0x5d8] sm:$0xff]
      %v1717 = vld [vmem:[%s6 + $0x5e0] sm:$0xff]
      %v1718 = vld [vmem:[%s6 + $0x5e8] sm:$0xff]
      %v1719 = vld [vmem:[%s6 + $0x5f0] sm:$0xff]
      %v1720 = vld [vmem:[%s6 + $0x5f8] sm:$0xff]
      %v1721 = vld [vmem:[%s6 + $0x600] sm:$0xff]
      %v1722 = vld [vmem:[%s6 + $0x608] sm:$0xff]
      %v1723 = vld [vmem:[%s6 + $0x610] sm:$0xff]
      %v1724 = vld [vmem:[%s6 + $0x618] sm:$0xff]
      %v1725 = vld [vmem:[%s6 + $0x620] sm:$0xff]
      %v1726 = vld [vmem:[%s6 + $0x628] sm:$0xff]
      %v1727 = vld [vmem:[%s6 + $0x630] sm:$0xff]
      %v1728 = vld [vmem:[%s6 + $0x638] sm:$0xff]
      %v1729 = vld [vmem:[%s7] sm:$0xf]
      %v1730 = vld [vmem:[%s8] sm:$0xff]
      %v1731 = vld [vmem:[%s8 + $0x8] sm:$0xff]
      %v1732 = vld [vmem:[%s8 + $0x10] sm:$0xff]
      %v1733 = vld [vmem:[%s8 + $0x18] sm:$0xff]
      %v1734 = vld [vmem:[%s8 + $0x20] sm:$0xff]
      %v1735 = vld [vmem:[%s8 + $0x28] sm:$0xff]
      %v1736 = vld [vmem:[%s8 + $0x30] sm:$0xff]
      %v1737 = vld [vmem:[%s8 + $0x38] sm:$0xff]
      %v1738 = vld [vmem:[%s8 + $0x40] sm:$0xff]
      %v1739 = vld [vmem:[%s8 + $0x48] sm:$0xff]
      %v1740 = vld [vmem:[%s8 + $0x50] sm:$0xff]
      %v1741 = vld [vmem:[%s8 + $0x58] sm:$0xff]
      %v1742 = vld [vmem:[%s8 + $0x60] sm:$0xff]
      %v1743 = vld [vmem:[%s8 + $0x68] sm:$0xff]
      %v1744 = vld [vmem:[%s8 + $0x70] sm:$0xff]
      %v1745 = vld [vmem:[%s8 + $0x78] sm:$0xff]
      %v1746 = vld [vmem:[%s8 + $0x80] sm:$0xff]
      %v1747 = vld [vmem:[%s8 + $0x88] sm:$0xff]
      %v1748 = vld [vmem:[%s8 + $0x90] sm:$0xff]
      %v1749 = vld [vmem:[%s8 + $0x98] sm:$0xff]
      %v1750 = vld [vmem:[%s8 + $0xa0] sm:$0xff]
      %v1751 = vld [vmem:[%s8 + $0xa8] sm:$0xff]
      %v1752 = vld [vmem:[%s8 + $0xb0] sm:$0xff]
      %v1753 = vld [vmem:[%s8 + $0xb8] sm:$0xff]
      %v1754 = vld [vmem:[%s8 + $0xc0] sm:$0xff]
      %v1755 = vld [vmem:[%s8 + $0xc8] sm:$0xff]
      %v1756 = vld [vmem:[%s8 + $0xd0] sm:$0xff]
      %v1757 = vld [vmem:[%s8 + $0xd8] sm:$0xff]
      %v1758 = vld [vmem:[%s8 + $0xe0] sm:$0xff]
      %v1759 = vld [vmem:[%s8 + $0xe8] sm:$0xff]
      %v1760 = vld [vmem:[%s8 + $0xf0] sm:$0xff]
      %v1761 = vld [vmem:[%s8 + $0xf8] sm:$0xff]
      %v1762 = vld [vmem:[%s8 + $0x100] sm:$0xff]
      %v1763 = vld [vmem:[%s8 + $0x108] sm:$0xff]
      %v1764 = vld [vmem:[%s8 + $0x110] sm:$0xff]
      %v1765 = vld [vmem:[%s8 + $0x118] sm:$0xff]
      %v1766 = vld [vmem:[%s8 + $0x120] sm:$0xff]
      %v1767 = vld [vmem:[%s8 + $0x128] sm:$0xff]
      %v1768 = vld [vmem:[%s8 + $0x130] sm:$0xff]
      %v1769 = vld [vmem:[%s8 + $0x138] sm:$0xff]
      %v1770 = vld [vmem:[%s8 + $0x140] sm:$0xff]
      %v1771 = vld [vmem:[%s8 + $0x148] sm:$0xff]
      %v1772 = vld [vmem:[%s8 + $0x150] sm:$0xff]
      %v1773 = vld [vmem:[%s8 + $0x158] sm:$0xff]
      %v1774 = vld [vmem:[%s8 + $0x160] sm:$0xff]
      %v1775 = vld [vmem:[%s8 + $0x168] sm:$0xff]
      %v1776 = vld [vmem:[%s8 + $0x170] sm:$0xff]
      %v1777 = vld [vmem:[%s8 + $0x178] sm:$0xff]
      %v1778 = vld [vmem:[%s8 + $0x180] sm:$0xff]
      %v1779 = vld [vmem:[%s8 + $0x188] sm:$0xff]
      %v1780 = vld [vmem:[%s8 + $0x190] sm:$0xff]
      %v1781 = vld [vmem:[%s8 + $0x198] sm:$0xff]
      %v1782 = vld [vmem:[%s8 + $0x1a0] sm:$0xff]
      %v1783 = vld [vmem:[%s8 + $0x1a8] sm:$0xff]
      %v1784 = vld [vmem:[%s8 + $0x1b0] sm:$0xff]
      %v1785 = vld [vmem:[%s8 + $0x1b8] sm:$0xff]
      %v1786 = vld [vmem:[%s8 + $0x1c0] sm:$0xff]
      %v1787 = vld [vmem:[%s8 + $0x1c8] sm:$0xff]
      %v1788 = vld [vmem:[%s8 + $0x1d0] sm:$0xff]
      %v1789 = vld [vmem:[%s8 + $0x1d8] sm:$0xff]
      %v1790 = vld [vmem:[%s8 + $0x1e0] sm:$0xff]
      %v1791 = vld [vmem:[%s8 + $0x1e8] sm:$0xff]
      %v1792 = vld [vmem:[%s8 + $0x1f0] sm:$0xff]
      %v1793 = vld [vmem:[%s8 + $0x1f8] sm:$0xff]
      %v1794 = vld [vmem:[%s8 + $0x200] sm:$0xff]
      %v1795 = vld [vmem:[%s8 + $0x208] sm:$0xff]
      %v1796 = vld [vmem:[%s8 + $0x210] sm:$0xff]
      %v1797 = vld [vmem:[%s8 + $0x218] sm:$0xff]
      %v1798 = vld [vmem:[%s8 + $0x220] sm:$0xff]
      %v1799 = vld [vmem:[%s8 + $0x228] sm:$0xff]
      %v1800 = vld [vmem:[%s8 + $0x230] sm:$0xff]
      %v1801 = vld [vmem:[%s8 + $0x238] sm:$0xff]
      %v1802 = vld [vmem:[%s8 + $0x240] sm:$0xff]
      %v1803 = vld [vmem:[%s8 + $0x248] sm:$0xff]
      %v1804 = vld [vmem:[%s8 + $0x250] sm:$0xff]
      %v1805 = vld [vmem:[%s8 + $0x258] sm:$0xff]
      %v1806 = vld [vmem:[%s8 + $0x260] sm:$0xff]
      %v1807 = vld [vmem:[%s8 + $0x268] sm:$0xff]
      %v1808 = vld [vmem:[%s8 + $0x270] sm:$0xff]
      %v1809 = vld [vmem:[%s8 + $0x278] sm:$0xff]
      %v1810 = vld [vmem:[%s8 + $0x280] sm:$0xff]
      %v1811 = vld [vmem:[%s8 + $0x288] sm:$0xff]
      %v1812 = vld [vmem:[%s8 + $0x290] sm:$0xff]
      %v1813 = vld [vmem:[%s8 + $0x298] sm:$0xff]
      %v1814 = vld [vmem:[%s8 + $0x2a0] sm:$0xff]
      %v1815 = vld [vmem:[%s8 + $0x2a8] sm:$0xff]
      %v1816 = vld [vmem:[%s8 + $0x2b0] sm:$0xff]
      %v1817 = vld [vmem:[%s8 + $0x2b8] sm:$0xff]
      %v1818 = vld [vmem:[%s8 + $0x2c0] sm:$0xff]
      %v1819 = vld [vmem:[%s8 + $0x2c8] sm:$0xff]
      %v1820 = vld [vmem:[%s8 + $0x2d0] sm:$0xff]
      %v1821 = vld [vmem:[%s8 + $0x2d8] sm:$0xff]
      %v1822 = vld [vmem:[%s8 + $0x2e0] sm:$0xff]
      %v1823 = vld [vmem:[%s8 + $0x2e8] sm:$0xff]
      %v1824 = vld [vmem:[%s8 + $0x2f0] sm:$0xff]
      %v1825 = vld [vmem:[%s8 + $0x2f8] sm:$0xff]
      %v1826 = vld [vmem:[%s8 + $0x300] sm:$0xff]
      %v1827 = vld [vmem:[%s8 + $0x308] sm:$0xff]
      %v1828 = vld [vmem:[%s8 + $0x310] sm:$0xff]
      %v1829 = vld [vmem:[%s8 + $0x318] sm:$0xff]
      %v1830 = vld [vmem:[%s8 + $0x320] sm:$0xff]
      %v1831 = vld [vmem:[%s8 + $0x328] sm:$0xff]
      %v1832 = vld [vmem:[%s8 + $0x330] sm:$0xff]
      %v1833 = vld [vmem:[%s8 + $0x338] sm:$0xff]
      %v1834 = vld [vmem:[%s8 + $0x340] sm:$0xff]
      %v1835 = vld [vmem:[%s8 + $0x348] sm:$0xff]
      %v1836 = vld [vmem:[%s8 + $0x350] sm:$0xff]
      %v1837 = vld [vmem:[%s8 + $0x358] sm:$0xff]
      %v1838 = vld [vmem:[%s8 + $0x360] sm:$0xff]
      %v1839 = vld [vmem:[%s8 + $0x368] sm:$0xff]
      %v1840 = vld [vmem:[%s8 + $0x370] sm:$0xff]
      %v1841 = vld [vmem:[%s8 + $0x378] sm:$0xff]
      %v1842 = vld [vmem:[%s8 + $0x380] sm:$0xff]
      %v1843 = vld [vmem:[%s8 + $0x388] sm:$0xff]
      %v1844 = vld [vmem:[%s8 + $0x390] sm:$0xff]
      %v1845 = vld [vmem:[%s8 + $0x398] sm:$0xff]
      %v1846 = vld [vmem:[%s8 + $0x3a0] sm:$0xff]
      %v1847 = vld [vmem:[%s8 + $0x3a8] sm:$0xff]
      %v1848 = vld [vmem:[%s8 + $0x3b0] sm:$0xff]
      %v1849 = vld [vmem:[%s8 + $0x3b8] sm:$0xff]
      %v1850 = vld [vmem:[%s8 + $0x3c0] sm:$0xff]
      %v1851 = vld [vmem:[%s8 + $0x3c8] sm:$0xff]
      %v1852 = vld [vmem:[%s8 + $0x3d0] sm:$0xff]
      %v1853 = vld [vmem:[%s8 + $0x3d8] sm:$0xff]
      %v1854 = vld [vmem:[%s8 + $0x3e0] sm:$0xff]
      %v1855 = vld [vmem:[%s8 + $0x3e8] sm:$0xff]
      %v1856 = vld [vmem:[%s8 + $0x3f0] sm:$0xff]
      %v1857 = vld [vmem:[%s8 + $0x3f8] sm:$0xff]
      %v1858 = vld [vmem:[%s8 + $0x400] sm:$0xff]
      %v1859 = vld [vmem:[%s8 + $0x408] sm:$0xff]
      %v1860 = vld [vmem:[%s8 + $0x410] sm:$0xff]
      %v1861 = vld [vmem:[%s8 + $0x418] sm:$0xff]
      %v1862 = vld [vmem:[%s8 + $0x420] sm:$0xff]
      %v1863 = vld [vmem:[%s8 + $0x428] sm:$0xff]
      %v1864 = vld [vmem:[%s8 + $0x430] sm:$0xff]
      %v1865 = vld [vmem:[%s8 + $0x438] sm:$0xff]
      %v1866 = vld [vmem:[%s8 + $0x440] sm:$0xff]
      %v1867 = vld [vmem:[%s8 + $0x448] sm:$0xff]
      %v1868 = vld [vmem:[%s8 + $0x450] sm:$0xff]
      %v1869 = vld [vmem:[%s8 + $0x458] sm:$0xff]
      %v1870 = vld [vmem:[%s8 + $0x460] sm:$0xff]
      %v1871 = vld [vmem:[%s8 + $0x468] sm:$0xff]
      %v1872 = vld [vmem:[%s8 + $0x470] sm:$0xff]
      %v1873 = vld [vmem:[%s8 + $0x478] sm:$0xff]
      %v1874 = vld [vmem:[%s8 + $0x480] sm:$0xff]
      %v1875 = vld [vmem:[%s8 + $0x488] sm:$0xff]
      %v1876 = vld [vmem:[%s8 + $0x490] sm:$0xff]
      %v1877 = vld [vmem:[%s8 + $0x498] sm:$0xff]
      %v1878 = vld [vmem:[%s8 + $0x4a0] sm:$0xff]
      %v1879 = vld [vmem:[%s8 + $0x4a8] sm:$0xff]
      %v1880 = vld [vmem:[%s8 + $0x4b0] sm:$0xff]
      %v1881 = vld [vmem:[%s8 + $0x4b8] sm:$0xff]
      %v1882 = vld [vmem:[%s8 + $0x4c0] sm:$0xff]
      %v1883 = vld [vmem:[%s8 + $0x4c8] sm:$0xff]
      %v1884 = vld [vmem:[%s8 + $0x4d0] sm:$0xff]
      %v1885 = vld [vmem:[%s8 + $0x4d8] sm:$0xff]
      %v1886 = vld [vmem:[%s8 + $0x4e0] sm:$0xff]
      %v1887 = vld [vmem:[%s8 + $0x4e8] sm:$0xff]
      %v1888 = vld [vmem:[%s8 + $0x4f0] sm:$0xff]
      %v1889 = vld [vmem:[%s8 + $0x4f8] sm:$0xff]
      %v1890 = vld [vmem:[%s8 + $0x500] sm:$0xff]
      %v1891 = vld [vmem:[%s8 + $0x508] sm:$0xff]
      %v1892 = vld [vmem:[%s8 + $0x510] sm:$0xff]
      %v1893 = vld [vmem:[%s8 + $0x518] sm:$0xff]
      %v1894 = vld [vmem:[%s8 + $0x520] sm:$0xff]
      %v1895 = vld [vmem:[%s8 + $0x528] sm:$0xff]
      %v1896 = vld [vmem:[%s8 + $0x530] sm:$0xff]
      %v1897 = vld [vmem:[%s8 + $0x538] sm:$0xff]
      %v1898 = vld [vmem:[%s8 + $0x540] sm:$0xff]
      %v1899 = vld [vmem:[%s8 + $0x548] sm:$0xff]
      %v1900 = vld [vmem:[%s8 + $0x550] sm:$0xff]
      %v1901 = vld [vmem:[%s8 + $0x558] sm:$0xff]
      %v1902 = vld [vmem:[%s8 + $0x560] sm:$0xff]
      %v1903 = vld [vmem:[%s8 + $0x568] sm:$0xff]
      %v1904 = vld [vmem:[%s8 + $0x570] sm:$0xff]
      %v1905 = vld [vmem:[%s8 + $0x578] sm:$0xff]
      %v1906 = vld [vmem:[%s8 + $0x580] sm:$0xff]
      %v1907 = vld [vmem:[%s8 + $0x588] sm:$0xff]
      %v1908 = vld [vmem:[%s8 + $0x590] sm:$0xff]
      %v1909 = vld [vmem:[%s8 + $0x598] sm:$0xff]
      %v1910 = vld [vmem:[%s8 + $0x5a0] sm:$0xff]
      %v1911 = vld [vmem:[%s8 + $0x5a8] sm:$0xff]
      %v1912 = vld [vmem:[%s8 + $0x5b0] sm:$0xff]
      %v1913 = vld [vmem:[%s8 + $0x5b8] sm:$0xff]
      %v1914 = vld [vmem:[%s8 + $0x5c0] sm:$0xff]
      %v1915 = vld [vmem:[%s8 + $0x5c8] sm:$0xff]
      %v1916 = vld [vmem:[%s8 + $0x5d0] sm:$0xff]
      %v1917 = vld [vmem:[%s8 + $0x5d8] sm:$0xff]
      %v1918 = vld [vmem:[%s8 + $0x5e0] sm:$0xff]
      %v1919 = vld [vmem:[%s8 + $0x5e8] sm:$0xff]
      %v1920 = vld [vmem:[%s8 + $0x5f0] sm:$0xff]
      %v1921 = vld [vmem:[%s8 + $0x5f8] sm:$0xff]
      %v1922 = vld [vmem:[%s8 + $0x600] sm:$0xff]
      %v1923 = vld [vmem:[%s8 + $0x608] sm:$0xff]
      %v1924 = vld [vmem:[%s8 + $0x610] sm:$0xff]
      %v1925 = vld [vmem:[%s8 + $0x618] sm:$0xff]
      %v1926 = vld [vmem:[%s8 + $0x620] sm:$0xff]
      %v1927 = vld [vmem:[%s8 + $0x628] sm:$0xff]
      %v1928 = vld [vmem:[%s8 + $0x630] sm:$0xff]
      %v1929 = vld [vmem:[%s8 + $0x638] sm:$0xff]
      %v1930 = vld [vmem:[%s8 + $0x640] sm:$0xff]
      %v1931 = vld [vmem:[%s8 + $0x648] sm:$0xff]
      %v1932 = vld [vmem:[%s8 + $0x650] sm:$0xff]
      %v1933 = vld [vmem:[%s8 + $0x658] sm:$0xff]
      %v1934 = vld [vmem:[%s8 + $0x660] sm:$0xff]
      %v1935 = vld [vmem:[%s8 + $0x668] sm:$0xff]
      %v1936 = vld [vmem:[%s8 + $0x670] sm:$0xff]
      %v1937 = vld [vmem:[%s8 + $0x678] sm:$0xff]
      %v1938 = vld [vmem:[%s8 + $0x680] sm:$0xff]
      %v1939 = vld [vmem:[%s8 + $0x688] sm:$0xff]
      %v1940 = vld [vmem:[%s8 + $0x690] sm:$0xff]
      %v1941 = vld [vmem:[%s8 + $0x698] sm:$0xff]
      %v1942 = vld [vmem:[%s8 + $0x6a0] sm:$0xff]
      %v1943 = vld [vmem:[%s8 + $0x6a8] sm:$0xff]
      %v1944 = vld [vmem:[%s8 + $0x6b0] sm:$0xff]
      %v1945 = vld [vmem:[%s8 + $0x6b8] sm:$0xff]
      %v1946 = vld [vmem:[%s8 + $0x6c0] sm:$0xff]
      %v1947 = vld [vmem:[%s8 + $0x6c8] sm:$0xff]
      %v1948 = vld [vmem:[%s8 + $0x6d0] sm:$0xff]
      %v1949 = vld [vmem:[%s8 + $0x6d8] sm:$0xff]
      %v1950 = vld [vmem:[%s8 + $0x6e0] sm:$0xff]
      %v1951 = vld [vmem:[%s8 + $0x6e8] sm:$0xff]
      %v1952 = vld [vmem:[%s8 + $0x6f0] sm:$0xff]
      %v1953 = vld [vmem:[%s8 + $0x6f8] sm:$0xff]
      %v1954 = vld [vmem:[%s8 + $0x700] sm:$0xff]
      %v1955 = vld [vmem:[%s8 + $0x708] sm:$0xff]
      %v1956 = vld [vmem:[%s8 + $0x710] sm:$0xff]
      %v1957 = vld [vmem:[%s8 + $0x718] sm:$0xff]
      %v1958 = vld [vmem:[%s8 + $0x720] sm:$0xff]
      %v1959 = vld [vmem:[%s8 + $0x728] sm:$0xff]
      %v1960 = vld [vmem:[%s8 + $0x730] sm:$0xff]
      %v1961 = vld [vmem:[%s8 + $0x738] sm:$0xff]
      %v1962 = vld [vmem:[%s8 + $0x740] sm:$0xff]
      %v1963 = vld [vmem:[%s8 + $0x748] sm:$0xff]
      %v1964 = vld [vmem:[%s8 + $0x750] sm:$0xff]
      %v1965 = vld [vmem:[%s8 + $0x758] sm:$0xff]
      %v1966 = vld [vmem:[%s8 + $0x760] sm:$0xff]
      %v1967 = vld [vmem:[%s8 + $0x768] sm:$0xff]
      %v1968 = vld [vmem:[%s8 + $0x770] sm:$0xff]
      %v1969 = vld [vmem:[%s8 + $0x778] sm:$0xff]
      %v1970 = vld [vmem:[%s8 + $0x780] sm:$0xff]
      %v1971 = vld [vmem:[%s8 + $0x788] sm:$0xff]
      %v1972 = vld [vmem:[%s8 + $0x790] sm:$0xff]
      %v1973 = vld [vmem:[%s8 + $0x798] sm:$0xff]
      %v1974 = vld [vmem:[%s8 + $0x7a0] sm:$0xff]
      %v1975 = vld [vmem:[%s8 + $0x7a8] sm:$0xff]
      %v1976 = vld [vmem:[%s8 + $0x7b0] sm:$0xff]
      %v1977 = vld [vmem:[%s8 + $0x7b8] sm:$0xff]
      %v1978 = vld [vmem:[%s8 + $0x7c0] sm:$0xff]
      %v1979 = vld [vmem:[%s8 + $0x7c8] sm:$0xff]
      %v1980 = vld [vmem:[%s8 + $0x7d0] sm:$0xff]
      %v1981 = vld [vmem:[%s8 + $0x7d8] sm:$0xff]
      %v1982 = vld [vmem:[%s8 + $0x7e0] sm:$0xff]
      %v1983 = vld [vmem:[%s8 + $0x7e8] sm:$0xff]
      %v1984 = vld [vmem:[%s8 + $0x7f0] sm:$0xff]
      %v1985 = vld [vmem:[%s8 + $0x7f8] sm:$0xff]
      %v1986 = vld [vmem:[%s9] sm:$0xf]
      %s1987 = sld [smem:[#allocation3 + %s29]]
      %v1988 = vstv %s1987
      %vm1989 = vcmp.lt.s32.totalorder %v1452, %v1988
      %vm1990 = vcmp.lt.s32.totalorder %v1453, %v1988
      %vm1991 = vcmp.lt.s32.totalorder %v1454, %v1988
      %vm1992 = vcmp.lt.s32.totalorder %v1455, %v1988
      %vm1993 = vcmp.lt.s32.totalorder %v1456, %v1988
      %vm1994 = vcmp.lt.s32.totalorder %v1457, %v1988
      %vm1995 = vcmp.lt.s32.totalorder %v1458, %v1988
      %vm1996 = vcmp.lt.s32.totalorder %v1459, %v1988
      %v1997 = vsel %vm1989, 0.0, -1e+09
      %v1998 = vsel %vm1990, 0.0, -1e+09
      %v1999 = vsel %vm1991, 0.0, -1e+09
      %v2000 = vsel %vm1992, 0.0, -1e+09
      %v2001 = vsel %vm1993, 0.0, -1e+09
      %v2002 = vsel %vm1994, 0.0, -1e+09
      %v2003 = vsel %vm1995, 0.0, -1e+09
      %v2004 = vsel %vm1996, 0.0, -1e+09
      %v2005 = vadd.f32 %v1997, %v1463
      %v2006 = vadd.f32 %v1998, %v1463
      %v2007 = vadd.f32 %v1999, %v1463
      %v2008 = vadd.f32 %v2000, %v1463
      %v2009 = vadd.f32 %v2001, %v1463
      %v2010 = vadd.f32 %v2002, %v1463
      %v2011 = vadd.f32 %v2003, %v1463
      %v2012 = vadd.f32 %v2004, %v1463
      %2021 = vrot.lane.b32.xlu0 %v1195, 64
      %v2022 = vpop.permute.xlu0 %2021
      %2023 = vrot.lane.b32.xlu0 %v1201, 64
      %v2024 = vpop.permute.xlu0 %2023
      %2025 = vrot.lane.b32.xlu0 %v1207, 64
      %v2026 = vpop.permute.xlu0 %2025
      %2027 = vrot.lane.b32.xlu0 %v1213, 64
      %v2028 = vpop.permute.xlu0 %2027
      %2029 = vrot.lane.b32.xlu0 %v1219, 64
      %v2030 = vpop.permute.xlu0 %2029
      %2031 = vrot.lane.b32.xlu0 %v1225, 64
      %v2032 = vpop.permute.xlu0 %2031
      %2033 = vrot.lane.b32.xlu0 %v1231, 64
      %v2034 = vpop.permute.xlu0 %2033
      %2035 = vrot.lane.b32.xlu0 %v1237, 64
      %v2036 = vpop.permute.xlu0 %2035
      %vm2037 = vcmask 523264
      %v2038 = vsel %vm2037, %v1195, 0
      %v2040 = vsel %vm2037, %v1201, 0
      %v2042 = vsel %vm2037, %v1207, 0
      %v2044 = vsel %vm2037, %v1213, 0
      %v2046 = vsel %vm2037, %v1219, 0
      %v2048 = vsel %vm2037, %v1225, 0
      %v2050 = vsel %vm2037, %v1231, 0
      %v2052 = vsel %vm2037, %v1237, 0
      %v2054 = vsel %vm2037, %v2022, 0
      %v2056 = vsel %vm2037, %v2024, 0
      %v2058 = vsel %vm2037, %v2026, 0
      %v2060 = vsel %vm2037, %v2028, 0
      %v2062 = vsel %vm2037, %v2030, 0
      %v2064 = vsel %vm2037, %v2032, 0
      %v2066 = vsel %vm2037, %v2034, 0
      %v2068 = vsel %vm2037, %v2036, 0
      %2070 = vmatprep.subr.mxu0 0.0
      %2071 = vmatpush1.xpose.msra.mxu0 %v2054
      %2072 = vmatprep.subr.mxu0 0.0
      %2073 = vmatpush1.xpose.msra.mxu0 %v2056
      %2074 = vmatprep.subr.mxu0 0.0
      %2075 = vmatpush1.xpose.msra.mxu0 %v2058
      %2076 = vmatprep.subr.mxu0 0.0
      %2077 = vmatpush1.xpose.msra.mxu0 %v2060
      %2078 = vmatprep.subr.mxu0 0.0
      %2079 = vmatpush1.xpose.msra.mxu0 %v2062
      %2080 = vmatprep.subr.mxu0 0.0
      %2081 = vmatpush1.xpose.msra.mxu0 %v2064
      %2082 = vmatprep.subr.mxu0 0.0
      %2083 = vmatpush1.xpose.msra.mxu0 %v2066
      %2084 = vmatprep.subr.mxu0 0.0
      %2085 = vmatpush1.xpose.msra.mxu0 %v2068
      %2086 = vmatprep.subr.mxu0 0.0
      %2087 = vmatpush1.xpose.msra.mxu0 0.0
      %2088 = vmatprep.subr.mxu0 0.0
      %2089 = vmatpush1.xpose.msra.mxu0 0.0
      %2090 = vmatprep.subr.mxu0 0.0
      %2091 = vmatpush1.xpose.msra.mxu0 0.0
      %2092 = vmatprep.subr.mxu0 0.0
      %2093 = vmatpush1.xpose.msra.mxu0 0.0
      %2094 = vmatprep.subr.mxu0 0.0
      %2095 = vmatpush1.xpose.msra.mxu0 0.0
      %2096 = vmatprep.subr.mxu0 0.0
      %2097 = vmatpush1.xpose.msra.mxu0 0.0
      %2098 = vmatprep.subr.mxu0 0.0
      %2099 = vmatpush1.xpose.msra.mxu0 0.0
      %2100 = vmatprep.subr.mxu0 0.0
      %2101 = vmatpush1.xpose.msra.mxu0 0.0
      %2102 = vmatprep.subr.mxu0 0.0
      %2103 = vmatpush1.xpose.msra.mxu0 0.0
      %2104 = vmatprep.subr.mxu0 0.0
      %2105 = vmatpush1.xpose.msra.mxu0 0.0
      %2106 = vmatprep.subr.mxu0 0.0
      %2107 = vmatpush1.xpose.msra.mxu0 0.0
      %2108 = vmatprep.subr.mxu0 0.0
      %2109 = vmatpush1.xpose.msra.mxu0 0.0
      %2110 = vmatprep.subr.mxu0 0.0
      %2111 = vmatpush1.xpose.msra.mxu0 0.0
      %2112 = vmatprep.subr.mxu0 0.0
      %2113 = vmatpush1.xpose.msra.mxu0 0.0
      %2114 = vmatprep.subr.mxu0 0.0
      %2115 = vmatpush1.xpose.msra.mxu0 0.0
      %2116 = vmatprep.subr.mxu0 0.0
      %2117 = vmatpush1.xpose.msra.mxu0 0.0
      %2118 = vmatprep.subr.mxu0 0.0
      %2119 = vmatpush1.xpose.msra.mxu0 0.0
      %2120 = vmatprep.subr.mxu0 0.0
      %2121 = vmatpush1.xpose.msra.mxu0 0.0
      %2122 = vmatprep.subr.mxu0 0.0
      %2123 = vmatpush1.xpose.msra.mxu0 0.0
      %2124 = vmatprep.subr.mxu0 0.0
      %2125 = vmatpush1.xpose.msra.mxu0 0.0
      %2126 = vmatprep.subr.mxu0 0.0
      %2127 = vmatpush1.xpose.msra.mxu0 0.0
      %2128 = vmatprep.subr.mxu0 0.0
      %2129 = vmatpush1.xpose.msra.mxu0 0.0
      %2130 = vmatprep.subr.mxu0 0.0
      %2131 = vmatpush1.xpose.msra.mxu0 0.0
      %2132 = vmatprep.subr.mxu0 0.0
      %2133 = vmatpush1.xpose.msra.mxu0 0.0
      %2134 = vmatprep.mubr.f32.mxu0 0.0
      %2135 = vmatmul.mubr.f32.gmra.mrb[0].mxu0 %v2038
      %v2136 = vpop.f32.mrb[0].mxu0
      %v2137 = vadd.f32 0.0, %v2136
      %v2138 = vpop.f32.mrb[0].mxu0
      %2139 = vmatprep.mubr.f32.mxu0 0.0
      %2140 = vmatmul.mubr.f32.gmra.mrb[0].mxu0 %v2040
      %v2141 = vpop.f32.mrb[0].mxu0
      %v2142 = vadd.f32 0.0, %v2141
      %v2143 = vpop.f32.mrb[0].mxu0
      %2144 = vmatprep.mubr.f32.mxu0 0.0
      %2145 = vmatmul.mubr.f32.gmra.mrb[0].mxu0 %v2042
      %v2146 = vpop.f32.mrb[0].mxu0
      %v2147 = vadd.f32 0.0, %v2146
      %v2148 = vpop.f32.mrb[0].mxu0
      %2149 = vmatprep.mubr.f32.mxu0 0.0
      %2150 = vmatmul.mubr.f32.gmra.mrb[0].mxu0 %v2044
      %v2151 = vpop.f32.mrb[0].mxu0
      %v2152 = vadd.f32 0.0, %v2151
      %v2153 = vpop.f32.mrb[0].mxu0
      %2154 = vmatprep.mubr.f32.mxu0 0.0
      %2155 = vmatmul.mubr.f32.gmra.mrb[0].mxu0 %v2046
      %v2156 = vpop.f32.mrb[0].mxu0
      %v2157 = vadd.f32 0.0, %v2156
      %v2158 = vpop.f32.mrb[0].mxu0
      %2159 = vmatprep.mubr.f32.mxu0 0.0
      %2160 = vmatmul.mubr.f32.gmra.mrb[0].mxu0 %v2048
      %v2161 = vpop.f32.mrb[0].mxu0
      %v2162 = vadd.f32 0.0, %v2161
      %v2163 = vpop.f32.mrb[0].mxu0
      %2164 = vmatprep.mubr.f32.mxu0 0.0
      %2165 = vmatmul.mubr.f32.gmra.mrb[0].mxu0 %v2050
      %v2166 = vpop.f32.mrb[0].mxu0
      %v2167 = vadd.f32 0.0, %v2166
      %v2168 = vpop.f32.mrb[0].mxu0
      %2169 = vmatprep.mubr.f32.mxu0 0.0
      %2170 = vmatmul.mubr.f32.gmra.mrb[0].mxu0 %v2052
      %v2171 = vpop.f32.mrb[0].mxu0
      %v2172 = vadd.f32 0.0, %v2171
      %v2173 = vpop.f32.mrb[0].mxu0
      %2174 = vdwg.mxu0
      %v2175 = vmul.f32 %v2137, 0.125
      %v2176 = vmul.f32 %v2142, 0.125
      %v2177 = vmul.f32 %v2147, 0.125
      %v2178 = vmul.f32 %v2152, 0.125
      %v2179 = vmul.f32 %v2157, 0.125
      %v2180 = vmul.f32 %v2162, 0.125
      %v2181 = vmul.f32 %v2167, 0.125
      %v2182 = vmul.f32 %v2172, 0.125
      %v2183 = vadd.f32 %v2175, %v2005
      %v2184 = vadd.f32 %v2176, %v2006
      %v2185 = vadd.f32 %v2177, %v2007
      %v2186 = vadd.f32 %v2178, %v2008
      %v2187 = vadd.f32 %v2179, %v2009
      %v2188 = vadd.f32 %v2180, %v2010
      %v2189 = vadd.f32 %v2181, %v2011
      %v2190 = vadd.f32 %v2182, %v2012
      %v2191 = vsel %vm2037, %v2183, -inf
      %2192 = vmax.xlane.f32.xlu0 %v2191
      %v2193 = vpop.xlane.xlu0 %2192
      %v2194 = vsel %vm2037, %v2184, -inf
      %2195 = vmax.xlane.f32.xlu0 %v2194
      %v2196 = vpop.xlane.xlu0 %2195
      %v2197 = vsel %vm2037, %v2185, -inf
      %2198 = vmax.xlane.f32.xlu0 %v2197
      %v2199 = vpop.xlane.xlu0 %2198
      %v2200 = vsel %vm2037, %v2186, -inf
      %2201 = vmax.xlane.f32.xlu0 %v2200
      %v2202 = vpop.xlane.xlu0 %2201
      %v2203 = vsel %vm2037, %v2187, -inf
      %2204 = vmax.xlane.f32.xlu0 %v2203
      %v2205 = vpop.xlane.xlu0 %2204
      %v2206 = vsel %vm2037, %v2188, -inf
      %2207 = vmax.xlane.f32.xlu0 %v2206
      %v2208 = vpop.xlane.xlu0 %2207
      %v2209 = vsel %vm2037, %v2189, -inf
      %2210 = vmax.xlane.f32.xlu0 %v2209
      %v2211 = vpop.xlane.xlu0 %2210
      %v2212 = vsel %vm2037, %v2190, -inf
      %2213 = vmax.xlane.f32.xlu0 %v2212
      %v2214 = vpop.xlane.xlu0 %2213
      %v2215 = vsub.f32 %v2183, %v2193
      %v2216 = vsub.f32 %v2184, %v2196
      %v2217 = vsub.f32 %v2185, %v2199
      %v2218 = vsub.f32 %v2186, %v2202
      %v2219 = vsub.f32 %v2187, %v2205
      %v2220 = vsub.f32 %v2188, %v2208
      %v2221 = vsub.f32 %v2189, %v2211
      %v2222 = vsub.f32 %v2190, %v2214
      %v2223 = vmul.f32 %v2215, 1.442695
      %v2224 = vpow.pop %v2223
      %v2225 = vmul.f32 %v2216, 1.442695
      %v2226 = vpow.pop %v2225
      %v2227 = vmul.f32 %v2217, 1.442695
      %v2228 = vpow.pop %v2227
      %v2229 = vmul.f32 %v2218, 1.442695
      %v2230 = vpow.pop %v2229
      %v2231 = vmul.f32 %v2219, 1.442695
      %v2232 = vpow.pop %v2231
      %v2233 = vmul.f32 %v2220, 1.442695
      %v2234 = vpow.pop %v2233
      %v2235 = vmul.f32 %v2221, 1.442695
      %v2236 = vpow.pop %v2235
      %v2237 = vmul.f32 %v2222, 1.442695
      %v2238 = vpow.pop %v2237
      %v2239 = vsel %vm2037, %v2224, 0.0
      %2240 = vadd.xlane.f32.xlu0 %v2239
      %v2241 = vpop.xlane.xlu0 %2240
      %v2242 = vsel %vm2037, %v2226, 0.0
      %2243 = vadd.xlane.f32.xlu0 %v2242
      %v2244 = vpop.xlane.xlu0 %2243
      %v2245 = vsel %vm2037, %v2228, 0.0
      %2246 = vadd.xlane.f32.xlu0 %v2245
      %v2247 = vpop.xlane.xlu0 %2246
      %v2248 = vsel %vm2037, %v2230, 0.0
      %2249 = vadd.xlane.f32.xlu0 %v2248
      %v2250 = vpop.xlane.xlu0 %2249
      %v2251 = vsel %vm2037, %v2232, 0.0
      %2252 = vadd.xlane.f32.xlu0 %v2251
      %v2253 = vpop.xlane.xlu0 %2252
      %v2254 = vsel %vm2037, %v2234, 0.0
      %2255 = vadd.xlane.f32.xlu0 %v2254
      %v2256 = vpop.xlane.xlu0 %2255
      %v2257 = vsel %vm2037, %v2236, 0.0
      %2258 = vadd.xlane.f32.xlu0 %v2257
      %v2259 = vpop.xlane.xlu0 %2258
      %v2260 = vsel %vm2037, %v2238, 0.0
      %2261 = vadd.xlane.f32.xlu0 %v2260
      %v2262 = vpop.xlane.xlu0 %2261
      %v2263 = vrcp.pop %v2241
      %v2264 = vrcp.pop %v2244
      %v2265 = vrcp.pop %v2247
      %v2266 = vrcp.pop %v2250
      %v2267 = vrcp.pop %v2253
      %v2268 = vrcp.pop %v2256
      %v2269 = vrcp.pop %v2259
      %v2270 = vrcp.pop %v2262
      %v2271 = vmul.f32 %v2224, %v2263
      %v2272 = vmul.f32 %v2226, %v2264
      %v2273 = vmul.f32 %v2228, %v2265
      %v2274 = vmul.f32 %v2230, %v2266
      %v2275 = vmul.f32 %v2232, %v2267
      %v2276 = vmul.f32 %v2234, %v2268
      %v2277 = vmul.f32 %v2236, %v2269
      %v2278 = vmul.f32 %v2238, %v2270
      %v2280 = vsel %vm2037, %v2271, 0
      %v2283 = vsel %vm2037, %v2272, 0
      %v2286 = vsel %vm2037, %v2273, 0
      %v2289 = vsel %vm2037, %v2274, 0
      %v2292 = vsel %vm2037, %v2275, 0
      %v2295 = vsel %vm2037, %v2276, 0
      %v2298 = vsel %vm2037, %v2277, 0
      %v2301 = vsel %vm2037, %v2278, 0
      %2303 = vmatprep.subr.mxu0 0.0
      %2304 = vmatpush1.msra.mxu0 %v1197
      %2305 = vmatprep.subr.mxu0 0.0
      %2306 = vmatpush1.msra.mxu0 %v1203
      %2307 = vmatprep.subr.mxu0 0.0
      %2308 = vmatpush1.msra.mxu0 %v1209
      %2309 = vmatprep.subr.mxu0 0.0
      %2310 = vmatpush1.msra.mxu0 %v1215
      %2311 = vmatprep.subr.mxu0 0.0
      %2312 = vmatpush1.msra.mxu0 %v1221
      %2313 = vmatprep.subr.mxu0 0.0
      %2314 = vmatpush1.msra.mxu0 %v1227
      %2315 = vmatprep.subr.mxu0 0.0
      %2316 = vmatpush1.msra.mxu0 %v1233
      %2317 = vmatprep.subr.mxu0 0.0
      %2318 = vmatpush1.msra.mxu0 %v1239
      %2319 = vmatprep.subr.mxu0 0.0
      %2320 = vmatpush1.msra.mxu0 0.0
      %2321 = vmatprep.subr.mxu0 0.0
      %2322 = vmatpush1.msra.mxu0 0.0
      %2323 = vmatprep.subr.mxu0 0.0
      %2324 = vmatpush1.msra.mxu0 0.0
      %2325 = vmatprep.subr.mxu0 0.0
      %2326 = vmatpush1.msra.mxu0 0.0
      %2327 = vmatprep.subr.mxu0 0.0
      %2328 = vmatpush1.msra.mxu0 0.0
      %2329 = vmatprep.subr.mxu0 0.0
      %2330 = vmatpush1.msra.mxu0 0.0
      %2331 = vmatprep.subr.mxu0 0.0
      %2332 = vmatpush1.msra.mxu0 0.0
      %2333 = vmatprep.subr.mxu0 0.0
      %2334 = vmatpush1.msra.mxu0 0.0
      %2335 = vmatprep.subr.mxu0 0.0
      %2336 = vmatpush1.msra.mxu0 0.0
      %2337 = vmatprep.subr.mxu0 0.0
      %2338 = vmatpush1.msra.mxu0 0.0
      %2339 = vmatprep.subr.mxu0 0.0
      %2340 = vmatpush1.msra.mxu0 0.0
      %2341 = vmatprep.subr.mxu0 0.0
      %2342 = vmatpush1.msra.mxu0 0.0
      %2343 = vmatprep.subr.mxu0 0.0
      %2344 = vmatpush1.msra.mxu0 0.0
      %2345 = vmatprep.subr.mxu0 0.0
      %2346 = vmatpush1.msra.mxu0 0.0
      %2347 = vmatprep.subr.mxu0 0.0
      %2348 = vmatpush1.msra.mxu0 0.0
      %2349 = vmatprep.subr.mxu0 0.0
      %2350 = vmatpush1.msra.mxu0 0.0
      %2351 = vmatprep.subr.mxu0 0.0
      %2352 = vmatpush1.msra.mxu0 0.0
      %2353 = vmatprep.subr.mxu0 0.0
      %2354 = vmatpush1.msra.mxu0 0.0
      %2355 = vmatprep.subr.mxu0 0.0
      %2356 = vmatpush1.msra.mxu0 0.0
      %2357 = vmatprep.subr.mxu0 0.0
      %2358 = vmatpush1.msra.mxu0 0.0
      %2359 = vmatprep.subr.mxu0 0.0
      %2360 = vmatpush1.msra.mxu0 0.0
      %2361 = vmatprep.subr.mxu0 0.0
      %2362 = vmatpush1.msra.mxu0 0.0
      %2363 = vmatprep.subr.mxu0 0.0
      %2364 = vmatpush1.msra.mxu0 0.0
      %2365 = vmatprep.subr.mxu0 0.0
      %2366 = vmatpush1.msra.mxu0 0.0
      %2367 = vmatprep.mubr.f32.mxu0 0.0
      %2368 = vmatmul.mubr.f32.gmra.mrb[0].mxu0 %v2280
      %v2369 = vpop.f32.mrb[0].mxu0
      %v2370 = vadd.f32 0.0, %v2369
      %v2371 = vpop.f32.mrb[0].mxu0
      %2372 = vmatprep.mubr.f32.mxu0 0.0
      %2373 = vmatmul.mubr.f32.gmra.mrb[0].mxu0 %v2283
      %v2374 = vpop.f32.mrb[0].mxu0
      %v2375 = vadd.f32 0.0, %v2374
      %v2376 = vpop.f32.mrb[0].mxu0
      %2377 = vmatprep.mubr.f32.mxu0 0.0
      %2378 = vmatmul.mubr.f32.gmra.mrb[0].mxu0 %v2286
      %v2379 = vpop.f32.mrb[0].mxu0
      %v2380 = vadd.f32 0.0, %v2379
      %v2381 = vpop.f32.mrb[0].mxu0
      %2382 = vmatprep.mubr.f32.mxu0 0.0
      %2383 = vmatmul.mubr.f32.gmra.mrb[0].mxu0 %v2289
      %v2384 = vpop.f32.mrb[0].mxu0
      %v2385 = vadd.f32 0.0, %v2384
      %v2386 = vpop.f32.mrb[0].mxu0
      %2387 = vmatprep.mubr.f32.mxu0 0.0
      %2388 = vmatmul.mubr.f32.gmra.mrb[0].mxu0 %v2292
      %v2389 = vpop.f32.mrb[0].mxu0
      %v2390 = vadd.f32 0.0, %v2389
      %v2391 = vpop.f32.mrb[0].mxu0
      %2392 = vmatprep.mubr.f32.mxu0 0.0
      %2393 = vmatmul.mubr.f32.gmra.mrb[0].mxu0 %v2295
      %v2394 = vpop.f32.mrb[0].mxu0
      %v2395 = vadd.f32 0.0, %v2394
      %v2396 = vpop.f32.mrb[0].mxu0
      %2397 = vmatprep.mubr.f32.mxu0 0.0
      %2398 = vmatmul.mubr.f32.gmra.mrb[0].mxu0 %v2298
      %v2399 = vpop.f32.mrb[0].mxu0
      %v2400 = vadd.f32 0.0, %v2399
      %v2401 = vpop.f32.mrb[0].mxu0
      %2402 = vmatprep.mubr.f32.mxu0 0.0
      %2403 = vmatmul.mubr.f32.gmra.mrb[0].mxu0 %v2301
      %v2404 = vpop.f32.mrb[0].mxu0
      %v2405 = vadd.f32 0.0, %v2404
      %v2406 = vpop.f32.mrb[0].mxu0
      %2407 = vdwg.mxu0
      %2416 = vrot.lane.b32.xlu0 %v1197, 64
      %v2417 = vpop.permute.xlu0 %2416
      %2418 = vrot.lane.b32.xlu0 %v1203, 64
      %v2419 = vpop.permute.xlu0 %2418
      %2420 = vrot.lane.b32.xlu0 %v1209, 64
      %v2421 = vpop.permute.xlu0 %2420
      %2422 = vrot.lane.b32.xlu0 %v1215, 64
      %v2423 = vpop.permute.xlu0 %2422
      %2424 = vrot.lane.b32.xlu0 %v1221, 64
      %v2425 = vpop.permute.xlu0 %2424
      %2426 = vrot.lane.b32.xlu0 %v1227, 64
      %v2427 = vpop.permute.xlu0 %2426
      %2428 = vrot.lane.b32.xlu0 %v1233, 64
      %v2429 = vpop.permute.xlu0 %2428
      %2430 = vrot.lane.b32.xlu0 %v1239, 64
      %v2431 = vpop.permute.xlu0 %2430
      %v2432 = vsel %vm2037, %v2417, 0
      %v2434 = vsel %vm2037, %v2419, 0
      %v2436 = vsel %vm2037, %v2421, 0
      %v2438 = vsel %vm2037, %v2423, 0
      %v2440 = vsel %vm2037, %v2425, 0
      %v2442 = vsel %vm2037, %v2427, 0
      %v2444 = vsel %vm2037, %v2429, 0
      %v2446 = vsel %vm2037, %v2431, 0
      %v2449 = vsel %vm2037, %v1413, 0
      %v2452 = vsel %vm2037, %v1418, 0
      %v2455 = vsel %vm2037, %v1423, 0
      %v2458 = vsel %vm2037, %v1428, 0
      %v2461 = vsel %vm2037, %v1433, 0
      %v2464 = vsel %vm2037, %v1438, 0
      %v2467 = vsel %vm2037, %v1443, 0
      %v2470 = vsel %vm2037, %v1448, 0
      %2472 = vmatprep.subr.mxu0 0.0
      %2473 = vmatpush1.xpose.msra.mxu0 %v2449
      %2474 = vmatprep.subr.mxu0 0.0
      %2475 = vmatpush1.xpose.msra.mxu0 %v2452
      %2476 = vmatprep.subr.mxu0 0.0
      %2477 = vmatpush1.xpose.msra.mxu0 %v2455
      %2478 = vmatprep.subr.mxu0 0.0
      %2479 = vmatpush1.xpose.msra.mxu0 %v2458
      %2480 = vmatprep.subr.mxu0 0.0
      %2481 = vmatpush1.xpose.msra.mxu0 %v2461
      %2482 = vmatprep.subr.mxu0 0.0
      %2483 = vmatpush1.xpose.msra.mxu0 %v2464
      %2484 = vmatprep.subr.mxu0 0.0
      %2485 = vmatpush1.xpose.msra.mxu0 %v2467
      %2486 = vmatprep.subr.mxu0 0.0
      %2487 = vmatpush1.xpose.msra.mxu0 %v2470
      %2488 = vmatprep.subr.mxu0 0.0
      %2489 = vmatpush1.xpose.msra.mxu0 0.0
      %2490 = vmatprep.subr.mxu0 0.0
      %2491 = vmatpush1.xpose.msra.mxu0 0.0
      %2492 = vmatprep.subr.mxu0 0.0
      %2493 = vmatpush1.xpose.msra.mxu0 0.0
      %2494 = vmatprep.subr.mxu0 0.0
      %2495 = vmatpush1.xpose.msra.mxu0 0.0
      %2496 = vmatprep.subr.mxu0 0.0
      %2497 = vmatpush1.xpose.msra.mxu0 0.0
      %2498 = vmatprep.subr.mxu0 0.0
      %2499 = vmatpush1.xpose.msra.mxu0 0.0
      %2500 = vmatprep.subr.mxu0 0.0
      %2501 = vmatpush1.xpose.msra.mxu0 0.0
      %2502 = vmatprep.subr.mxu0 0.0
      %2503 = vmatpush1.xpose.msra.mxu0 0.0
      %2504 = vmatprep.subr.mxu0 0.0
      %2505 = vmatpush1.xpose.msra.mxu0 0.0
      %2506 = vmatprep.subr.mxu0 0.0
      %2507 = vmatpush1.xpose.msra.mxu0 0.0
      %2508 = vmatprep.subr.mxu0 0.0
      %2509 = vmatpush1.xpose.msra.mxu0 0.0
      %2510 = vmatprep.subr.mxu0 0.0
      %2511 = vmatpush1.xpose.msra.mxu0 0.0
      %2512 = vmatprep.subr.mxu0 0.0
      %2513 = vmatpush1.xpose.msra.mxu0 0.0
      %2514 = vmatprep.subr.mxu0 0.0
      %2515 = vmatpush1.xpose.msra.mxu0 0.0
      %2516 = vmatprep.subr.mxu0 0.0
      %2517 = vmatpush1.xpose.msra.mxu0 0.0
      %2518 = vmatprep.subr.mxu0 0.0
      %2519 = vmatpush1.xpose.msra.mxu0 0.0
      %2520 = vmatprep.subr.mxu0 0.0
      %2521 = vmatpush1.xpose.msra.mxu0 0.0
      %2522 = vmatprep.subr.mxu0 0.0
      %2523 = vmatpush1.xpose.msra.mxu0 0.0
      %2524 = vmatprep.subr.mxu0 0.0
      %2525 = vmatpush1.xpose.msra.mxu0 0.0
      %2526 = vmatprep.subr.mxu0 0.0
      %2527 = vmatpush1.xpose.msra.mxu0 0.0
      %2528 = vmatprep.subr.mxu0 0.0
      %2529 = vmatpush1.xpose.msra.mxu0 0.0
      %2530 = vmatprep.subr.mxu0 0.0
      %2531 = vmatpush1.xpose.msra.mxu0 0.0
      %2532 = vmatprep.subr.mxu0 0.0
      %2533 = vmatpush1.xpose.msra.mxu0 0.0
      %2534 = vmatprep.subr.mxu0 0.0
      %2535 = vmatpush1.xpose.msra.mxu0 0.0
      %2536 = vmatprep.mubr.f32.mxu0 0.0
      %2537 = vmatmul.mubr.f32.gmra.mrb[0].mxu0 %v2432
      %v2538 = vpop.f32.mrb[0].mxu0
      %v2539 = vadd.f32 0.0, %v2538
      %v2540 = vpop.f32.mrb[0].mxu0
      %2541 = vmatprep.mubr.f32.mxu0 0.0
      %2542 = vmatmul.mubr.f32.gmra.mrb[0].mxu0 %v2434
      %v2543 = vpop.f32.mrb[0].mxu0
      %v2544 = vadd.f32 0.0, %v2543
      %v2545 = vpop.f32.mrb[0].mxu0
      %2546 = vmatprep.mubr.f32.mxu0 0.0
      %2547 = vmatmul.mubr.f32.gmra.mrb[0].mxu0 %v2436
      %v2548 = vpop.f32.mrb[0].mxu0
      %v2549 = vadd.f32 0.0, %v2548
      %v2550 = vpop.f32.mrb[0].mxu0
      %2551 = vmatprep.mubr.f32.mxu0 0.0
      %2552 = vmatmul.mubr.f32.gmra.mrb[0].mxu0 %v2438
      %v2553 = vpop.f32.mrb[0].mxu0
      %v2554 = vadd.f32 0.0, %v2553
      %v2555 = vpop.f32.mrb[0].mxu0
      %2556 = vmatprep.mubr.f32.mxu0 0.0
      %2557 = vmatmul.mubr.f32.gmra.mrb[0].mxu0 %v2440
      %v2558 = vpop.f32.mrb[0].mxu0
      %v2559 = vadd.f32 0.0, %v2558
      %v2560 = vpop.f32.mrb[0].mxu0
      %2561 = vmatprep.mubr.f32.mxu0 0.0
      %2562 = vmatmul.mubr.f32.gmra.mrb[0].mxu0 %v2442
      %v2563 = vpop.f32.mrb[0].mxu0
      %v2564 = vadd.f32 0.0, %v2563
      %v2565 = vpop.f32.mrb[0].mxu0
      %2566 = vmatprep.mubr.f32.mxu0 0.0
      %2567 = vmatmul.mubr.f32.gmra.mrb[0].mxu0 %v2444
      %v2568 = vpop.f32.mrb[0].mxu0
      %v2569 = vadd.f32 0.0, %v2568
      %v2570 = vpop.f32.mrb[0].mxu0
      %2571 = vmatprep.mubr.f32.mxu0 0.0
      %2572 = vmatmul.mubr.f32.gmra.mrb[0].mxu0 %v2446
      %v2573 = vpop.f32.mrb[0].mxu0
      %v2574 = vadd.f32 0.0, %v2573
      %v2575 = vpop.f32.mrb[0].mxu0
      %2576 = vdwg.mxu0
      %v2577 = vmul.f32 %v2539, 0.125
      %v2578 = vmul.f32 %v2544, 0.125
      %v2579 = vmul.f32 %v2549, 0.125
      %v2580 = vmul.f32 %v2554, 0.125
      %v2581 = vmul.f32 %v2559, 0.125
      %v2582 = vmul.f32 %v2564, 0.125
      %v2583 = vmul.f32 %v2569, 0.125
      %v2584 = vmul.f32 %v2574, 0.125
      %v2585 = vadd.f32 %v2577, %v2005
      %v2586 = vadd.f32 %v2578, %v2006
      %v2587 = vadd.f32 %v2579, %v2007
      %v2588 = vadd.f32 %v2580, %v2008
      %v2589 = vadd.f32 %v2581, %v2009
      %v2590 = vadd.f32 %v2582, %v2010
      %v2591 = vadd.f32 %v2583, %v2011
      %v2592 = vadd.f32 %v2584, %v2012
      %v2593 = vsel %vm2037, %v2585, -inf
      %2594 = vmax.xlane.f32.xlu0 %v2593
      %v2595 = vpop.xlane.xlu0 %2594
      %v2596 = vsel %vm2037, %v2586, -inf
      %2597 = vmax.xlane.f32.xlu0 %v2596
      %v2598 = vpop.xlane.xlu0 %2597
      %v2599 = vsel %vm2037, %v2587, -inf
      %2600 = vmax.xlane.f32.xlu0 %v2599
      %v2601 = vpop.xlane.xlu0 %2600
      %v2602 = vsel %vm2037, %v2588, -inf
      %2603 = vmax.xlane.f32.xlu0 %v2602
      %v2604 = vpop.xlane.xlu0 %2603
      %v2605 = vsel %vm2037, %v2589, -inf
      %2606 = vmax.xlane.f32.xlu0 %v2605
      %v2607 = vpop.xlane.xlu0 %2606
      %v2608 = vsel %vm2037, %v2590, -inf
      %2609 = vmax.xlane.f32.xlu0 %v2608
      %v2610 = vpop.xlane.xlu0 %2609
      %v2611 = vsel %vm2037, %v2591, -inf
      %2612 = vmax.xlane.f32.xlu0 %v2611
      %v2613 = vpop.xlane.xlu0 %2612
      %v2614 = vsel %vm2037, %v2592, -inf
      %2615 = vmax.xlane.f32.xlu0 %v2614
      %v2616 = vpop.xlane.xlu0 %2615
      %v2617 = vsub.f32 %v2585, %v2595
      %v2618 = vsub.f32 %v2586, %v2598
      %v2619 = vsub.f32 %v2587, %v2601
      %v2620 = vsub.f32 %v2588, %v2604
      %v2621 = vsub.f32 %v2589, %v2607
      %v2622 = vsub.f32 %v2590, %v2610
      %v2623 = vsub.f32 %v2591, %v2613
      %v2624 = vsub.f32 %v2592, %v2616
      %v2625 = vmul.f32 %v2617, 1.442695
      %v2626 = vpow.pop %v2625
      %v2627 = vmul.f32 %v2618, 1.442695
      %v2628 = vpow.pop %v2627
      %v2629 = vmul.f32 %v2619, 1.442695
      %v2630 = vpow.pop %v2629
      %v2631 = vmul.f32 %v2620, 1.442695
      %v2632 = vpow.pop %v2631
      %v2633 = vmul.f32 %v2621, 1.442695
      %v2634 = vpow.pop %v2633
      %v2635 = vmul.f32 %v2622, 1.442695
      %v2636 = vpow.pop %v2635
      %v2637 = vmul.f32 %v2623, 1.442695
      %v2638 = vpow.pop %v2637
      %v2639 = vmul.f32 %v2624, 1.442695
      %v2640 = vpow.pop %v2639
      %v2641 = vsel %vm2037, %v2626, 0.0
      %2642 = vadd.xlane.f32.xlu0 %v2641
      %v2643 = vpop.xlane.xlu0 %2642
      %v2644 = vsel %vm2037, %v2628, 0.0
      %2645 = vadd.xlane.f32.xlu0 %v2644
      %v2646 = vpop.xlane.xlu0 %2645
      %v2647 = vsel %vm2037, %v2630, 0.0
      %2648 = vadd.xlane.f32.xlu0 %v2647
      %v2649 = vpop.xlane.xlu0 %2648
      %v2650 = vsel %vm2037, %v2632, 0.0
      %2651 = vadd.xlane.f32.xlu0 %v2650
      %v2652 = vpop.xlane.xlu0 %2651
      %v2653 = vsel %vm2037, %v2634, 0.0
      %2654 = vadd.xlane.f32.xlu0 %v2653
      %v2655 = vpop.xlane.xlu0 %2654
      %v2656 = vsel %vm2037, %v2636, 0.0
      %2657 = vadd.xlane.f32.xlu0 %v2656
      %v2658 = vpop.xlane.xlu0 %2657
      %v2659 = vsel %vm2037, %v2638, 0.0
      %2660 = vadd.xlane.f32.xlu0 %v2659
      %v2661 = vpop.xlane.xlu0 %2660
      %v2662 = vsel %vm2037, %v2640, 0.0
      %2663 = vadd.xlane.f32.xlu0 %v2662
      %v2664 = vpop.xlane.xlu0 %2663
      %v2665 = vrcp.pop %v2643
      %v2666 = vrcp.pop %v2646
      %v2667 = vrcp.pop %v2649
      %v2668 = vrcp.pop %v2652
      %v2669 = vrcp.pop %v2655
      %v2670 = vrcp.pop %v2658
      %v2671 = vrcp.pop %v2661
      %v2672 = vrcp.pop %v2664
      %v2673 = vmul.f32 %v2626, %v2665
      %v2674 = vmul.f32 %v2628, %v2666
      %v2675 = vmul.f32 %v2630, %v2667
      %v2676 = vmul.f32 %v2632, %v2668
      %v2677 = vmul.f32 %v2634, %v2669
      %v2678 = vmul.f32 %v2636, %v2670
      %v2679 = vmul.f32 %v2638, %v2671
      %v2680 = vmul.f32 %v2640, %v2672
      %2681 = vrot.lane.b32.xlu0 %v1413, 64
      %v2682 = vpop.permute.xlu0 %2681
      %2683 = vrot.lane.b32.xlu0 %v1418, 64
      %v2684 = vpop.permute.xlu0 %2683
      %2685 = vrot.lane.b32.xlu0 %v1423, 64
      %v2686 = vpop.permute.xlu0 %2685
      %2687 = vrot.lane.b32.xlu0 %v1428, 64
      %v2688 = vpop.permute.xlu0 %2687
      %2689 = vrot.lane.b32.xlu0 %v1433, 64
      %v2690 = vpop.permute.xlu0 %2689
      %2691 = vrot.lane.b32.xlu0 %v1438, 64
      %v2692 = vpop.permute.xlu0 %2691
      %2693 = vrot.lane.b32.xlu0 %v1443, 64
      %v2694 = vpop.permute.xlu0 %2693
      %2695 = vrot.lane.b32.xlu0 %v1448, 64
      %v2696 = vpop.permute.xlu0 %2695
      %v2706 = vsel %vm2037, %v2673, 0
      %v2709 = vsel %vm2037, %v2674, 0
      %v2712 = vsel %vm2037, %v2675, 0
      %v2715 = vsel %vm2037, %v2676, 0
      %v2718 = vsel %vm2037, %v2677, 0
      %v2721 = vsel %vm2037, %v2678, 0
      %v2724 = vsel %vm2037, %v2679, 0
      %v2727 = vsel %vm2037, %v2680, 0
      %2729 = vmatprep.subr.mxu0 0.0
      %2730 = vmatpush1.msra.mxu0 %v2682
      %2731 = vmatprep.subr.mxu0 0.0
      %2732 = vmatpush1.msra.mxu0 %v2684
      %2733 = vmatprep.subr.mxu0 0.0
      %2734 = vmatpush1.msra.mxu0 %v2686
      %2735 = vmatprep.subr.mxu0 0.0
      %2736 = vmatpush1.msra.mxu0 %v2688
      %2737 = vmatprep.subr.mxu0 0.0
      %2738 = vmatpush1.msra.mxu0 %v2690
      %2739 = vmatprep.subr.mxu0 0.0
      %2740 = vmatpush1.msra.mxu0 %v2692
      %2741 = vmatprep.subr.mxu0 0.0
      %2742 = vmatpush1.msra.mxu0 %v2694
      %2743 = vmatprep.subr.mxu0 0.0
      %2744 = vmatpush1.msra.mxu0 %v2696
      %2745 = vmatprep.subr.mxu0 0.0
      %2746 = vmatpush1.msra.mxu0 0.0
      %2747 = vmatprep.subr.mxu0 0.0
      %2748 = vmatpush1.msra.mxu0 0.0
      %2749 = vmatprep.subr.mxu0 0.0
      %2750 = vmatpush1.msra.mxu0 0.0
      %2751 = vmatprep.subr.mxu0 0.0
      %2752 = vmatpush1.msra.mxu0 0.0
      %2753 = vmatprep.subr.mxu0 0.0
      %2754 = vmatpush1.msra.mxu0 0.0
      %2755 = vmatprep.subr.mxu0 0.0
      %2756 = vmatpush1.msra.mxu0 0.0
      %2757 = vmatprep.subr.mxu0 0.0
      %2758 = vmatpush1.msra.mxu0 0.0
      %2759 = vmatprep.subr.mxu0 0.0
      %2760 = vmatpush1.msra.mxu0 0.0
      %2761 = vmatprep.subr.mxu0 0.0
      %2762 = vmatpush1.msra.mxu0 0.0
      %2763 = vmatprep.subr.mxu0 0.0
      %2764 = vmatpush1.msra.mxu0 0.0
      %2765 = vmatprep.subr.mxu0 0.0
      %2766 = vmatpush1.msra.mxu0 0.0
      %2767 = vmatprep.subr.mxu0 0.0
      %2768 = vmatpush1.msra.mxu0 0.0
      %2769 = vmatprep.subr.mxu0 0.0
      %2770 = vmatpush1.msra.mxu0 0.0
      %2771 = vmatprep.subr.mxu0 0.0
      %2772 = vmatpush1.msra.mxu0 0.0
      %2773 = vmatprep.subr.mxu0 0.0
      %2774 = vmatpush1.msra.mxu0 0.0
      %2775 = vmatprep.subr.mxu0 0.0
      %2776 = vmatpush1.msra.mxu0 0.0
      %2777 = vmatprep.subr.mxu0 0.0
      %2778 = vmatpush1.msra.mxu0 0.0
      %2779 = vmatprep.subr.mxu0 0.0
      %2780 = vmatpush1.msra.mxu0 0.0
      %2781 = vmatprep.subr.mxu0 0.0
      %2782 = vmatpush1.msra.mxu0 0.0
      %2783 = vmatprep.subr.mxu0 0.0
      %2784 = vmatpush1.msra.mxu0 0.0
      %2785 = vmatprep.subr.mxu0 0.0
      %2786 = vmatpush1.msra.mxu0 0.0
      %2787 = vmatprep.subr.mxu0 0.0
      %2788 = vmatpush1.msra.mxu0 0.0
      %2789 = vmatprep.subr.mxu0 0.0
      %2790 = vmatpush1.msra.mxu0 0.0
      %2791 = vmatprep.subr.mxu0 0.0
      %2792 = vmatpush1.msra.mxu0 0.0
      %2793 = vmatprep.mubr.f32.mxu0 0.0
      %2794 = vmatmul.mubr.f32.gmra.mrb[0].mxu0 %v2706
      %v2795 = vpop.f32.mrb[0].mxu0
      %v2796 = vadd.f32 0.0, %v2795
      %v2797 = vpop.f32.mrb[0].mxu0
      %2798 = vmatprep.mubr.f32.mxu0 0.0
      %2799 = vmatmul.mubr.f32.gmra.mrb[0].mxu0 %v2709
      %v2800 = vpop.f32.mrb[0].mxu0
      %v2801 = vadd.f32 0.0, %v2800
      %v2802 = vpop.f32.mrb[0].mxu0
      %2803 = vmatprep.mubr.f32.mxu0 0.0
      %2804 = vmatmul.mubr.f32.gmra.mrb[0].mxu0 %v2712
      %v2805 = vpop.f32.mrb[0].mxu0
      %v2806 = vadd.f32 0.0, %v2805
      %v2807 = vpop.f32.mrb[0].mxu0
      %2808 = vmatprep.mubr.f32.mxu0 0.0
      %2809 = vmatmul.mubr.f32.gmra.mrb[0].mxu0 %v2715
      %v2810 = vpop.f32.mrb[0].mxu0
      %v2811 = vadd.f32 0.0, %v2810
      %v2812 = vpop.f32.mrb[0].mxu0
      %2813 = vmatprep.mubr.f32.mxu0 0.0
      %2814 = vmatmul.mubr.f32.gmra.mrb[0].mxu0 %v2718
      %v2815 = vpop.f32.mrb[0].mxu0
      %v2816 = vadd.f32 0.0, %v2815
      %v2817 = vpop.f32.mrb[0].mxu0
      %2818 = vmatprep.mubr.f32.mxu0 0.0
      %2819 = vmatmul.mubr.f32.gmra.mrb[0].mxu0 %v2721
      %v2820 = vpop.f32.mrb[0].mxu0
      %v2821 = vadd.f32 0.0, %v2820
      %v2822 = vpop.f32.mrb[0].mxu0
      %2823 = vmatprep.mubr.f32.mxu0 0.0
      %2824 = vmatmul.mubr.f32.gmra.mrb[0].mxu0 %v2724
      %v2825 = vpop.f32.mrb[0].mxu0
      %v2826 = vadd.f32 0.0, %v2825
      %v2827 = vpop.f32.mrb[0].mxu0
      %2828 = vmatprep.mubr.f32.mxu0 0.0
      %2829 = vmatmul.mubr.f32.gmra.mrb[0].mxu0 %v2727
      %v2830 = vpop.f32.mrb[0].mxu0
      %v2831 = vadd.f32 0.0, %v2830
      %v2832 = vpop.f32.mrb[0].mxu0
      %2833 = vdwg.mxu0
      %2842 = vrot.lane.b32.xlu0 %v2796, 64
      %v2843 = vpop.permute.xlu0 %2842
      %2844 = vrot.lane.b32.xlu0 %v2801, 64
      %v2845 = vpop.permute.xlu0 %2844
      %2846 = vrot.lane.b32.xlu0 %v2806, 64
      %v2847 = vpop.permute.xlu0 %2846
      %2848 = vrot.lane.b32.xlu0 %v2811, 64
      %v2849 = vpop.permute.xlu0 %2848
      %2850 = vrot.lane.b32.xlu0 %v2816, 64
      %v2851 = vpop.permute.xlu0 %2850
      %2852 = vrot.lane.b32.xlu0 %v2821, 64
      %v2853 = vpop.permute.xlu0 %2852
      %2854 = vrot.lane.b32.xlu0 %v2826, 64
      %v2855 = vpop.permute.xlu0 %2854
      %2856 = vrot.lane.b32.xlu0 %v2831, 64
      %v2857 = vpop.permute.xlu0 %2856
      %v2866 = vsel %vm2037, %v2370, %v2843
      %v2867 = vsel %vm2037, %v2375, %v2845
      %v2868 = vsel %vm2037, %v2380, %v2847
      %v2869 = vsel %vm2037, %v2385, %v2849
      %v2870 = vsel %vm2037, %v2390, %v2851
      %v2871 = vsel %vm2037, %v2395, %v2853
      %v2872 = vsel %vm2037, %v2400, %v2855
      %v2873 = vsel %vm2037, %v2405, %v2857
      %v2875 = vlaneseq
      %v2876 = vshrl.u32 %v2875, 7
      %v2877 = vsub.s32 0, %v2876
      %v2878 = vrot.slane %v1528, %v2877
      %v2879 = vlaneseq
      %v2880 = vshrl.u32 %v2879, 7
      %v2881 = vsub.s32 1, %v2880
      %v2882 = vrot.slane %v1528, %v2881
      %v2883 = vlaneseq
      %v2884 = vshrl.u32 %v2883, 7
      %v2885 = vsub.s32 2, %v2884
      %v2886 = vrot.slane %v1528, %v2885
      %v2887 = vlaneseq
      %v2888 = vshrl.u32 %v2887, 7
      %v2889 = vsub.s32 3, %v2888
      %v2890 = vrot.slane %v1528, %v2889
      %2895 = vmatprep.subr.mxu0 %v1465
      %2896 = vmatpush1.msra.mxu0 %v1464
      %2897 = vmatprep.subr.mxu0 %v1469
      %2898 = vmatpush1.msra.mxu0 %v1468
      %2899 = vmatprep.subr.mxu0 %v1473
      %2900 = vmatpush1.msra.mxu0 %v1472
      %2901 = vmatprep.subr.mxu0 %v1477
      %2902 = vmatpush1.msra.mxu0 %v1476
      %2903 = vmatprep.subr.mxu0 %v1481
      %2904 = vmatpush1.msra.mxu0 %v1480
      %2905 = vmatprep.subr.mxu0 %v1485
      %2906 = vmatpush1.msra.mxu0 %v1484
      %2907 = vmatprep.subr.mxu0 %v1489
      %2908 = vmatpush1.msra.mxu0 %v1488
      %2909 = vmatprep.subr.mxu0 %v1493
      %2910 = vmatpush1.msra.mxu0 %v1492
      %2911 = vmatprep.subr.mxu0 %v1497
      %2912 = vmatpush1.msra.mxu0 %v1496
      %2913 = vmatprep.subr.mxu0 %v1501
      %2914 = vmatpush1.msra.mxu0 %v1500
      %2915 = vmatprep.subr.mxu0 %v1505
      %2916 = vmatpush1.msra.mxu0 %v1504
      %2917 = vmatprep.subr.mxu0 %v1509
      %2918 = vmatpush1.msra.mxu0 %v1508
      %2919 = vmatprep.subr.mxu0 %v1513
      %2920 = vmatpush1.msra.mxu0 %v1512
      %2921 = vmatprep.subr.mxu0 %v1517
      %2922 = vmatpush1.msra.mxu0 %v1516
      %2923 = vmatprep.subr.mxu0 %v1521
      %2924 = vmatpush1.msra.mxu0 %v1520
      %2925 = vmatprep.subr.mxu0 %v1525
      %2926 = vmatpush1.msra.mxu0 %v1524
      %2927 = vmatprep.subr.mxu0 0.0
      %2928 = vmatpush1.msra.mxu0 0.0
      %2929 = vmatprep.subr.mxu0 0.0
      %2930 = vmatpush1.msra.mxu0 0.0
      %2931 = vmatprep.subr.mxu0 0.0
      %2932 = vmatpush1.msra.mxu0 0.0
      %2933 = vmatprep.subr.mxu0 0.0
      %2934 = vmatpush1.msra.mxu0 0.0
      %2935 = vmatprep.subr.mxu0 0.0
      %2936 = vmatpush1.msra.mxu0 0.0
      %2937 = vmatprep.subr.mxu0 0.0
      %2938 = vmatpush1.msra.mxu0 0.0
      %2939 = vmatprep.subr.mxu0 0.0
      %2940 = vmatpush1.msra.mxu0 0.0
      %2941 = vmatprep.subr.mxu0 0.0
      %2942 = vmatpush1.msra.mxu0 0.0
      %2943 = vmatprep.subr.mxu0 0.0
      %2944 = vmatpush1.msra.mxu0 0.0
      %2945 = vmatprep.subr.mxu0 0.0
      %2946 = vmatpush1.msra.mxu0 0.0
      %2947 = vmatprep.subr.mxu0 0.0
      %2948 = vmatpush1.msra.mxu0 0.0
      %2949 = vmatprep.subr.mxu0 0.0
      %2950 = vmatpush1.msra.mxu0 0.0
      %2951 = vmatprep.subr.mxu0 0.0
      %2952 = vmatpush1.msra.mxu0 0.0
      %2953 = vmatprep.subr.mxu0 0.0
      %2954 = vmatpush1.msra.mxu0 0.0
      %2955 = vmatprep.subr.mxu0 0.0
      %2956 = vmatpush1.msra.mxu0 0.0
      %2957 = vmatprep.subr.mxu0 0.0
      %2958 = vmatpush1.msra.mxu0 0.0
      %2959 = vmatprep.mubr.f32.mxu0 0.0
      %2960 = vmatmul.mubr.f32.gmra.mrb[0].mxu0 %v2866
      %v2961 = vpop.f32.mrb[0].mxu0
      %v2962 = vadd.f32 %v2878, %v2961
      %v2963 = vpop.f32.mrb[0].mxu0
      %v2964 = vadd.f32 %v2882, %v2963
      %2965 = vmatprep.mubr.f32.mxu0 0.0
      %2966 = vmatmul.mubr.f32.gmra.mrb[0].mxu0 %v2867
      %v2967 = vpop.f32.mrb[0].mxu0
      %v2968 = vadd.f32 %v2878, %v2967
      %v2969 = vpop.f32.mrb[0].mxu0
      %v2970 = vadd.f32 %v2882, %v2969
      %2971 = vmatprep.mubr.f32.mxu0 0.0
      %2972 = vmatmul.mubr.f32.gmra.mrb[0].mxu0 %v2868
      %v2973 = vpop.f32.mrb[0].mxu0
      %v2974 = vadd.f32 %v2878, %v2973
      %v2975 = vpop.f32.mrb[0].mxu0
      %v2976 = vadd.f32 %v2882, %v2975
      %2977 = vmatprep.mubr.f32.mxu0 0.0
      %2978 = vmatmul.mubr.f32.gmra.mrb[0].mxu0 %v2869
      %v2979 = vpop.f32.mrb[0].mxu0
      %v2980 = vadd.f32 %v2878, %v2979
      %v2981 = vpop.f32.mrb[0].mxu0
      %v2982 = vadd.f32 %v2882, %v2981
      %2983 = vmatprep.mubr.f32.mxu0 0.0
      %2984 = vmatmul.mubr.f32.gmra.mrb[0].mxu0 %v2870
      %v2985 = vpop.f32.mrb[0].mxu0
      %v2986 = vadd.f32 %v2878, %v2985
      %v2987 = vpop.f32.mrb[0].mxu0
      %v2988 = vadd.f32 %v2882, %v2987
      %2989 = vmatprep.mubr.f32.mxu0 0.0
      %2990 = vmatmul.mubr.f32.gmra.mrb[0].mxu0 %v2871
      %v2991 = vpop.f32.mrb[0].mxu0
      %v2992 = vadd.f32 %v2878, %v2991
      %v2993 = vpop.f32.mrb[0].mxu0
      %v2994 = vadd.f32 %v2882, %v2993
      %2995 = vmatprep.mubr.f32.mxu0 0.0
      %2996 = vmatmul.mubr.f32.gmra.mrb[0].mxu0 %v2872
      %v2997 = vpop.f32.mrb[0].mxu0
      %v2998 = vadd.f32 %v2878, %v2997
      %v2999 = vpop.f32.mrb[0].mxu0
      %v3000 = vadd.f32 %v2882, %v2999
      %3001 = vmatprep.mubr.f32.mxu0 0.0
      %3002 = vmatmul.mubr.f32.gmra.mrb[0].mxu0 %v2873
      %v3003 = vpop.f32.mrb[0].mxu0
      %v3004 = vadd.f32 %v2878, %v3003
      %v3005 = vpop.f32.mrb[0].mxu0
      %v3006 = vadd.f32 %v2882, %v3005
      %3007 = vdwg.mxu0
      %3008 = vmatprep.subr.mxu0 %v1467
      %3009 = vmatpush1.msra.mxu0 %v1466
      %3010 = vmatprep.subr.mxu0 %v1471
      %3011 = vmatpush1.msra.mxu0 %v1470
      %3012 = vmatprep.subr.mxu0 %v1475
      %3013 = vmatpush1.msra.mxu0 %v1474
      %3014 = vmatprep.subr.mxu0 %v1479
      %3015 = vmatpush1.msra.mxu0 %v1478
      %3016 = vmatprep.subr.mxu0 %v1483
      %3017 = vmatpush1.msra.mxu0 %v1482
      %3018 = vmatprep.subr.mxu0 %v1487
      %3019 = vmatpush1.msra.mxu0 %v1486
      %3020 = vmatprep.subr.mxu0 %v1491
      %3021 = vmatpush1.msra.mxu0 %v1490
      %3022 = vmatprep.subr.mxu0 %v1495
      %3023 = vmatpush1.msra.mxu0 %v1494
      %3024 = vmatprep.subr.mxu0 %v1499
      %3025 = vmatpush1.msra.mxu0 %v1498
      %3026 = vmatprep.subr.mxu0 %v1503
      %3027 = vmatpush1.msra.mxu0 %v1502
      %3028 = vmatprep.subr.mxu0 %v1507
      %3029 = vmatpush1.msra.mxu0 %v1506
      %3030 = vmatprep.subr.mxu0 %v1511
      %3031 = vmatpush1.msra.mxu0 %v1510
      %3032 = vmatprep.subr.mxu0 %v1515
      %3033 = vmatpush1.msra.mxu0 %v1514
      %3034 = vmatprep.subr.mxu0 %v1519
      %3035 = vmatpush1.msra.mxu0 %v1518
      %3036 = vmatprep.subr.mxu0 %v1523
      %3037 = vmatpush1.msra.mxu0 %v1522
      %3038 = vmatprep.subr.mxu0 %v1527
      %3039 = vmatpush1.msra.mxu0 %v1526
      %3040 = vmatprep.subr.mxu0 0.0
      %3041 = vmatpush1.msra.mxu0 0.0
      %3042 = vmatprep.subr.mxu0 0.0
      %3043 = vmatpush1.msra.mxu0 0.0
      %3044 = vmatprep.subr.mxu0 0.0
      %3045 = vmatpush1.msra.mxu0 0.0
      %3046 = vmatprep.subr.mxu0 0.0
      %3047 = vmatpush1.msra.mxu0 0.0
      %3048 = vmatprep.subr.mxu0 0.0
      %3049 = vmatpush1.msra.mxu0 0.0
      %3050 = vmatprep.subr.mxu0 0.0
      %3051 = vmatpush1.msra.mxu0 0.0
      %3052 = vmatprep.subr.mxu0 0.0
      %3053 = vmatpush1.msra.mxu0 0.0
      %3054 = vmatprep.subr.mxu0 0.0
      %3055 = vmatpush1.msra.mxu0 0.0
      %3056 = vmatprep.subr.mxu0 0.0
      %3057 = vmatpush1.msra.mxu0 0.0
      %3058 = vmatprep.subr.mxu0 0.0
      %3059 = vmatpush1.msra.mxu0 0.0
      %3060 = vmatprep.subr.mxu0 0.0
      %3061 = vmatpush1.msra.mxu0 0.0
      %3062 = vmatprep.subr.mxu0 0.0
      %3063 = vmatpush1.msra.mxu0 0.0
      %3064 = vmatprep.subr.mxu0 0.0
      %3065 = vmatpush1.msra.mxu0 0.0
      %3066 = vmatprep.subr.mxu0 0.0
      %3067 = vmatpush1.msra.mxu0 0.0
      %3068 = vmatprep.subr.mxu0 0.0
      %3069 = vmatpush1.msra.mxu0 0.0
      %3070 = vmatprep.subr.mxu0 0.0
      %3071 = vmatpush1.msra.mxu0 0.0
      %3072 = vmatprep.mubr.f32.mxu0 0.0
      %3073 = vmatmul.mubr.f32.gmra.mrb[0].mxu0 %v2866
      %v3074 = vpop.f32.mrb[0].mxu0
      %v3075 = vadd.f32 %v2886, %v3074
      %v3076 = vpop.f32.mrb[0].mxu0
      %v3077 = vadd.f32 %v2890, %v3076
      %3078 = vmatprep.mubr.f32.mxu0 0.0
      %3079 = vmatmul.mubr.f32.gmra.mrb[0].mxu0 %v2867
      %v3080 = vpop.f32.mrb[0].mxu0
      %v3081 = vadd.f32 %v2886, %v3080
      %v3082 = vpop.f32.mrb[0].mxu0
      %v3083 = vadd.f32 %v2890, %v3082
      %3084 = vmatprep.mubr.f32.mxu0 0.0
      %3085 = vmatmul.mubr.f32.gmra.mrb[0].mxu0 %v2868
      %v3086 = vpop.f32.mrb[0].mxu0
      %v3087 = vadd.f32 %v2886, %v3086
      %v3088 = vpop.f32.mrb[0].mxu0
      %v3089 = vadd.f32 %v2890, %v3088
      %3090 = vmatprep.mubr.f32.mxu0 0.0
      %3091 = vmatmul.mubr.f32.gmra.mrb[0].mxu0 %v2869
      %v3092 = vpop.f32.mrb[0].mxu0
      %v3093 = vadd.f32 %v2886, %v3092
      %v3094 = vpop.f32.mrb[0].mxu0
      %v3095 = vadd.f32 %v2890, %v3094
      %3096 = vmatprep.mubr.f32.mxu0 0.0
      %3097 = vmatmul.mubr.f32.gmra.mrb[0].mxu0 %v2870
      %v3098 = vpop.f32.mrb[0].mxu0
      %v3099 = vadd.f32 %v2886, %v3098
      %v3100 = vpop.f32.mrb[0].mxu0
      %v3101 = vadd.f32 %v2890, %v3100
      %3102 = vmatprep.mubr.f32.mxu0 0.0
      %3103 = vmatmul.mubr.f32.gmra.mrb[0].mxu0 %v2871
      %v3104 = vpop.f32.mrb[0].mxu0
      %v3105 = vadd.f32 %v2886, %v3104
      %v3106 = vpop.f32.mrb[0].mxu0
      %v3107 = vadd.f32 %v2890, %v3106
      %3108 = vmatprep.mubr.f32.mxu0 0.0
      %3109 = vmatmul.mubr.f32.gmra.mrb[0].mxu0 %v2872
      %v3110 = vpop.f32.mrb[0].mxu0
      %v3111 = vadd.f32 %v2886, %v3110
      %v3112 = vpop.f32.mrb[0].mxu0
      %v3113 = vadd.f32 %v2890, %v3112
      %3114 = vmatprep.mubr.f32.mxu0 0.0
      %3115 = vmatmul.mubr.f32.gmra.mrb[0].mxu0 %v2873
      %v3116 = vpop.f32.mrb[0].mxu0
      %v3117 = vadd.f32 %v2886, %v3116
      %v3118 = vpop.f32.mrb[0].mxu0
      %v3119 = vadd.f32 %v2890, %v3118
      %3120 = vdwg.mxu0
      %v3121 = vadd.f32 %v2962, %v402
      %v3122 = vadd.f32 %v2964, %v403
      %v3123 = vadd.f32 %v3075, %v404
      %v3124 = vadd.f32 %v3077, %v405
      %v3125 = vadd.f32 %v2968, %v406
      %v3126 = vadd.f32 %v2970, %v407
      %v3127 = vadd.f32 %v3081, %v408
      %v3128 = vadd.f32 %v3083, %v409
      %v3129 = vadd.f32 %v2974, %v410
      %v3130 = vadd.f32 %v2976, %v411
      %v3131 = vadd.f32 %v3087, %v412
      %v3132 = vadd.f32 %v3089, %v413
      %v3133 = vadd.f32 %v2980, %v414
      %v3134 = vadd.f32 %v2982, %v415
      %v3135 = vadd.f32 %v3093, %v416
      %v3136 = vadd.f32 %v3095, %v417
      %v3137 = vadd.f32 %v2986, %v418
      %v3138 = vadd.f32 %v2988, %v419
      %v3139 = vadd.f32 %v3099, %v420
      %v3140 = vadd.f32 %v3101, %v421
      %v3141 = vadd.f32 %v2992, %v422
      %v3142 = vadd.f32 %v2994, %v423
      %v3143 = vadd.f32 %v3105, %v424
      %v3144 = vadd.f32 %v3107, %v425
      %v3145 = vadd.f32 %v2998, %v426
      %v3146 = vadd.f32 %v3000, %v427
      %v3147 = vadd.f32 %v3111, %v428
      %v3148 = vadd.f32 %v3113, %v429
      %v3149 = vadd.f32 %v3004, %v430
      %v3150 = vadd.f32 %v3006, %v431
      %v3151 = vadd.f32 %v3117, %v432
      %v3152 = vadd.f32 %v3119, %v433
      %v3153 = vadd.f32 %v3121, %v3122
      %v3154 = vadd.f32 %v3153, %v3123
      %v3155 = vsel %vm438, %v3124, 0.0
      %v3156 = vadd.f32 %v3154, %v3155
      %3157 = vadd.xlane.f32.xlu0 %v3156
      %v3158 = vpop.xlane.xlu0 %3157
      %v3159 = vadd.f32 %v3125, %v3126
      %v3160 = vadd.f32 %v3159, %v3127
      %v3161 = vsel %vm438, %v3128, 0.0
      %v3162 = vadd.f32 %v3160, %v3161
      %3163 = vadd.xlane.f32.xlu0 %v3162
      %v3164 = vpop.xlane.xlu0 %3163
      %v3165 = vadd.f32 %v3129, %v3130
      %v3166 = vadd.f32 %v3165, %v3131
      %v3167 = vsel %vm438, %v3132, 0.0
      %v3168 = vadd.f32 %v3166, %v3167
      %3169 = vadd.xlane.f32.xlu0 %v3168
      %v3170 = vpop.xlane.xlu0 %3169
      %v3171 = vadd.f32 %v3133, %v3134
      %v3172 = vadd.f32 %v3171, %v3135
      %v3173 = vsel %vm438, %v3136, 0.0
      %v3174 = vadd.f32 %v3172, %v3173
      %3175 = vadd.xlane.f32.xlu0 %v3174
      %v3176 = vpop.xlane.xlu0 %3175
      %v3177 = vadd.f32 %v3137, %v3138
      %v3178 = vadd.f32 %v3177, %v3139
      %v3179 = vsel %vm438, %v3140, 0.0
      %v3180 = vadd.f32 %v3178, %v3179
      %3181 = vadd.xlane.f32.xlu0 %v3180
      %v3182 = vpop.xlane.xlu0 %3181
      %v3183 = vadd.f32 %v3141, %v3142
      %v3184 = vadd.f32 %v3183, %v3143
      %v3185 = vsel %vm438, %v3144, 0.0
      %v3186 = vadd.f32 %v3184, %v3185
      %3187 = vadd.xlane.f32.xlu0 %v3186
      %v3188 = vpop.xlane.xlu0 %3187
      %v3189 = vadd.f32 %v3145, %v3146
      %v3190 = vadd.f32 %v3189, %v3147
      %v3191 = vsel %vm438, %v3148, 0.0
      %v3192 = vadd.f32 %v3190, %v3191
      %3193 = vadd.xlane.f32.xlu0 %v3192
      %v3194 = vpop.xlane.xlu0 %3193
      %v3195 = vadd.f32 %v3149, %v3150
      %v3196 = vadd.f32 %v3195, %v3151
      %v3197 = vsel %vm438, %v3152, 0.0
      %v3198 = vadd.f32 %v3196, %v3197
      %3199 = vadd.xlane.f32.xlu0 %v3198
      %v3200 = vpop.xlane.xlu0 %3199
      %v3201 = vmul.f32 %v3158, %v485
      %v3202 = vmul.f32 %v3164, %v485
      %v3203 = vmul.f32 %v3170, %v485
      %v3204 = vmul.f32 %v3176, %v485
      %v3205 = vmul.f32 %v3182, %v485
      %v3206 = vmul.f32 %v3188, %v485
      %v3207 = vmul.f32 %v3194, %v485
      %v3208 = vmul.f32 %v3200, %v485
      %v3209 = vsub.f32 %v3121, %v3201
      %v3210 = vsub.f32 %v3122, %v3201
      %v3211 = vsub.f32 %v3123, %v3201
      %v3212 = vsub.f32 %v3124, %v3201
      %v3213 = vsub.f32 %v3125, %v3202
      %v3214 = vsub.f32 %v3126, %v3202
      %v3215 = vsub.f32 %v3127, %v3202
      %v3216 = vsub.f32 %v3128, %v3202
      %v3217 = vsub.f32 %v3129, %v3203
      %v3218 = vsub.f32 %v3130, %v3203
      %v3219 = vsub.f32 %v3131, %v3203
      %v3220 = vsub.f32 %v3132, %v3203
      %v3221 = vsub.f32 %v3133, %v3204
      %v3222 = vsub.f32 %v3134, %v3204
      %v3223 = vsub.f32 %v3135, %v3204
      %v3224 = vsub.f32 %v3136, %v3204
      %v3225 = vsub.f32 %v3137, %v3205
      %v3226 = vsub.f32 %v3138, %v3205
      %v3227 = vsub.f32 %v3139, %v3205
      %v3228 = vsub.f32 %v3140, %v3205
      %v3229 = vsub.f32 %v3141, %v3206
      %v3230 = vsub.f32 %v3142, %v3206
      %v3231 = vsub.f32 %v3143, %v3206
      %v3232 = vsub.f32 %v3144, %v3206
      %v3233 = vsub.f32 %v3145, %v3207
      %v3234 = vsub.f32 %v3146, %v3207
      %v3235 = vsub.f32 %v3147, %v3207
      %v3236 = vsub.f32 %v3148, %v3207
      %v3237 = vsub.f32 %v3149, %v3208
      %v3238 = vsub.f32 %v3150, %v3208
      %v3239 = vsub.f32 %v3151, %v3208
      %v3240 = vsub.f32 %v3152, %v3208
      %v3241 = vmul.f32 %v3209, %v3209
      %v3242 = vmul.f32 %v3210, %v3210
      %v3243 = vmul.f32 %v3211, %v3211
      %v3244 = vmul.f32 %v3212, %v3212
      %v3245 = vmul.f32 %v3213, %v3213
      %v3246 = vmul.f32 %v3214, %v3214
      %v3247 = vmul.f32 %v3215, %v3215
      %v3248 = vmul.f32 %v3216, %v3216
      %v3249 = vmul.f32 %v3217, %v3217
      %v3250 = vmul.f32 %v3218, %v3218
      %v3251 = vmul.f32 %v3219, %v3219
      %v3252 = vmul.f32 %v3220, %v3220
      %v3253 = vmul.f32 %v3221, %v3221
      %v3254 = vmul.f32 %v3222, %v3222
      %v3255 = vmul.f32 %v3223, %v3223
      %v3256 = vmul.f32 %v3224, %v3224
      %v3257 = vmul.f32 %v3225, %v3225
      %v3258 = vmul.f32 %v3226, %v3226
      %v3259 = vmul.f32 %v3227, %v3227
      %v3260 = vmul.f32 %v3228, %v3228
      %v3261 = vmul.f32 %v3229, %v3229
      %v3262 = vmul.f32 %v3230, %v3230
      %v3263 = vmul.f32 %v3231, %v3231
      %v3264 = vmul.f32 %v3232, %v3232
      %v3265 = vmul.f32 %v3233, %v3233
      %v3266 = vmul.f32 %v3234, %v3234
      %v3267 = vmul.f32 %v3235, %v3235
      %v3268 = vmul.f32 %v3236, %v3236
      %v3269 = vmul.f32 %v3237, %v3237
      %v3270 = vmul.f32 %v3238, %v3238
      %v3271 = vmul.f32 %v3239, %v3239
      %v3272 = vmul.f32 %v3240, %v3240
      %v3273 = vadd.f32 %v3241, %v3242
      %v3274 = vadd.f32 %v3273, %v3243
      %v3275 = vsel %vm438, %v3244, 0.0
      %v3276 = vadd.f32 %v3274, %v3275
      %3277 = vadd.xlane.f32.xlu0 %v3276
      %v3278 = vpop.xlane.xlu0 %3277
      %v3279 = vadd.f32 %v3245, %v3246
      %v3280 = vadd.f32 %v3279, %v3247
      %v3281 = vsel %vm438, %v3248, 0.0
      %v3282 = vadd.f32 %v3280, %v3281
      %3283 = vadd.xlane.f32.xlu0 %v3282
      %v3284 = vpop.xlane.xlu0 %3283
      %v3285 = vadd.f32 %v3249, %v3250
      %v3286 = vadd.f32 %v3285, %v3251
      %v3287 = vsel %vm438, %v3252, 0.0
      %v3288 = vadd.f32 %v3286, %v3287
      %3289 = vadd.xlane.f32.xlu0 %v3288
      %v3290 = vpop.xlane.xlu0 %3289
      %v3291 = vadd.f32 %v3253, %v3254
      %v3292 = vadd.f32 %v3291, %v3255
      %v3293 = vsel %vm438, %v3256, 0.0
      %v3294 = vadd.f32 %v3292, %v3293
      %3295 = vadd.xlane.f32.xlu0 %v3294
      %v3296 = vpop.xlane.xlu0 %3295
      %v3297 = vadd.f32 %v3257, %v3258
      %v3298 = vadd.f32 %v3297, %v3259
      %v3299 = vsel %vm438, %v3260, 0.0
      %v3300 = vadd.f32 %v3298, %v3299
      %3301 = vadd.xlane.f32.xlu0 %v3300
      %v3302 = vpop.xlane.xlu0 %3301
      %v3303 = vadd.f32 %v3261, %v3262
      %v3304 = vadd.f32 %v3303, %v3263
      %v3305 = vsel %vm438, %v3264, 0.0
      %v3306 = vadd.f32 %v3304, %v3305
      %3307 = vadd.xlane.f32.xlu0 %v3306
      %v3308 = vpop.xlane.xlu0 %3307
      %v3309 = vadd.f32 %v3265, %v3266
      %v3310 = vadd.f32 %v3309, %v3267
      %v3311 = vsel %vm438, %v3268, 0.0
      %v3312 = vadd.f32 %v3310, %v3311
      %3313 = vadd.xlane.f32.xlu0 %v3312
      %v3314 = vpop.xlane.xlu0 %3313
      %v3315 = vadd.f32 %v3269, %v3270
      %v3316 = vadd.f32 %v3315, %v3271
      %v3317 = vsel %vm438, %v3272, 0.0
      %v3318 = vadd.f32 %v3316, %v3317
      %3319 = vadd.xlane.f32.xlu0 %v3318
      %v3320 = vpop.xlane.xlu0 %3319
      %v3321 = vmul.f32 %v3278, 0.0025062656
      %v3322 = vmul.f32 %v3284, 0.0025062656
      %v3323 = vmul.f32 %v3290, 0.0025062656
      %v3324 = vmul.f32 %v3296, 0.0025062656
      %v3325 = vmul.f32 %v3302, 0.0025062656
      %v3326 = vmul.f32 %v3308, 0.0025062656
      %v3327 = vmul.f32 %v3314, 0.0025062656
      %v3328 = vmul.f32 %v3320, 0.0025062656
      %v3329 = vrsqrt.pop %v3321
      %v3330 = vmul.f32 %v3321, %v3329
      %vm3331 = vcmp.eq.f32.partialorder %v3321, inf
      %v3332 = vsel %vm3331, %v3321, %v3330
      %vm3333 = vcmp.eq.f32.partialorder %v3321, 0.0
      %v3334 = vand.u32 %v3321, 2147483648
      %v3335 = vsel %vm3333, %v3334, %v3332
      %v3336 = vrsqrt.pop %v3322
      %v3337 = vmul.f32 %v3322, %v3336
      %vm3338 = vcmp.eq.f32.partialorder %v3322, inf
      %v3339 = vsel %vm3338, %v3322, %v3337
      %vm3340 = vcmp.eq.f32.partialorder %v3322, 0.0
      %v3341 = vand.u32 %v3322, 2147483648
      %v3342 = vsel %vm3340, %v3341, %v3339
      %v3343 = vrsqrt.pop %v3323
      %v3344 = vmul.f32 %v3323, %v3343
      %vm3345 = vcmp.eq.f32.partialorder %v3323, inf
      %v3346 = vsel %vm3345, %v3323, %v3344
      %vm3347 = vcmp.eq.f32.partialorder %v3323, 0.0
      %v3348 = vand.u32 %v3323, 2147483648
      %v3349 = vsel %vm3347, %v3348, %v3346
      %v3350 = vrsqrt.pop %v3324
      %v3351 = vmul.f32 %v3324, %v3350
      %vm3352 = vcmp.eq.f32.partialorder %v3324, inf
      %v3353 = vsel %vm3352, %v3324, %v3351
      %vm3354 = vcmp.eq.f32.partialorder %v3324, 0.0
      %v3355 = vand.u32 %v3324, 2147483648
      %v3356 = vsel %vm3354, %v3355, %v3353
      %v3357 = vrsqrt.pop %v3325
      %v3358 = vmul.f32 %v3325, %v3357
      %vm3359 = vcmp.eq.f32.partialorder %v3325, inf
      %v3360 = vsel %vm3359, %v3325, %v3358
      %vm3361 = vcmp.eq.f32.partialorder %v3325, 0.0
      %v3362 = vand.u32 %v3325, 2147483648
      %v3363 = vsel %vm3361, %v3362, %v3360
      %v3364 = vrsqrt.pop %v3326
      %v3365 = vmul.f32 %v3326, %v3364
      %vm3366 = vcmp.eq.f32.partialorder %v3326, inf
      %v3367 = vsel %vm3366, %v3326, %v3365
      %vm3368 = vcmp.eq.f32.partialorder %v3326, 0.0
      %v3369 = vand.u32 %v3326, 2147483648
      %v3370 = vsel %vm3368, %v3369, %v3367
      %v3371 = vrsqrt.pop %v3327
      %v3372 = vmul.f32 %v3327, %v3371
      %vm3373 = vcmp.eq.f32.partialorder %v3327, inf
      %v3374 = vsel %vm3373, %v3327, %v3372
      %vm3375 = vcmp.eq.f32.partialorder %v3327, 0.0
      %v3376 = vand.u32 %v3327, 2147483648
      %v3377 = vsel %vm3375, %v3376, %v3374
      %v3378 = vrsqrt.pop %v3328
      %v3379 = vmul.f32 %v3328, %v3378
      %vm3380 = vcmp.eq.f32.partialorder %v3328, inf
      %v3381 = vsel %vm3380, %v3328, %v3379
      %vm3382 = vcmp.eq.f32.partialorder %v3328, 0.0
      %v3383 = vand.u32 %v3328, 2147483648
      %v3384 = vsel %vm3382, %v3383, %v3381
      %v3385 = vmul.f32 %v674, %v3209
      %v3386 = vmul.f32 %v678, %v3210
      %v3387 = vmul.f32 %v682, %v3211
      %v3388 = vmul.f32 %v686, %v3212
      %v3389 = vmul.f32 %v674, %v3213
      %v3390 = vmul.f32 %v678, %v3214
      %v3391 = vmul.f32 %v682, %v3215
      %v3392 = vmul.f32 %v686, %v3216
      %v3393 = vmul.f32 %v674, %v3217
      %v3394 = vmul.f32 %v678, %v3218
      %v3395 = vmul.f32 %v682, %v3219
      %v3396 = vmul.f32 %v686, %v3220
      %v3397 = vmul.f32 %v674, %v3221
      %v3398 = vmul.f32 %v678, %v3222
      %v3399 = vmul.f32 %v682, %v3223
      %v3400 = vmul.f32 %v686, %v3224
      %v3401 = vmul.f32 %v674, %v3225
      %v3402 = vmul.f32 %v678, %v3226
      %v3403 = vmul.f32 %v682, %v3227
      %v3404 = vmul.f32 %v686, %v3228
      %v3405 = vmul.f32 %v674, %v3229
      %v3406 = vmul.f32 %v678, %v3230
      %v3407 = vmul.f32 %v682, %v3231
      %v3408 = vmul.f32 %v686, %v3232
      %v3409 = vmul.f32 %v674, %v3233
      %v3410 = vmul.f32 %v678, %v3234
      %v3411 = vmul.f32 %v682, %v3235
      %v3412 = vmul.f32 %v686, %v3236
      %v3413 = vmul.f32 %v674, %v3237
      %v3414 = vmul.f32 %v678, %v3238
      %v3415 = vmul.f32 %v682, %v3239
      %v3416 = vmul.f32 %v686, %v3240
      %v3417 = vadd.f32 %v3335, 1e-06
      %v3418 = vadd.f32 %v3342, 1e-06
      %v3419 = vadd.f32 %v3349, 1e-06
      %v3420 = vadd.f32 %v3356, 1e-06
      %v3421 = vadd.f32 %v3363, 1e-06
      %v3422 = vadd.f32 %v3370, 1e-06
      %v3423 = vadd.f32 %v3377, 1e-06
      %v3424 = vadd.f32 %v3384, 1e-06
      %v3425 = vrcp.pop %v3417
      %v3426 = vrcp.pop %v3418
      %v3427 = vrcp.pop %v3419
      %v3428 = vrcp.pop %v3420
      %v3429 = vrcp.pop %v3421
      %v3430 = vrcp.pop %v3422
      %v3431 = vrcp.pop %v3423
      %v3432 = vrcp.pop %v3424
      %v3433 = vmul.f32 %v3385, %v3425
      %v3434 = vmul.f32 %v3386, %v3425
      %v3435 = vmul.f32 %v3387, %v3425
      %v3436 = vmul.f32 %v3388, %v3425
      %v3437 = vmul.f32 %v3389, %v3426
      %v3438 = vmul.f32 %v3390, %v3426
      %v3439 = vmul.f32 %v3391, %v3426
      %v3440 = vmul.f32 %v3392, %v3426
      %v3441 = vmul.f32 %v3393, %v3427
      %v3442 = vmul.f32 %v3394, %v3427
      %v3443 = vmul.f32 %v3395, %v3427
      %v3444 = vmul.f32 %v3396, %v3427
      %v3445 = vmul.f32 %v3397, %v3428
      %v3446 = vmul.f32 %v3398, %v3428
      %v3447 = vmul.f32 %v3399, %v3428
      %v3448 = vmul.f32 %v3400, %v3428
      %v3449 = vmul.f32 %v3401, %v3429
      %v3450 = vmul.f32 %v3402, %v3429
      %v3451 = vmul.f32 %v3403, %v3429
      %v3452 = vmul.f32 %v3404, %v3429
      %v3453 = vmul.f32 %v3405, %v3430
      %v3454 = vmul.f32 %v3406, %v3430
      %v3455 = vmul.f32 %v3407, %v3430
      %v3456 = vmul.f32 %v3408, %v3430
      %v3457 = vmul.f32 %v3409, %v3431
      %v3458 = vmul.f32 %v3410, %v3431
      %v3459 = vmul.f32 %v3411, %v3431
      %v3460 = vmul.f32 %v3412, %v3431
      %v3461 = vmul.f32 %v3413, %v3432
      %v3462 = vmul.f32 %v3414, %v3432
      %v3463 = vmul.f32 %v3415, %v3432
      %v3464 = vmul.f32 %v3416, %v3432
      %v3465 = vadd.f32 %v3433, %v775
      %v3466 = vadd.f32 %v3434, %v779
      %v3467 = vadd.f32 %v3435, %v783
      %v3468 = vadd.f32 %v3436, %v787
      %v3469 = vadd.f32 %v3437, %v775
      %v3470 = vadd.f32 %v3438, %v779
      %v3471 = vadd.f32 %v3439, %v783
      %v3472 = vadd.f32 %v3440, %v787
      %v3473 = vadd.f32 %v3441, %v775
      %v3474 = vadd.f32 %v3442, %v779
      %v3475 = vadd.f32 %v3443, %v783
      %v3476 = vadd.f32 %v3444, %v787
      %v3477 = vadd.f32 %v3445, %v775
      %v3478 = vadd.f32 %v3446, %v779
      %v3479 = vadd.f32 %v3447, %v783
      %v3480 = vadd.f32 %v3448, %v787
      %v3481 = vadd.f32 %v3449, %v775
      %v3482 = vadd.f32 %v3450, %v779
      %v3483 = vadd.f32 %v3451, %v783
      %v3484 = vadd.f32 %v3452, %v787
      %v3485 = vadd.f32 %v3453, %v775
      %v3486 = vadd.f32 %v3454, %v779
      %v3487 = vadd.f32 %v3455, %v783
      %v3488 = vadd.f32 %v3456, %v787
      %v3489 = vadd.f32 %v3457, %v775
      %v3490 = vadd.f32 %v3458, %v779
      %v3491 = vadd.f32 %v3459, %v783
      %v3492 = vadd.f32 %v3460, %v787
      %v3493 = vadd.f32 %v3461, %v775
      %v3494 = vadd.f32 %v3462, %v779
      %v3495 = vadd.f32 %v3463, %v783
      %v3496 = vadd.f32 %v3464, %v787
      %v3498 = vlaneseq
      %v3499 = vshrl.u32 %v3498, 7
      %v3500 = vsub.s32 0, %v3499
      %v3501 = vrot.slane %v1729, %v3500
      %v3502 = vlaneseq
      %v3503 = vshrl.u32 %v3502, 7
      %v3504 = vsub.s32 1, %v3503
      %v3505 = vrot.slane %v1729, %v3504
      %v3506 = vlaneseq
      %v3507 = vshrl.u32 %v3506, 7
      %v3508 = vsub.s32 2, %v3507
      %v3509 = vrot.slane %v1729, %v3508
      %v3510 = vlaneseq
      %v3511 = vshrl.u32 %v3510, 7
      %v3512 = vsub.s32 3, %v3511
      %v3513 = vrot.slane %v1729, %v3512
      %v3519 = vsel %vm438, %v3468, 0
      %v3522 = vsel %vm438, %v3472, 0
      %v3525 = vsel %vm438, %v3476, 0
      %v3528 = vsel %vm438, %v3480, 0
      %v3531 = vsel %vm438, %v3484, 0
      %v3534 = vsel %vm438, %v3488, 0
      %v3537 = vsel %vm438, %v3492, 0
      %v3540 = vsel %vm438, %v3496, 0
      %3542 = vmatprep.subr.mxu0 %v1530
      %3543 = vmatpush1.msra.mxu0 %v1529
      %3544 = vmatprep.subr.mxu0 %v1534
      %3545 = vmatpush1.msra.mxu0 %v1533
      %3546 = vmatprep.subr.mxu0 %v1538
      %3547 = vmatpush1.msra.mxu0 %v1537
      %3548 = vmatprep.subr.mxu0 %v1542
      %3549 = vmatpush1.msra.mxu0 %v1541
      %3550 = vmatprep.subr.mxu0 %v1546
      %3551 = vmatpush1.msra.mxu0 %v1545
      %3552 = vmatprep.subr.mxu0 %v1550
      %3553 = vmatpush1.msra.mxu0 %v1549
      %3554 = vmatprep.subr.mxu0 %v1554
      %3555 = vmatpush1.msra.mxu0 %v1553
      %3556 = vmatprep.subr.mxu0 %v1558
      %3557 = vmatpush1.msra.mxu0 %v1557
      %3558 = vmatprep.subr.mxu0 %v1562
      %3559 = vmatpush1.msra.mxu0 %v1561
      %3560 = vmatprep.subr.mxu0 %v1566
      %3561 = vmatpush1.msra.mxu0 %v1565
      %3562 = vmatprep.subr.mxu0 %v1570
      %3563 = vmatpush1.msra.mxu0 %v1569
      %3564 = vmatprep.subr.mxu0 %v1574
      %3565 = vmatpush1.msra.mxu0 %v1573
      %3566 = vmatprep.subr.mxu0 %v1578
      %3567 = vmatpush1.msra.mxu0 %v1577
      %3568 = vmatprep.subr.mxu0 %v1582
      %3569 = vmatpush1.msra.mxu0 %v1581
      %3570 = vmatprep.subr.mxu0 %v1586
      %3571 = vmatpush1.msra.mxu0 %v1585
      %3572 = vmatprep.subr.mxu0 %v1590
      %3573 = vmatpush1.msra.mxu0 %v1589
      %3574 = vmatprep.subr.mxu0 %v1594
      %3575 = vmatpush1.msra.mxu0 %v1593
      %3576 = vmatprep.subr.mxu0 %v1598
      %3577 = vmatpush1.msra.mxu0 %v1597
      %3578 = vmatprep.subr.mxu0 %v1602
      %3579 = vmatpush1.msra.mxu0 %v1601
      %3580 = vmatprep.subr.mxu0 %v1606
      %3581 = vmatpush1.msra.mxu0 %v1605
      %3582 = vmatprep.subr.mxu0 %v1610
      %3583 = vmatpush1.msra.mxu0 %v1609
      %3584 = vmatprep.subr.mxu0 %v1614
      %3585 = vmatpush1.msra.mxu0 %v1613
      %3586 = vmatprep.subr.mxu0 %v1618
      %3587 = vmatpush1.msra.mxu0 %v1617
      %3588 = vmatprep.subr.mxu0 %v1622
      %3589 = vmatpush1.msra.mxu0 %v1621
      %3590 = vmatprep.subr.mxu0 %v1626
      %3591 = vmatpush1.msra.mxu0 %v1625
      %3592 = vmatprep.subr.mxu0 %v1630
      %3593 = vmatpush1.msra.mxu0 %v1629
      %3594 = vmatprep.subr.mxu0 %v1634
      %3595 = vmatpush1.msra.mxu0 %v1633
      %3596 = vmatprep.subr.mxu0 %v1638
      %3597 = vmatpush1.msra.mxu0 %v1637
      %3598 = vmatprep.subr.mxu0 %v1642
      %3599 = vmatpush1.msra.mxu0 %v1641
      %3600 = vmatprep.subr.mxu0 %v1646
      %3601 = vmatpush1.msra.mxu0 %v1645
      %3602 = vmatprep.subr.mxu0 %v1650
      %3603 = vmatpush1.msra.mxu0 %v1649
      %3604 = vmatprep.subr.mxu0 %v1654
      %3605 = vmatpush1.msra.mxu0 %v1653
      %3606 = vmatprep.mubr.f32.mxu0 %v3466
      %3607 = vmatmul.mubr.f32.gmra.mrb[0].mxu0 %v3465
      %v3608 = vpop.f32.mrb[0].mxu0
      %v3609 = vadd.f32 %v3501, %v3608
      %v3610 = vpop.f32.mrb[0].mxu0
      %v3611 = vadd.f32 %v3505, %v3610
      %3612 = vmatprep.mubr.f32.mxu0 %v3470
      %3613 = vmatmul.mubr.f32.gmra.mrb[0].mxu0 %v3469
      %v3614 = vpop.f32.mrb[0].mxu0
      %v3615 = vadd.f32 %v3501, %v3614
      %v3616 = vpop.f32.mrb[0].mxu0
      %v3617 = vadd.f32 %v3505, %v3616
      %3618 = vmatprep.mubr.f32.mxu0 %v3474
      %3619 = vmatmul.mubr.f32.gmra.mrb[0].mxu0 %v3473
      %v3620 = vpop.f32.mrb[0].mxu0
      %v3621 = vadd.f32 %v3501, %v3620
      %v3622 = vpop.f32.mrb[0].mxu0
      %v3623 = vadd.f32 %v3505, %v3622
      %3624 = vmatprep.mubr.f32.mxu0 %v3478
      %3625 = vmatmul.mubr.f32.gmra.mrb[0].mxu0 %v3477
      %v3626 = vpop.f32.mrb[0].mxu0
      %v3627 = vadd.f32 %v3501, %v3626
      %v3628 = vpop.f32.mrb[0].mxu0
      %v3629 = vadd.f32 %v3505, %v3628
      %3630 = vmatprep.mubr.f32.mxu0 %v3482
      %3631 = vmatmul.mubr.f32.gmra.mrb[0].mxu0 %v3481
      %v3632 = vpop.f32.mrb[0].mxu0
      %v3633 = vadd.f32 %v3501, %v3632
      %v3634 = vpop.f32.mrb[0].mxu0
      %v3635 = vadd.f32 %v3505, %v3634
      %3636 = vmatprep.mubr.f32.mxu0 %v3486
      %3637 = vmatmul.mubr.f32.gmra.mrb[0].mxu0 %v3485
      %v3638 = vpop.f32.mrb[0].mxu0
      %v3639 = vadd.f32 %v3501, %v3638
      %v3640 = vpop.f32.mrb[0].mxu0
      %v3641 = vadd.f32 %v3505, %v3640
      %3642 = vmatprep.mubr.f32.mxu0 %v3490
      %3643 = vmatmul.mubr.f32.gmra.mrb[0].mxu0 %v3489
      %v3644 = vpop.f32.mrb[0].mxu0
      %v3645 = vadd.f32 %v3501, %v3644
      %v3646 = vpop.f32.mrb[0].mxu0
      %v3647 = vadd.f32 %v3505, %v3646
      %3648 = vmatprep.mubr.f32.mxu0 %v3494
      %3649 = vmatmul.mubr.f32.gmra.mrb[0].mxu0 %v3493
      %v3650 = vpop.f32.mrb[0].mxu0
      %v3651 = vadd.f32 %v3501, %v3650
      %v3652 = vpop.f32.mrb[0].mxu0
      %v3653 = vadd.f32 %v3505, %v3652
      %3654 = vdwg.mxu0
      %3655 = vmatprep.subr.mxu0 %v1658
      %3656 = vmatpush1.msra.mxu0 %v1657
      %3657 = vmatprep.subr.mxu0 %v1662
      %3658 = vmatpush1.msra.mxu0 %v1661
      %3659 = vmatprep.subr.mxu0 %v1666
      %3660 = vmatpush1.msra.mxu0 %v1665
      %3661 = vmatprep.subr.mxu0 %v1670
      %3662 = vmatpush1.msra.mxu0 %v1669
      %3663 = vmatprep.subr.mxu0 %v1674
      %3664 = vmatpush1.msra.mxu0 %v1673
      %3665 = vmatprep.subr.mxu0 %v1678
      %3666 = vmatpush1.msra.mxu0 %v1677
      %3667 = vmatprep.subr.mxu0 %v1682
      %3668 = vmatpush1.msra.mxu0 %v1681
      %3669 = vmatprep.subr.mxu0 %v1686
      %3670 = vmatpush1.msra.mxu0 %v1685
      %3671 = vmatprep.subr.mxu0 %v1690
      %3672 = vmatpush1.msra.mxu0 %v1689
      %3673 = vmatprep.subr.mxu0 %v1694
      %3674 = vmatpush1.msra.mxu0 %v1693
      %3675 = vmatprep.subr.mxu0 %v1698
      %3676 = vmatpush1.msra.mxu0 %v1697
      %3677 = vmatprep.subr.mxu0 %v1702
      %3678 = vmatpush1.msra.mxu0 %v1701
      %3679 = vmatprep.subr.mxu0 %v1706
      %3680 = vmatpush1.msra.mxu0 %v1705
      %3681 = vmatprep.subr.mxu0 %v1710
      %3682 = vmatpush1.msra.mxu0 %v1709
      %3683 = vmatprep.subr.mxu0 %v1714
      %3684 = vmatpush1.msra.mxu0 %v1713
      %3685 = vmatprep.subr.mxu0 %v1718
      %3686 = vmatpush1.msra.mxu0 %v1717
      %3687 = vmatprep.subr.mxu0 %v1722
      %3688 = vmatpush1.msra.mxu0 %v1721
      %3689 = vmatprep.subr.mxu0 %v1726
      %3690 = vmatpush1.msra.mxu0 %v1725
      %3691 = vmatprep.subr.mxu0 0.0
      %3692 = vmatpush1.msra.mxu0 0.0
      %3693 = vmatprep.subr.mxu0 0.0
      %3694 = vmatpush1.msra.mxu0 0.0
      %3695 = vmatprep.subr.mxu0 0.0
      %3696 = vmatpush1.msra.mxu0 0.0
      %3697 = vmatprep.subr.mxu0 0.0
      %3698 = vmatpush1.msra.mxu0 0.0
      %3699 = vmatprep.subr.mxu0 0.0
      %3700 = vmatpush1.msra.mxu0 0.0
      %3701 = vmatprep.subr.mxu0 0.0
      %3702 = vmatpush1.msra.mxu0 0.0
      %3703 = vmatprep.subr.mxu0 0.0
      %3704 = vmatpush1.msra.mxu0 0.0
      %3705 = vmatprep.subr.mxu0 0.0
      %3706 = vmatpush1.msra.mxu0 0.0
      %3707 = vmatprep.subr.mxu0 0.0
      %3708 = vmatpush1.msra.mxu0 0.0
      %3709 = vmatprep.subr.mxu0 0.0
      %3710 = vmatpush1.msra.mxu0 0.0
      %3711 = vmatprep.subr.mxu0 0.0
      %3712 = vmatpush1.msra.mxu0 0.0
      %3713 = vmatprep.subr.mxu0 0.0
      %3714 = vmatpush1.msra.mxu0 0.0
      %3715 = vmatprep.subr.mxu0 0.0
      %3716 = vmatpush1.msra.mxu0 0.0
      %3717 = vmatprep.subr.mxu0 0.0
      %3718 = vmatpush1.msra.mxu0 0.0
      %3719 = vmatprep.mubr.f32.mxu0 %v3519
      %3720 = vmatmul.mubr.f32.gmra.mrb[0].mxu0 %v3467
      %v3721 = vpop.f32.mrb[0].mxu0
      %v3722 = vadd.f32 %v3609, %v3721
      %v3723 = vpop.f32.mrb[0].mxu0
      %v3724 = vadd.f32 %v3611, %v3723
      %3725 = vmatprep.mubr.f32.mxu0 %v3522
      %3726 = vmatmul.mubr.f32.gmra.mrb[0].mxu0 %v3471
      %v3727 = vpop.f32.mrb[0].mxu0
      %v3728 = vadd.f32 %v3615, %v3727
      %v3729 = vpop.f32.mrb[0].mxu0
      %v3730 = vadd.f32 %v3617, %v3729
      %3731 = vmatprep.mubr.f32.mxu0 %v3525
      %3732 = vmatmul.mubr.f32.gmra.mrb[0].mxu0 %v3475
      %v3733 = vpop.f32.mrb[0].mxu0
      %v3734 = vadd.f32 %v3621, %v3733
      %v3735 = vpop.f32.mrb[0].mxu0
      %v3736 = vadd.f32 %v3623, %v3735
      %3737 = vmatprep.mubr.f32.mxu0 %v3528
      %3738 = vmatmul.mubr.f32.gmra.mrb[0].mxu0 %v3479
      %v3739 = vpop.f32.mrb[0].mxu0
      %v3740 = vadd.f32 %v3627, %v3739
      %v3741 = vpop.f32.mrb[0].mxu0
      %v3742 = vadd.f32 %v3629, %v3741
      %3743 = vmatprep.mubr.f32.mxu0 %v3531
      %3744 = vmatmul.mubr.f32.gmra.mrb[0].mxu0 %v3483
      %v3745 = vpop.f32.mrb[0].mxu0
      %v3746 = vadd.f32 %v3633, %v3745
      %v3747 = vpop.f32.mrb[0].mxu0
      %v3748 = vadd.f32 %v3635, %v3747
      %3749 = vmatprep.mubr.f32.mxu0 %v3534
      %3750 = vmatmul.mubr.f32.gmra.mrb[0].mxu0 %v3487
      %v3751 = vpop.f32.mrb[0].mxu0
      %v3752 = vadd.f32 %v3639, %v3751
      %v3753 = vpop.f32.mrb[0].mxu0
      %v3754 = vadd.f32 %v3641, %v3753
      %3755 = vmatprep.mubr.f32.mxu0 %v3537
      %3756 = vmatmul.mubr.f32.gmra.mrb[0].mxu0 %v3491
      %v3757 = vpop.f32.mrb[0].mxu0
      %v3758 = vadd.f32 %v3645, %v3757
      %v3759 = vpop.f32.mrb[0].mxu0
      %v3760 = vadd.f32 %v3647, %v3759
      %3761 = vmatprep.mubr.f32.mxu0 %v3540
      %3762 = vmatmul.mubr.f32.gmra.mrb[0].mxu0 %v3495
      %v3763 = vpop.f32.mrb[0].mxu0
      %v3764 = vadd.f32 %v3651, %v3763
      %v3765 = vpop.f32.mrb[0].mxu0
      %v3766 = vadd.f32 %v3653, %v3765
      %3767 = vdwg.mxu0
      %3768 = vmatprep.subr.mxu0 %v1532
      %3769 = vmatpush1.msra.mxu0 %v1531
      %3770 = vmatprep.subr.mxu0 %v1536
      %3771 = vmatpush1.msra.mxu0 %v1535
      %3772 = vmatprep.subr.mxu0 %v1540
      %3773 = vmatpush1.msra.mxu0 %v1539
      %3774 = vmatprep.subr.mxu0 %v1544
      %3775 = vmatpush1.msra.mxu0 %v1543
      %3776 = vmatprep.subr.mxu0 %v1548
      %3777 = vmatpush1.msra.mxu0 %v1547
      %3778 = vmatprep.subr.mxu0 %v1552
      %3779 = vmatpush1.msra.mxu0 %v1551
      %3780 = vmatprep.subr.mxu0 %v1556
      %3781 = vmatpush1.msra.mxu0 %v1555
      %3782 = vmatprep.subr.mxu0 %v1560
      %3783 = vmatpush1.msra.mxu0 %v1559
      %3784 = vmatprep.subr.mxu0 %v1564
      %3785 = vmatpush1.msra.mxu0 %v1563
      %3786 = vmatprep.subr.mxu0 %v1568
      %3787 = vmatpush1.msra.mxu0 %v1567
      %3788 = vmatprep.subr.mxu0 %v1572
      %3789 = vmatpush1.msra.mxu0 %v1571
      %3790 = vmatprep.subr.mxu0 %v1576
      %3791 = vmatpush1.msra.mxu0 %v1575
      %3792 = vmatprep.subr.mxu0 %v1580
      %3793 = vmatpush1.msra.mxu0 %v1579
      %3794 = vmatprep.subr.mxu0 %v1584
      %3795 = vmatpush1.msra.mxu0 %v1583
      %3796 = vmatprep.subr.mxu0 %v1588
      %3797 = vmatpush1.msra.mxu0 %v1587
      %3798 = vmatprep.subr.mxu0 %v1592
      %3799 = vmatpush1.msra.mxu0 %v1591
      %3800 = vmatprep.subr.mxu0 %v1596
      %3801 = vmatpush1.msra.mxu0 %v1595
      %3802 = vmatprep.subr.mxu0 %v1600
      %3803 = vmatpush1.msra.mxu0 %v1599
      %3804 = vmatprep.subr.mxu0 %v1604
      %3805 = vmatpush1.msra.mxu0 %v1603
      %3806 = vmatprep.subr.mxu0 %v1608
      %3807 = vmatpush1.msra.mxu0 %v1607
      %3808 = vmatprep.subr.mxu0 %v1612
      %3809 = vmatpush1.msra.mxu0 %v1611
      %3810 = vmatprep.subr.mxu0 %v1616
      %3811 = vmatpush1.msra.mxu0 %v1615
      %3812 = vmatprep.subr.mxu0 %v1620
      %3813 = vmatpush1.msra.mxu0 %v1619
      %3814 = vmatprep.subr.mxu0 %v1624
      %3815 = vmatpush1.msra.mxu0 %v1623
      %3816 = vmatprep.subr.mxu0 %v1628
      %3817 = vmatpush1.msra.mxu0 %v1627
      %3818 = vmatprep.subr.mxu0 %v1632
      %3819 = vmatpush1.msra.mxu0 %v1631
      %3820 = vmatprep.subr.mxu0 %v1636
      %3821 = vmatpush1.msra.mxu0 %v1635
      %3822 = vmatprep.subr.mxu0 %v1640
      %3823 = vmatpush1.msra.mxu0 %v1639
      %3824 = vmatprep.subr.mxu0 %v1644
      %3825 = vmatpush1.msra.mxu0 %v1643
      %3826 = vmatprep.subr.mxu0 %v1648
      %3827 = vmatpush1.msra.mxu0 %v1647
      %3828 = vmatprep.subr.mxu0 %v1652
      %3829 = vmatpush1.msra.mxu0 %v1651
      %3830 = vmatprep.subr.mxu0 %v1656
      %3831 = vmatpush1.msra.mxu0 %v1655
      %3832 = vmatprep.mubr.f32.mxu0 %v3466
      %3833 = vmatmul.mubr.f32.gmra.mrb[0].mxu0 %v3465
      %v3834 = vpop.f32.mrb[0].mxu0
      %v3835 = vadd.f32 %v3509, %v3834
      %v3836 = vpop.f32.mrb[0].mxu0
      %v3837 = vadd.f32 %v3513, %v3836
      %3838 = vmatprep.mubr.f32.mxu0 %v3470
      %3839 = vmatmul.mubr.f32.gmra.mrb[0].mxu0 %v3469
      %v3840 = vpop.f32.mrb[0].mxu0
      %v3841 = vadd.f32 %v3509, %v3840
      %v3842 = vpop.f32.mrb[0].mxu0
      %v3843 = vadd.f32 %v3513, %v3842
      %3844 = vmatprep.mubr.f32.mxu0 %v3474
      %3845 = vmatmul.mubr.f32.gmra.mrb[0].mxu0 %v3473
      %v3846 = vpop.f32.mrb[0].mxu0
      %v3847 = vadd.f32 %v3509, %v3846
      %v3848 = vpop.f32.mrb[0].mxu0
      %v3849 = vadd.f32 %v3513, %v3848
      %3850 = vmatprep.mubr.f32.mxu0 %v3478
      %3851 = vmatmul.mubr.f32.gmra.mrb[0].mxu0 %v3477
      %v3852 = vpop.f32.mrb[0].mxu0
      %v3853 = vadd.f32 %v3509, %v3852
      %v3854 = vpop.f32.mrb[0].mxu0
      %v3855 = vadd.f32 %v3513, %v3854
      %3856 = vmatprep.mubr.f32.mxu0 %v3482
      %3857 = vmatmul.mubr.f32.gmra.mrb[0].mxu0 %v3481
      %v3858 = vpop.f32.mrb[0].mxu0
      %v3859 = vadd.f32 %v3509, %v3858
      %v3860 = vpop.f32.mrb[0].mxu0
      %v3861 = vadd.f32 %v3513, %v3860
      %3862 = vmatprep.mubr.f32.mxu0 %v3486
      %3863 = vmatmul.mubr.f32.gmra.mrb[0].mxu0 %v3485
      %v3864 = vpop.f32.mrb[0].mxu0
      %v3865 = vadd.f32 %v3509, %v3864
      %v3866 = vpop.f32.mrb[0].mxu0
      %v3867 = vadd.f32 %v3513, %v3866
      %3868 = vmatprep.mubr.f32.mxu0 %v3490
      %3869 = vmatmul.mubr.f32.gmra.mrb[0].mxu0 %v3489
      %v3870 = vpop.f32.mrb[0].mxu0
      %v3871 = vadd.f32 %v3509, %v3870
      %v3872 = vpop.f32.mrb[0].mxu0
      %v3873 = vadd.f32 %v3513, %v3872
      %3874 = vmatprep.mubr.f32.mxu0 %v3494
      %3875 = vmatmul.mubr.f32.gmra.mrb[0].mxu0 %v3493
      %v3876 = vpop.f32.mrb[0].mxu0
      %v3877 = vadd.f32 %v3509, %v3876
      %v3878 = vpop.f32.mrb[0].mxu0
      %v3879 = vadd.f32 %v3513, %v3878
      %3880 = vdwg.mxu0
      %3881 = vmatprep.subr.mxu0 %v1660
      %3882 = vmatpush1.msra.mxu0 %v1659
      %3883 = vmatprep.subr.mxu0 %v1664
      %3884 = vmatpush1.msra.mxu0 %v1663
      %3885 = vmatprep.subr.mxu0 %v1668
      %3886 = vmatpush1.msra.mxu0 %v1667
      %3887 = vmatprep.subr.mxu0 %v1672
      %3888 = vmatpush1.msra.mxu0 %v1671
      %3889 = vmatprep.subr.mxu0 %v1676
      %3890 = vmatpush1.msra.mxu0 %v1675
      %3891 = vmatprep.subr.mxu0 %v1680
      %3892 = vmatpush1.msra.mxu0 %v1679
      %3893 = vmatprep.subr.mxu0 %v1684
      %3894 = vmatpush1.msra.mxu0 %v1683
      %3895 = vmatprep.subr.mxu0 %v1688
      %3896 = vmatpush1.msra.mxu0 %v1687
      %3897 = vmatprep.subr.mxu0 %v1692
      %3898 = vmatpush1.msra.mxu0 %v1691
      %3899 = vmatprep.subr.mxu0 %v1696
      %3900 = vmatpush1.msra.mxu0 %v1695
      %3901 = vmatprep.subr.mxu0 %v1700
      %3902 = vmatpush1.msra.mxu0 %v1699
      %3903 = vmatprep.subr.mxu0 %v1704
      %3904 = vmatpush1.msra.mxu0 %v1703
      %3905 = vmatprep.subr.mxu0 %v1708
      %3906 = vmatpush1.msra.mxu0 %v1707
      %3907 = vmatprep.subr.mxu0 %v1712
      %3908 = vmatpush1.msra.mxu0 %v1711
      %3909 = vmatprep.subr.mxu0 %v1716
      %3910 = vmatpush1.msra.mxu0 %v1715
      %3911 = vmatprep.subr.mxu0 %v1720
      %3912 = vmatpush1.msra.mxu0 %v1719
      %3913 = vmatprep.subr.mxu0 %v1724
      %3914 = vmatpush1.msra.mxu0 %v1723
      %3915 = vmatprep.subr.mxu0 %v1728
      %3916 = vmatpush1.msra.mxu0 %v1727
      %3917 = vmatprep.subr.mxu0 0.0
      %3918 = vmatpush1.msra.mxu0 0.0
      %3919 = vmatprep.subr.mxu0 0.0
      %3920 = vmatpush1.msra.mxu0 0.0
      %3921 = vmatprep.subr.mxu0 0.0
      %3922 = vmatpush1.msra.mxu0 0.0
      %3923 = vmatprep.subr.mxu0 0.0
      %3924 = vmatpush1.msra.mxu0 0.0
      %3925 = vmatprep.subr.mxu0 0.0
      %3926 = vmatpush1.msra.mxu0 0.0
      %3927 = vmatprep.subr.mxu0 0.0
      %3928 = vmatpush1.msra.mxu0 0.0
      %3929 = vmatprep.subr.mxu0 0.0
      %3930 = vmatpush1.msra.mxu0 0.0
      %3931 = vmatprep.subr.mxu0 0.0
      %3932 = vmatpush1.msra.mxu0 0.0
      %3933 = vmatprep.subr.mxu0 0.0
      %3934 = vmatpush1.msra.mxu0 0.0
      %3935 = vmatprep.subr.mxu0 0.0
      %3936 = vmatpush1.msra.mxu0 0.0
      %3937 = vmatprep.subr.mxu0 0.0
      %3938 = vmatpush1.msra.mxu0 0.0
      %3939 = vmatprep.subr.mxu0 0.0
      %3940 = vmatpush1.msra.mxu0 0.0
      %3941 = vmatprep.subr.mxu0 0.0
      %3942 = vmatpush1.msra.mxu0 0.0
      %3943 = vmatprep.subr.mxu0 0.0
      %3944 = vmatpush1.msra.mxu0 0.0
      %3945 = vmatprep.mubr.f32.mxu0 %v3519
      %3946 = vmatmul.mubr.f32.gmra.mrb[0].mxu0 %v3467
      %v3947 = vpop.f32.mrb[0].mxu0
      %v3948 = vadd.f32 %v3835, %v3947
      %v3949 = vpop.f32.mrb[0].mxu0
      %v3950 = vadd.f32 %v3837, %v3949
      %3951 = vmatprep.mubr.f32.mxu0 %v3522
      %3952 = vmatmul.mubr.f32.gmra.mrb[0].mxu0 %v3471
      %v3953 = vpop.f32.mrb[0].mxu0
      %v3954 = vadd.f32 %v3841, %v3953
      %v3955 = vpop.f32.mrb[0].mxu0
      %v3956 = vadd.f32 %v3843, %v3955
      %3957 = vmatprep.mubr.f32.mxu0 %v3525
      %3958 = vmatmul.mubr.f32.gmra.mrb[0].mxu0 %v3475
      %v3959 = vpop.f32.mrb[0].mxu0
      %v3960 = vadd.f32 %v3847, %v3959
      %v3961 = vpop.f32.mrb[0].mxu0
      %v3962 = vadd.f32 %v3849, %v3961
      %3963 = vmatprep.mubr.f32.mxu0 %v3528
      %3964 = vmatmul.mubr.f32.gmra.mrb[0].mxu0 %v3479
      %v3965 = vpop.f32.mrb[0].mxu0
      %v3966 = vadd.f32 %v3853, %v3965
      %v3967 = vpop.f32.mrb[0].mxu0
      %v3968 = vadd.f32 %v3855, %v3967
      %3969 = vmatprep.mubr.f32.mxu0 %v3531
      %3970 = vmatmul.mubr.f32.gmra.mrb[0].mxu0 %v3483
      %v3971 = vpop.f32.mrb[0].mxu0
      %v3972 = vadd.f32 %v3859, %v3971
      %v3973 = vpop.f32.mrb[0].mxu0
      %v3974 = vadd.f32 %v3861, %v3973
      %3975 = vmatprep.mubr.f32.mxu0 %v3534
      %3976 = vmatmul.mubr.f32.gmra.mrb[0].mxu0 %v3487
      %v3977 = vpop.f32.mrb[0].mxu0
      %v3978 = vadd.f32 %v3865, %v3977
      %v3979 = vpop.f32.mrb[0].mxu0
      %v3980 = vadd.f32 %v3867, %v3979
      %3981 = vmatprep.mubr.f32.mxu0 %v3537
      %3982 = vmatmul.mubr.f32.gmra.mrb[0].mxu0 %v3491
      %v3983 = vpop.f32.mrb[0].mxu0
      %v3984 = vadd.f32 %v3871, %v3983
      %v3985 = vpop.f32.mrb[0].mxu0
      %v3986 = vadd.f32 %v3873, %v3985
      %3987 = vmatprep.mubr.f32.mxu0 %v3540
      %3988 = vmatmul.mubr.f32.gmra.mrb[0].mxu0 %v3495
      %v3989 = vpop.f32.mrb[0].mxu0
      %v3990 = vadd.f32 %v3877, %v3989
      %v3991 = vpop.f32.mrb[0].mxu0
      %v3992 = vadd.f32 %v3879, %v3991
      %3993 = vdwg.mxu0
      %v3994 = vmax.f32 %v3722, 0.0
      %v3995 = vmax.f32 %v3724, 0.0
      %v3996 = vmax.f32 %v3948, 0.0
      %v3997 = vmax.f32 %v3950, 0.0
      %v3998 = vmax.f32 %v3728, 0.0
      %v3999 = vmax.f32 %v3730, 0.0
      %v4000 = vmax.f32 %v3954, 0.0
      %v4001 = vmax.f32 %v3956, 0.0
      %v4002 = vmax.f32 %v3734, 0.0
      %v4003 = vmax.f32 %v3736, 0.0
      %v4004 = vmax.f32 %v3960, 0.0
      %v4005 = vmax.f32 %v3962, 0.0
      %v4006 = vmax.f32 %v3740, 0.0
      %v4007 = vmax.f32 %v3742, 0.0
      %v4008 = vmax.f32 %v3966, 0.0
      %v4009 = vmax.f32 %v3968, 0.0
      %v4010 = vmax.f32 %v3746, 0.0
      %v4011 = vmax.f32 %v3748, 0.0
      %v4012 = vmax.f32 %v3972, 0.0
      %v4013 = vmax.f32 %v3974, 0.0
      %v4014 = vmax.f32 %v3752, 0.0
      %v4015 = vmax.f32 %v3754, 0.0
      %v4016 = vmax.f32 %v3978, 0.0
      %v4017 = vmax.f32 %v3980, 0.0
      %v4018 = vmax.f32 %v3758, 0.0
      %v4019 = vmax.f32 %v3760, 0.0
      %v4020 = vmax.f32 %v3984, 0.0
      %v4021 = vmax.f32 %v3986, 0.0
      %v4022 = vmax.f32 %v3764, 0.0
      %v4023 = vmax.f32 %v3766, 0.0
      %v4024 = vmax.f32 %v3990, 0.0
      %v4025 = vmax.f32 %v3992, 0.0
      %v4027 = vlaneseq
      %v4028 = vshrl.u32 %v4027, 7
      %v4029 = vsub.s32 0, %v4028
      %v4030 = vrot.slane %v1986, %v4029
      %v4031 = vlaneseq
      %v4032 = vshrl.u32 %v4031, 7
      %v4033 = vsub.s32 1, %v4032
      %v4034 = vrot.slane %v1986, %v4033
      %v4035 = vlaneseq
      %v4036 = vshrl.u32 %v4035, 7
      %v4037 = vsub.s32 2, %v4036
      %v4038 = vrot.slane %v1986, %v4037
      %v4039 = vlaneseq
      %v4040 = vshrl.u32 %v4039, 7
      %v4041 = vsub.s32 3, %v4040
      %v4042 = vrot.slane %v1986, %v4041
      %4047 = vmatprep.subr.mxu0 %v1731
      %4048 = vmatpush1.msra.mxu0 %v1730
      %4049 = vmatprep.subr.mxu0 %v1735
      %4050 = vmatpush1.msra.mxu0 %v1734
      %4051 = vmatprep.subr.mxu0 %v1739
      %4052 = vmatpush1.msra.mxu0 %v1738
      %4053 = vmatprep.subr.mxu0 %v1743
      %4054 = vmatpush1.msra.mxu0 %v1742
      %4055 = vmatprep.subr.mxu0 %v1747
      %4056 = vmatpush1.msra.mxu0 %v1746
      %4057 = vmatprep.subr.mxu0 %v1751
      %4058 = vmatpush1.msra.mxu0 %v1750
      %4059 = vmatprep.subr.mxu0 %v1755
      %4060 = vmatpush1.msra.mxu0 %v1754
      %4061 = vmatprep.subr.mxu0 %v1759
      %4062 = vmatpush1.msra.mxu0 %v1758
      %4063 = vmatprep.subr.mxu0 %v1763
      %4064 = vmatpush1.msra.mxu0 %v1762
      %4065 = vmatprep.subr.mxu0 %v1767
      %4066 = vmatpush1.msra.mxu0 %v1766
      %4067 = vmatprep.subr.mxu0 %v1771
      %4068 = vmatpush1.msra.mxu0 %v1770
      %4069 = vmatprep.subr.mxu0 %v1775
      %4070 = vmatpush1.msra.mxu0 %v1774
      %4071 = vmatprep.subr.mxu0 %v1779
      %4072 = vmatpush1.msra.mxu0 %v1778
      %4073 = vmatprep.subr.mxu0 %v1783
      %4074 = vmatpush1.msra.mxu0 %v1782
      %4075 = vmatprep.subr.mxu0 %v1787
      %4076 = vmatpush1.msra.mxu0 %v1786
      %4077 = vmatprep.subr.mxu0 %v1791
      %4078 = vmatpush1.msra.mxu0 %v1790
      %4079 = vmatprep.subr.mxu0 %v1795
      %4080 = vmatpush1.msra.mxu0 %v1794
      %4081 = vmatprep.subr.mxu0 %v1799
      %4082 = vmatpush1.msra.mxu0 %v1798
      %4083 = vmatprep.subr.mxu0 %v1803
      %4084 = vmatpush1.msra.mxu0 %v1802
      %4085 = vmatprep.subr.mxu0 %v1807
      %4086 = vmatpush1.msra.mxu0 %v1806
      %4087 = vmatprep.subr.mxu0 %v1811
      %4088 = vmatpush1.msra.mxu0 %v1810
      %4089 = vmatprep.subr.mxu0 %v1815
      %4090 = vmatpush1.msra.mxu0 %v1814
      %4091 = vmatprep.subr.mxu0 %v1819
      %4092 = vmatpush1.msra.mxu0 %v1818
      %4093 = vmatprep.subr.mxu0 %v1823
      %4094 = vmatpush1.msra.mxu0 %v1822
      %4095 = vmatprep.subr.mxu0 %v1827
      %4096 = vmatpush1.msra.mxu0 %v1826
      %4097 = vmatprep.subr.mxu0 %v1831
      %4098 = vmatpush1.msra.mxu0 %v1830
      %4099 = vmatprep.subr.mxu0 %v1835
      %4100 = vmatpush1.msra.mxu0 %v1834
      %4101 = vmatprep.subr.mxu0 %v1839
      %4102 = vmatpush1.msra.mxu0 %v1838
      %4103 = vmatprep.subr.mxu0 %v1843
      %4104 = vmatpush1.msra.mxu0 %v1842
      %4105 = vmatprep.subr.mxu0 %v1847
      %4106 = vmatpush1.msra.mxu0 %v1846
      %4107 = vmatprep.subr.mxu0 %v1851
      %4108 = vmatpush1.msra.mxu0 %v1850
      %4109 = vmatprep.subr.mxu0 %v1855
      %4110 = vmatpush1.msra.mxu0 %v1854
      %4111 = vmatprep.mubr.f32.mxu0 %v3995
      %4112 = vmatmul.mubr.f32.gmra.mrb[0].mxu0 %v3994
      %v4113 = vpop.f32.mrb[0].mxu0
      %v4114 = vadd.f32 %v4030, %v4113
      %v4115 = vpop.f32.mrb[0].mxu0
      %v4116 = vadd.f32 %v4034, %v4115
      %4117 = vmatprep.mubr.f32.mxu0 %v3999
      %4118 = vmatmul.mubr.f32.gmra.mrb[0].mxu0 %v3998
      %v4119 = vpop.f32.mrb[0].mxu0
      %v4120 = vadd.f32 %v4030, %v4119
      %v4121 = vpop.f32.mrb[0].mxu0
      %v4122 = vadd.f32 %v4034, %v4121
      %4123 = vmatprep.mubr.f32.mxu0 %v4003
      %4124 = vmatmul.mubr.f32.gmra.mrb[0].mxu0 %v4002
      %v4125 = vpop.f32.mrb[0].mxu0
      %v4126 = vadd.f32 %v4030, %v4125
      %v4127 = vpop.f32.mrb[0].mxu0
      %v4128 = vadd.f32 %v4034, %v4127
      %4129 = vmatprep.mubr.f32.mxu0 %v4007
      %4130 = vmatmul.mubr.f32.gmra.mrb[0].mxu0 %v4006
      %v4131 = vpop.f32.mrb[0].mxu0
      %v4132 = vadd.f32 %v4030, %v4131
      %v4133 = vpop.f32.mrb[0].mxu0
      %v4134 = vadd.f32 %v4034, %v4133
      %4135 = vmatprep.mubr.f32.mxu0 %v4011
      %4136 = vmatmul.mubr.f32.gmra.mrb[0].mxu0 %v4010
      %v4137 = vpop.f32.mrb[0].mxu0
      %v4138 = vadd.f32 %v4030, %v4137
      %v4139 = vpop.f32.mrb[0].mxu0
      %v4140 = vadd.f32 %v4034, %v4139
      %4141 = vmatprep.mubr.f32.mxu0 %v4015
      %4142 = vmatmul.mubr.f32.gmra.mrb[0].mxu0 %v4014
      %v4143 = vpop.f32.mrb[0].mxu0
      %v4144 = vadd.f32 %v4030, %v4143
      %v4145 = vpop.f32.mrb[0].mxu0
      %v4146 = vadd.f32 %v4034, %v4145
      %4147 = vmatprep.mubr.f32.mxu0 %v4019
      %4148 = vmatmul.mubr.f32.gmra.mrb[0].mxu0 %v4018
      %v4149 = vpop.f32.mrb[0].mxu0
      %v4150 = vadd.f32 %v4030, %v4149
      %v4151 = vpop.f32.mrb[0].mxu0
      %v4152 = vadd.f32 %v4034, %v4151
      %4153 = vmatprep.mubr.f32.mxu0 %v4023
      %4154 = vmatmul.mubr.f32.gmra.mrb[0].mxu0 %v4022
      %v4155 = vpop.f32.mrb[0].mxu0
      %v4156 = vadd.f32 %v4030, %v4155
      %v4157 = vpop.f32.mrb[0].mxu0
      %v4158 = vadd.f32 %v4034, %v4157
      %4159 = vdwg.mxu0
      %4160 = vmatprep.subr.mxu0 %v1859
      %4161 = vmatpush1.msra.mxu0 %v1858
      %4162 = vmatprep.subr.mxu0 %v1863
      %4163 = vmatpush1.msra.mxu0 %v1862
      %4164 = vmatprep.subr.mxu0 %v1867
      %4165 = vmatpush1.msra.mxu0 %v1866
      %4166 = vmatprep.subr.mxu0 %v1871
      %4167 = vmatpush1.msra.mxu0 %v1870
      %4168 = vmatprep.subr.mxu0 %v1875
      %4169 = vmatpush1.msra.mxu0 %v1874
      %4170 = vmatprep.subr.mxu0 %v1879
      %4171 = vmatpush1.msra.mxu0 %v1878
      %4172 = vmatprep.subr.mxu0 %v1883
      %4173 = vmatpush1.msra.mxu0 %v1882
      %4174 = vmatprep.subr.mxu0 %v1887
      %4175 = vmatpush1.msra.mxu0 %v1886
      %4176 = vmatprep.subr.mxu0 %v1891
      %4177 = vmatpush1.msra.mxu0 %v1890
      %4178 = vmatprep.subr.mxu0 %v1895
      %4179 = vmatpush1.msra.mxu0 %v1894
      %4180 = vmatprep.subr.mxu0 %v1899
      %4181 = vmatpush1.msra.mxu0 %v1898
      %4182 = vmatprep.subr.mxu0 %v1903
      %4183 = vmatpush1.msra.mxu0 %v1902
      %4184 = vmatprep.subr.mxu0 %v1907
      %4185 = vmatpush1.msra.mxu0 %v1906
      %4186 = vmatprep.subr.mxu0 %v1911
      %4187 = vmatpush1.msra.mxu0 %v1910
      %4188 = vmatprep.subr.mxu0 %v1915
      %4189 = vmatpush1.msra.mxu0 %v1914
      %4190 = vmatprep.subr.mxu0 %v1919
      %4191 = vmatpush1.msra.mxu0 %v1918
      %4192 = vmatprep.subr.mxu0 %v1923
      %4193 = vmatpush1.msra.mxu0 %v1922
      %4194 = vmatprep.subr.mxu0 %v1927
      %4195 = vmatpush1.msra.mxu0 %v1926
      %4196 = vmatprep.subr.mxu0 %v1931
      %4197 = vmatpush1.msra.mxu0 %v1930
      %4198 = vmatprep.subr.mxu0 %v1935
      %4199 = vmatpush1.msra.mxu0 %v1934
      %4200 = vmatprep.subr.mxu0 %v1939
      %4201 = vmatpush1.msra.mxu0 %v1938
      %4202 = vmatprep.subr.mxu0 %v1943
      %4203 = vmatpush1.msra.mxu0 %v1942
      %4204 = vmatprep.subr.mxu0 %v1947
      %4205 = vmatpush1.msra.mxu0 %v1946
      %4206 = vmatprep.subr.mxu0 %v1951
      %4207 = vmatpush1.msra.mxu0 %v1950
      %4208 = vmatprep.subr.mxu0 %v1955
      %4209 = vmatpush1.msra.mxu0 %v1954
      %4210 = vmatprep.subr.mxu0 %v1959
      %4211 = vmatpush1.msra.mxu0 %v1958
      %4212 = vmatprep.subr.mxu0 %v1963
      %4213 = vmatpush1.msra.mxu0 %v1962
      %4214 = vmatprep.subr.mxu0 %v1967
      %4215 = vmatpush1.msra.mxu0 %v1966
      %4216 = vmatprep.subr.mxu0 %v1971
      %4217 = vmatpush1.msra.mxu0 %v1970
      %4218 = vmatprep.subr.mxu0 %v1975
      %4219 = vmatpush1.msra.mxu0 %v1974
      %4220 = vmatprep.subr.mxu0 %v1979
      %4221 = vmatpush1.msra.mxu0 %v1978
      %4222 = vmatprep.subr.mxu0 %v1983
      %4223 = vmatpush1.msra.mxu0 %v1982
      %4224 = vmatprep.mubr.f32.mxu0 %v3997
      %4225 = vmatmul.mubr.f32.gmra.mrb[0].mxu0 %v3996
      %v4226 = vpop.f32.mrb[0].mxu0
      %v4227 = vadd.f32 %v4114, %v4226
      %v4228 = vpop.f32.mrb[0].mxu0
      %v4229 = vadd.f32 %v4116, %v4228
      %4230 = vmatprep.mubr.f32.mxu0 %v4001
      %4231 = vmatmul.mubr.f32.gmra.mrb[0].mxu0 %v4000
      %v4232 = vpop.f32.mrb[0].mxu0
      %v4233 = vadd.f32 %v4120, %v4232
      %v4234 = vpop.f32.mrb[0].mxu0
      %v4235 = vadd.f32 %v4122, %v4234
      %4236 = vmatprep.mubr.f32.mxu0 %v4005
      %4237 = vmatmul.mubr.f32.gmra.mrb[0].mxu0 %v4004
      %v4238 = vpop.f32.mrb[0].mxu0
      %v4239 = vadd.f32 %v4126, %v4238
      %v4240 = vpop.f32.mrb[0].mxu0
      %v4241 = vadd.f32 %v4128, %v4240
      %4242 = vmatprep.mubr.f32.mxu0 %v4009
      %4243 = vmatmul.mubr.f32.gmra.mrb[0].mxu0 %v4008
      %v4244 = vpop.f32.mrb[0].mxu0
      %v4245 = vadd.f32 %v4132, %v4244
      %v4246 = vpop.f32.mrb[0].mxu0
      %v4247 = vadd.f32 %v4134, %v4246
      %4248 = vmatprep.mubr.f32.mxu0 %v4013
      %4249 = vmatmul.mubr.f32.gmra.mrb[0].mxu0 %v4012
      %v4250 = vpop.f32.mrb[0].mxu0
      %v4251 = vadd.f32 %v4138, %v4250
      %v4252 = vpop.f32.mrb[0].mxu0
      %v4253 = vadd.f32 %v4140, %v4252
      %4254 = vmatprep.mubr.f32.mxu0 %v4017
      %4255 = vmatmul.mubr.f32.gmra.mrb[0].mxu0 %v4016
      %v4256 = vpop.f32.mrb[0].mxu0
      %v4257 = vadd.f32 %v4144, %v4256
      %v4258 = vpop.f32.mrb[0].mxu0
      %v4259 = vadd.f32 %v4146, %v4258
      %4260 = vmatprep.mubr.f32.mxu0 %v4021
      %4261 = vmatmul.mubr.f32.gmra.mrb[0].mxu0 %v4020
      %v4262 = vpop.f32.mrb[0].mxu0
      %v4263 = vadd.f32 %v4150, %v4262
      %v4264 = vpop.f32.mrb[0].mxu0
      %v4265 = vadd.f32 %v4152, %v4264
      %4266 = vmatprep.mubr.f32.mxu0 %v4025
      %4267 = vmatmul.mubr.f32.gmra.mrb[0].mxu0 %v4024
      %v4268 = vpop.f32.mrb[0].mxu0
      %v4269 = vadd.f32 %v4156, %v4268
      %v4270 = vpop.f32.mrb[0].mxu0
      %v4271 = vadd.f32 %v4158, %v4270
      %4272 = vdwg.mxu0
      %4273 = vmatprep.subr.mxu0 %v1733
      %4274 = vmatpush1.msra.mxu0 %v1732
      %4275 = vmatprep.subr.mxu0 %v1737
      %4276 = vmatpush1.msra.mxu0 %v1736
      %4277 = vmatprep.subr.mxu0 %v1741
      %4278 = vmatpush1.msra.mxu0 %v1740
      %4279 = vmatprep.subr.mxu0 %v1745
      %4280 = vmatpush1.msra.mxu0 %v1744
      %4281 = vmatprep.subr.mxu0 %v1749
      %4282 = vmatpush1.msra.mxu0 %v1748
      %4283 = vmatprep.subr.mxu0 %v1753
      %4284 = vmatpush1.msra.mxu0 %v1752
      %4285 = vmatprep.subr.mxu0 %v1757
      %4286 = vmatpush1.msra.mxu0 %v1756
      %4287 = vmatprep.subr.mxu0 %v1761
      %4288 = vmatpush1.msra.mxu0 %v1760
      %4289 = vmatprep.subr.mxu0 %v1765
      %4290 = vmatpush1.msra.mxu0 %v1764
      %4291 = vmatprep.subr.mxu0 %v1769
      %4292 = vmatpush1.msra.mxu0 %v1768
      %4293 = vmatprep.subr.mxu0 %v1773
      %4294 = vmatpush1.msra.mxu0 %v1772
      %4295 = vmatprep.subr.mxu0 %v1777
      %4296 = vmatpush1.msra.mxu0 %v1776
      %4297 = vmatprep.subr.mxu0 %v1781
      %4298 = vmatpush1.msra.mxu0 %v1780
      %4299 = vmatprep.subr.mxu0 %v1785
      %4300 = vmatpush1.msra.mxu0 %v1784
      %4301 = vmatprep.subr.mxu0 %v1789
      %4302 = vmatpush1.msra.mxu0 %v1788
      %4303 = vmatprep.subr.mxu0 %v1793
      %4304 = vmatpush1.msra.mxu0 %v1792
      %4305 = vmatprep.subr.mxu0 %v1797
      %4306 = vmatpush1.msra.mxu0 %v1796
      %4307 = vmatprep.subr.mxu0 %v1801
      %4308 = vmatpush1.msra.mxu0 %v1800
      %4309 = vmatprep.subr.mxu0 %v1805
      %4310 = vmatpush1.msra.mxu0 %v1804
      %4311 = vmatprep.subr.mxu0 %v1809
      %4312 = vmatpush1.msra.mxu0 %v1808
      %4313 = vmatprep.subr.mxu0 %v1813
      %4314 = vmatpush1.msra.mxu0 %v1812
      %4315 = vmatprep.subr.mxu0 %v1817
      %4316 = vmatpush1.msra.mxu0 %v1816
      %4317 = vmatprep.subr.mxu0 %v1821
      %4318 = vmatpush1.msra.mxu0 %v1820
      %4319 = vmatprep.subr.mxu0 %v1825
      %4320 = vmatpush1.msra.mxu0 %v1824
      %4321 = vmatprep.subr.mxu0 %v1829
      %4322 = vmatpush1.msra.mxu0 %v1828
      %4323 = vmatprep.subr.mxu0 %v1833
      %4324 = vmatpush1.msra.mxu0 %v1832
      %4325 = vmatprep.subr.mxu0 %v1837
      %4326 = vmatpush1.msra.mxu0 %v1836
      %4327 = vmatprep.subr.mxu0 %v1841
      %4328 = vmatpush1.msra.mxu0 %v1840
      %4329 = vmatprep.subr.mxu0 %v1845
      %4330 = vmatpush1.msra.mxu0 %v1844
      %4331 = vmatprep.subr.mxu0 %v1849
      %4332 = vmatpush1.msra.mxu0 %v1848
      %4333 = vmatprep.subr.mxu0 %v1853
      %4334 = vmatpush1.msra.mxu0 %v1852
      %4335 = vmatprep.subr.mxu0 %v1857
      %4336 = vmatpush1.msra.mxu0 %v1856
      %4337 = vmatprep.mubr.f32.mxu0 %v3995
      %4338 = vmatmul.mubr.f32.gmra.mrb[0].mxu0 %v3994
      %v4339 = vpop.f32.mrb[0].mxu0
      %v4340 = vadd.f32 %v4038, %v4339
      %v4341 = vpop.f32.mrb[0].mxu0
      %v4342 = vadd.f32 %v4042, %v4341
      %4343 = vmatprep.mubr.f32.mxu0 %v3999
      %4344 = vmatmul.mubr.f32.gmra.mrb[0].mxu0 %v3998
      %v4345 = vpop.f32.mrb[0].mxu0
      %v4346 = vadd.f32 %v4038, %v4345
      %v4347 = vpop.f32.mrb[0].mxu0
      %v4348 = vadd.f32 %v4042, %v4347
      %4349 = vmatprep.mubr.f32.mxu0 %v4003
      %4350 = vmatmul.mubr.f32.gmra.mrb[0].mxu0 %v4002
      %v4351 = vpop.f32.mrb[0].mxu0
      %v4352 = vadd.f32 %v4038, %v4351
      %v4353 = vpop.f32.mrb[0].mxu0
      %v4354 = vadd.f32 %v4042, %v4353
      %4355 = vmatprep.mubr.f32.mxu0 %v4007
      %4356 = vmatmul.mubr.f32.gmra.mrb[0].mxu0 %v4006
      %v4357 = vpop.f32.mrb[0].mxu0
      %v4358 = vadd.f32 %v4038, %v4357
      %v4359 = vpop.f32.mrb[0].mxu0
      %v4360 = vadd.f32 %v4042, %v4359
      %4361 = vmatprep.mubr.f32.mxu0 %v4011
      %4362 = vmatmul.mubr.f32.gmra.mrb[0].mxu0 %v4010
      %v4363 = vpop.f32.mrb[0].mxu0
      %v4364 = vadd.f32 %v4038, %v4363
      %v4365 = vpop.f32.mrb[0].mxu0
      %v4366 = vadd.f32 %v4042, %v4365
      %4367 = vmatprep.mubr.f32.mxu0 %v4015
      %4368 = vmatmul.mubr.f32.gmra.mrb[0].mxu0 %v4014
      %v4369 = vpop.f32.mrb[0].mxu0
      %v4370 = vadd.f32 %v4038, %v4369
      %v4371 = vpop.f32.mrb[0].mxu0
      %v4372 = vadd.f32 %v4042, %v4371
      %4373 = vmatprep.mubr.f32.mxu0 %v4019
      %4374 = vmatmul.mubr.f32.gmra.mrb[0].mxu0 %v4018
      %v4375 = vpop.f32.mrb[0].mxu0
      %v4376 = vadd.f32 %v4038, %v4375
      %v4377 = vpop.f32.mrb[0].mxu0
      %v4378 = vadd.f32 %v4042, %v4377
      %4379 = vmatprep.mubr.f32.mxu0 %v4023
      %4380 = vmatmul.mubr.f32.gmra.mrb[0].mxu0 %v4022
      %v4381 = vpop.f32.mrb[0].mxu0
      %v4382 = vadd.f32 %v4038, %v4381
      %v4383 = vpop.f32.mrb[0].mxu0
      %v4384 = vadd.f32 %v4042, %v4383
      %4385 = vdwg.mxu0
      %4386 = vmatprep.subr.mxu0 %v1861
      %4387 = vmatpush1.msra.mxu0 %v1860
      %4388 = vmatprep.subr.mxu0 %v1865
      %4389 = vmatpush1.msra.mxu0 %v1864
      %4390 = vmatprep.subr.mxu0 %v1869
      %4391 = vmatpush1.msra.mxu0 %v1868
      %4392 = vmatprep.subr.mxu0 %v1873
      %4393 = vmatpush1.msra.mxu0 %v1872
      %4394 = vmatprep.subr.mxu0 %v1877
      %4395 = vmatpush1.msra.mxu0 %v1876
      %4396 = vmatprep.subr.mxu0 %v1881
      %4397 = vmatpush1.msra.mxu0 %v1880
      %4398 = vmatprep.subr.mxu0 %v1885
      %4399 = vmatpush1.msra.mxu0 %v1884
      %4400 = vmatprep.subr.mxu0 %v1889
      %4401 = vmatpush1.msra.mxu0 %v1888
      %4402 = vmatprep.subr.mxu0 %v1893
      %4403 = vmatpush1.msra.mxu0 %v1892
      %4404 = vmatprep.subr.mxu0 %v1897
      %4405 = vmatpush1.msra.mxu0 %v1896
      %4406 = vmatprep.subr.mxu0 %v1901
      %4407 = vmatpush1.msra.mxu0 %v1900
      %4408 = vmatprep.subr.mxu0 %v1905
      %4409 = vmatpush1.msra.mxu0 %v1904
      %4410 = vmatprep.subr.mxu0 %v1909
      %4411 = vmatpush1.msra.mxu0 %v1908
      %4412 = vmatprep.subr.mxu0 %v1913
      %4413 = vmatpush1.msra.mxu0 %v1912
      %4414 = vmatprep.subr.mxu0 %v1917
      %4415 = vmatpush1.msra.mxu0 %v1916
      %4416 = vmatprep.subr.mxu0 %v1921
      %4417 = vmatpush1.msra.mxu0 %v1920
      %4418 = vmatprep.subr.mxu0 %v1925
      %4419 = vmatpush1.msra.mxu0 %v1924
      %4420 = vmatprep.subr.mxu0 %v1929
      %4421 = vmatpush1.msra.mxu0 %v1928
      %4422 = vmatprep.subr.mxu0 %v1933
      %4423 = vmatpush1.msra.mxu0 %v1932
      %4424 = vmatprep.subr.mxu0 %v1937
      %4425 = vmatpush1.msra.mxu0 %v1936
      %4426 = vmatprep.subr.mxu0 %v1941
      %4427 = vmatpush1.msra.mxu0 %v1940
      %4428 = vmatprep.subr.mxu0 %v1945
      %4429 = vmatpush1.msra.mxu0 %v1944
      %4430 = vmatprep.subr.mxu0 %v1949
      %4431 = vmatpush1.msra.mxu0 %v1948
      %4432 = vmatprep.subr.mxu0 %v1953
      %4433 = vmatpush1.msra.mxu0 %v1952
      %4434 = vmatprep.subr.mxu0 %v1957
      %4435 = vmatpush1.msra.mxu0 %v1956
      %4436 = vmatprep.subr.mxu0 %v1961
      %4437 = vmatpush1.msra.mxu0 %v1960
      %4438 = vmatprep.subr.mxu0 %v1965
      %4439 = vmatpush1.msra.mxu0 %v1964
      %4440 = vmatprep.subr.mxu0 %v1969
      %4441 = vmatpush1.msra.mxu0 %v1968
      %4442 = vmatprep.subr.mxu0 %v1973
      %4443 = vmatpush1.msra.mxu0 %v1972
      %4444 = vmatprep.subr.mxu0 %v1977
      %4445 = vmatpush1.msra.mxu0 %v1976
      %4446 = vmatprep.subr.mxu0 %v1981
      %4447 = vmatpush1.msra.mxu0 %v1980
      %4448 = vmatprep.subr.mxu0 %v1985
      %4449 = vmatpush1.msra.mxu0 %v1984
      %4450 = vmatprep.mubr.f32.mxu0 %v3997
      %4451 = vmatmul.mubr.f32.gmra.mrb[0].mxu0 %v3996
      %v4452 = vpop.f32.mrb[0].mxu0
      %v4453 = vadd.f32 %v4340, %v4452
      %v4454 = vpop.f32.mrb[0].mxu0
      %v4455 = vadd.f32 %v4342, %v4454
      %4456 = vmatprep.mubr.f32.mxu0 %v4001
      %4457 = vmatmul.mubr.f32.gmra.mrb[0].mxu0 %v4000
      %v4458 = vpop.f32.mrb[0].mxu0
      %v4459 = vadd.f32 %v4346, %v4458
      %v4460 = vpop.f32.mrb[0].mxu0
      %v4461 = vadd.f32 %v4348, %v4460
      %4462 = vmatprep.mubr.f32.mxu0 %v4005
      %4463 = vmatmul.mubr.f32.gmra.mrb[0].mxu0 %v4004
      %v4464 = vpop.f32.mrb[0].mxu0
      %v4465 = vadd.f32 %v4352, %v4464
      %v4466 = vpop.f32.mrb[0].mxu0
      %v4467 = vadd.f32 %v4354, %v4466
      %4468 = vmatprep.mubr.f32.mxu0 %v4009
      %4469 = vmatmul.mubr.f32.gmra.mrb[0].mxu0 %v4008
      %v4470 = vpop.f32.mrb[0].mxu0
      %v4471 = vadd.f32 %v4358, %v4470
      %v4472 = vpop.f32.mrb[0].mxu0
      %v4473 = vadd.f32 %v4360, %v4472
      %4474 = vmatprep.mubr.f32.mxu0 %v4013
      %4475 = vmatmul.mubr.f32.gmra.mrb[0].mxu0 %v4012
      %v4476 = vpop.f32.mrb[0].mxu0
      %v4477 = vadd.f32 %v4364, %v4476
      %v4478 = vpop.f32.mrb[0].mxu0
      %v4479 = vadd.f32 %v4366, %v4478
      %4480 = vmatprep.mubr.f32.mxu0 %v4017
      %4481 = vmatmul.mubr.f32.gmra.mrb[0].mxu0 %v4016
      %v4482 = vpop.f32.mrb[0].mxu0
      %v4483 = vadd.f32 %v4370, %v4482
      %v4484 = vpop.f32.mrb[0].mxu0
      %v4485 = vadd.f32 %v4372, %v4484
      %4486 = vmatprep.mubr.f32.mxu0 %v4021
      %4487 = vmatmul.mubr.f32.gmra.mrb[0].mxu0 %v4020
      %v4488 = vpop.f32.mrb[0].mxu0
      %v4489 = vadd.f32 %v4376, %v4488
      %v4490 = vpop.f32.mrb[0].mxu0
      %v4491 = vadd.f32 %v4378, %v4490
      %4492 = vmatprep.mubr.f32.mxu0 %v4025
      %4493 = vmatmul.mubr.f32.gmra.mrb[0].mxu0 %v4024
      %v4494 = vpop.f32.mrb[0].mxu0
      %v4495 = vadd.f32 %v4382, %v4494
      %v4496 = vpop.f32.mrb[0].mxu0
      %v4497 = vadd.f32 %v4384, %v4496
      %4498 = vdwg.mxu0
      %v4499 = vadd.f32 %v2962, %v4227
      %v4500 = vadd.f32 %v2964, %v4229
      %v4501 = vadd.f32 %v3075, %v4453
      %v4502 = vadd.f32 %v3077, %v4455
      %v4503 = vadd.f32 %v2968, %v4233
      %v4504 = vadd.f32 %v2970, %v4235
      %v4505 = vadd.f32 %v3081, %v4459
      %v4506 = vadd.f32 %v3083, %v4461
      %v4507 = vadd.f32 %v2974, %v4239
      %v4508 = vadd.f32 %v2976, %v4241
      %v4509 = vadd.f32 %v3087, %v4465
      %v4510 = vadd.f32 %v3089, %v4467
      %v4511 = vadd.f32 %v2980, %v4245
      %v4512 = vadd.f32 %v2982, %v4247
      %v4513 = vadd.f32 %v3093, %v4471
      %v4514 = vadd.f32 %v3095, %v4473
      %v4515 = vadd.f32 %v2986, %v4251
      %v4516 = vadd.f32 %v2988, %v4253
      %v4517 = vadd.f32 %v3099, %v4477
      %v4518 = vadd.f32 %v3101, %v4479
      %v4519 = vadd.f32 %v2992, %v4257
      %v4520 = vadd.f32 %v2994, %v4259
      %v4521 = vadd.f32 %v3105, %v4483
      %v4522 = vadd.f32 %v3107, %v4485
      %v4523 = vadd.f32 %v2998, %v4263
      %v4524 = vadd.f32 %v3000, %v4265
      %v4525 = vadd.f32 %v3111, %v4489
      %v4526 = vadd.f32 %v3113, %v4491
      %v4527 = vadd.f32 %v3004, %v4269
      %v4528 = vadd.f32 %v3006, %v4271
      %v4529 = vadd.f32 %v3117, %v4495
      %v4530 = vadd.f32 %v3119, %v4497
      %4531 = vst [vmem:[%s400] sm:$0xff] %v4499
      %4532 = vst [vmem:[%s400 + $0x8] sm:$0xff] %v4500
      %4533 = vst [vmem:[%s400 + $0x10] sm:$0xff] %v4501
      %4534 = vst.msk [vmem:[%s400 + $0x18] sm:$0xff] %vm438, %v4502
      %4535 = vst [vmem:[%s400 + $0x20] sm:$0xff] %v4503
      %4536 = vst [vmem:[%s400 + $0x28] sm:$0xff] %v4504
      %4537 = vst [vmem:[%s400 + $0x30] sm:$0xff] %v4505
      %4538 = vst.msk [vmem:[%s400 + $0x38] sm:$0xff] %vm438, %v4506
      %4539 = vst [vmem:[%s400 + $0x40] sm:$0xff] %v4507
      %4540 = vst [vmem:[%s400 + $0x48] sm:$0xff] %v4508
      %4541 = vst [vmem:[%s400 + $0x50] sm:$0xff] %v4509
      %4542 = vst.msk [vmem:[%s400 + $0x58] sm:$0xff] %vm438, %v4510
      %4543 = vst [vmem:[%s400 + $0x60] sm:$0xff] %v4511
      %4544 = vst [vmem:[%s400 + $0x68] sm:$0xff] %v4512
      %4545 = vst [vmem:[%s400 + $0x70] sm:$0xff] %v4513
      %4546 = vst.msk [vmem:[%s400 + $0x78] sm:$0xff] %vm438, %v4514
      %4547 = vst [vmem:[%s400 + $0x80] sm:$0xff] %v4515
      %4548 = vst [vmem:[%s400 + $0x88] sm:$0xff] %v4516
      %4549 = vst [vmem:[%s400 + $0x90] sm:$0xff] %v4517
      %4550 = vst.msk [vmem:[%s400 + $0x98] sm:$0xff] %vm438, %v4518
      %4551 = vst [vmem:[%s400 + $0xa0] sm:$0xff] %v4519
      %4552 = vst [vmem:[%s400 + $0xa8] sm:$0xff] %v4520
      %4553 = vst [vmem:[%s400 + $0xb0] sm:$0xff] %v4521
      %4554 = vst.msk [vmem:[%s400 + $0xb8] sm:$0xff] %vm438, %v4522
      %4555 = vst [vmem:[%s400 + $0xc0] sm:$0xff] %v4523
      %4556 = vst [vmem:[%s400 + $0xc8] sm:$0xff] %v4524
      %4557 = vst [vmem:[%s400 + $0xd0] sm:$0xff] %v4525
      %4558 = vst.msk [vmem:[%s400 + $0xd8] sm:$0xff] %vm438, %v4526
      %4559 = vst [vmem:[%s400 + $0xe0] sm:$0xff] %v4527
      %4560 = vst [vmem:[%s400 + $0xe8] sm:$0xff] %v4528
      %4561 = vst [vmem:[%s400 + $0xf0] sm:$0xff] %v4529
      %4562 = vst.msk [vmem:[%s400 + $0xf8] sm:$0xff] %vm438, %v4530
      %s4563 = smul.u32 8, %s29
      %p4564 = scmp.lt.s32.totalorder %s4563, 15
      %s4565 = scalar_select %p4564, %s4563, 15
      %s4566 = smul.addr %s4565, 4
      %s4567 = smul.addr %s4566, 8
      %s4568 = scalar_lea.vmem %s12, %s4567
      // Predicated region
      $region65: #{forward.2} parent=63 // pred_check
        %p4569 = pneg %p283
      $region66: #{forward.2} parent=63 // pred_check_branch
        %4571 = sbr.rel (%p4569) target = $region68
      $region67: #{forward.2} parent=63 // pred_region
        %s4572 = smul.u32 8, %s29
      $region68: #{forward.2} parent=63 // pred_fallthru
        _
    $region64: #{forward.2} parent=5 // pred_fallthru
      _
    %p4573 = scmp.le.s32.totalorder 2, %s24
    // Predicated region
    $region69: #{forward.2} parent=5 // pred_check
      %p4574 = pneg %p4573
    $region70: #{forward.2} parent=5 // pred_check_branch
      %4576 = sbr.rel (%p4574) target = $region72
    $region71: #{forward.2} parent=5 // pred_region
      %s4577 = ssub.s32 %s24, 2
      // Predicated region
      $region73: #{forward.2} parent=71 // pred_check
        %p4578 = pneg %p289
      $region74: #{forward.2} parent=71 // pred_check_branch
        %4580 = sbr.rel (%p4578) target = $region76
      $region75: #{forward.2} parent=71 // pred_region
        %s4581 = smul.u32 8, %s30
        %p4582 = scmp.lt.s32.totalorder %s4581, 15
        %s4583 = scalar_select %p4582, %s4581, 15
        %s4584 = smul.addr %s4583, 4
        %s4585 = smul.addr %s4584, 8
        %s4586 = scalar_lea.vmem %s12, %s4585
      $region76: #{forward.2} parent=71 // pred_fallthru
        _
    $region72: #{forward.2} parent=5 // pred_fallthru
      _
  $region6: #{forward.2} parent=0 // loop_footer
    %s28 = sadd.s32 1, %s24
  $region7: #{forward.2} parent=0 // loop_footer_branch
    %23 = sbr.rel target = $region3
  $region8: #{forward.2} parent=0 // loop_exit
    _

</llo_original>
